<compile_context>
chip_gen: v7x
topology: tpu7x:2x2x1
jax: 0.10.0
libtpu: 0.0.40
codegen_flags: <defaults>
</compile_context>

<pallas_src>
import functools
import math

import jax
import jax.numpy as jnp
from jax.experimental import pallas as pl
from jax.experimental.pallas import tpu as pltpu


# ----------------------------- Pallas kernel ---------------------------------------

def decoder_layer_kernel(
    tgt_ref, mem_ref,
    sa_qkv_w_ref, sa_qkv_b_ref, sa_out_w_ref, sa_out_b_ref,
    ca_q_w_ref, ca_q_b_ref, ca_kv_w_ref, ca_kv_b_ref, ca_out_w_ref, ca_out_b_ref,
    lin1_w_ref, lin1_b_ref, lin2_w_ref, lin2_b_ref,
    n1_w_ref, n1_b_ref, n2_w_ref, n2_b_ref, n3_w_ref, n3_b_ref,
    out_ref,
    *, nhead, eps,
):
    BB, T, D = tgt_ref.shape
    S = mem_ref.shape[1]
    H = nhead
    Dh = D // H
    bf16 = jnp.bfloat16

    x = tgt_ref[...].reshape(BB * T, D)        # f32 (BB*T, D)
    mem = mem_ref[...].reshape(BB * S, D)      # f32 (BB*S, D)

    def layernorm(y, w_ref, b_ref):
        # f32 elementwise math (VPU); cheap rsqrt.
        mu = jnp.mean(y, axis=-1, keepdims=True)
        var = jnp.mean((y - mu) ** 2, axis=-1, keepdims=True)
        return (y - mu) * jax.lax.rsqrt(var + eps) * w_ref[...] + b_ref[...]

    def attend(q3, k3, v3, out_w_ref, out_b_ref):
        # q3/k3/v3: (BB, seq, D) bf16; 1/sqrt(Dh) already folded into the Q projection.
        # Heads run as a short unrolled Python loop (single batch-dim einsum per head;
        # a 2-batch-dim 'bqhd,bkhd->bhqk' contraction is not safe on Mosaic).
        # TODO(synk): for H >~ 8 switch to lax.fori_loop(..., unroll=True) to bound
        #             vreg live ranges.
        Tq = q3.shape[1]
        ctxs = []
        for h in range(H):
            lo, hi = h * Dh, (h + 1) * Dh
            s = jnp.einsum("bqd,bkd->bqk", q3[:, :, lo:hi], k3[:, :, lo:hi],
                           preferred_element_type=jnp.float32)        # f32 (BB,Tq,Tk)
            s = s - jnp.max(s, axis=-1, keepdims=True)
            p = jnp.exp(s)
            p = p * pl.reciprocal(jnp.sum(p, axis=-1, keepdims=True), approx=True)
            ctxs.append(jnp.einsum("bqk,bkd->bqd", p.astype(bf16), v3[:, :, lo:hi],
                                   preferred_element_type=jnp.float32))  # (BB,Tq,Dh)
        # Single K=D output-projection matmul (no per-head K=Dh dots / slab adds).
        ctx = jnp.concatenate(ctxs, axis=-1).reshape(BB * Tq, D)
        return (jnp.dot(ctx.astype(bf16), out_w_ref[...],
                        preferred_element_type=jnp.float32) + out_b_ref[...])

    # ---- self-attention + add & norm1 (norm_first=False) ----
    qkv = (jnp.dot(x.astype(bf16), sa_qkv_w_ref[...],
                   preferred_element_type=jnp.float32) + sa_qkv_b_ref[...])  # (BB*T,3D)
    qkv16 = qkv.astype(bf16)
    q3 = qkv16[:, :D].reshape(BB, T, D)
    k3 = qkv16[:, D:2 * D].reshape(BB, T, D)
    v3 = qkv16[:, 2 * D:].reshape(BB, T, D)
    sa = attend(q3, k3, v3, sa_out_w_ref, sa_out_b_ref)
    x = layernorm(x + sa, n1_w_ref, n1_b_ref)

    # ---- cross-attention + add & norm2 ----
    q = (jnp.dot(x.astype(bf16), ca_q_w_ref[...],
                 preferred_element_type=jnp.float32) + ca_q_b_ref[...])      # (BB*T, D)
    kv = (jnp.dot(mem.astype(bf16), ca_kv_w_ref[...],
                  preferred_element_type=jnp.float32) + ca_kv_b_ref[...])    # (BB*S,2D)
    kv16 = kv.astype(bf16)
    q3 = q.astype(bf16).reshape(BB, T, D)
    k3 = kv16[:, :D].reshape(BB, S, D)
    v3 = kv16[:, D:].reshape(BB, S, D)
    ca = attend(q3, k3, v3, ca_out_w_ref, ca_out_b_ref)
    x = layernorm(x + ca, n2_w_ref, n2_b_ref)

    # ---- feed-forward + add & norm3 ----
    h_act = jnp.maximum(
        jnp.dot(x.astype(bf16), lin1_w_ref[...],
                preferred_element_type=jnp.float32) + lin1_b_ref[...], 0.0)
    ff = (jnp.dot(h_act.astype(bf16), lin2_w_ref[...],
                  preferred_element_type=jnp.float32) + lin2_b_ref[...])
    x = layernorm(x + ff, n3_w_ref, n3_b_ref)

    out_ref[...] = x.reshape(BB, T, D)


# ----------------------------- one-time weight plumbing ------------------------------

def prepare_decoder_params(params, *, nhead):
    """Transpose / split / fold softmax scale / cast matmul weights to bf16.

    Run ONCE and cache the result across forward calls (hoisted out of the forward
    path per perf review). Biases and LayerNorm params stay f32 (added to f32 accums).
    """
    f32, bf16 = jnp.float32, jnp.bfloat16
    D = params["sa_out_w"].shape[0]
    Dh = D // nhead
    scale = 1.0 / math.sqrt(Dh)

    sa_in_w = params["sa_in_w"].astype(f32)          # (3D, D) PyTorch in_proj layout
    sa_in_b = params["sa_in_b"].astype(f32)          # (1, 3D)
    q_scale = jnp.concatenate(
        [jnp.full((D,), scale, f32), jnp.ones((2 * D,), f32)])
    sa_qkv_w = (sa_in_w * q_scale[:, None]).T.astype(bf16)   # (D, 3D), Q rows pre-scaled
    sa_qkv_b = sa_in_b * q_scale[None, :]                    # (1, 3D) f32

    ca_in_w = params["ca_in_w"].astype(f32)
    ca_in_b = params["ca_in_b"].astype(f32)
    ca_q_w = (ca_in_w[:D] * scale).T.astype(bf16)            # (D, D), pre-scaled
    ca_q_b = ca_in_b[:, :D] * scale                          # (1, D)
    ca_kv_w = ca_in_w[D:].T.astype(bf16)                     # (D, 2D)
    ca_kv_b = ca_in_b[:, D:]                                 # (1, 2D)

    return (
        sa_qkv_w, sa_qkv_b,
        params["sa_out_w"].astype(f32).T.astype(bf16), params["sa_out_b"].astype(f32),
        ca_q_w, ca_q_b, ca_kv_w, ca_kv_b,
        params["ca_out_w"].astype(f32).T.astype(bf16), params["ca_out_b"].astype(f32),
        params["lin1_w"].astype(f32).T.astype(bf16), params["lin1_b"].astype(f32),
        params["lin2_w"].astype(f32).T.astype(bf16), params["lin2_b"].astype(f32),
        params["n1_w"].astype(f32), params["n1_b"].astype(f32),
        params["n2_w"].astype(f32), params["n2_b"].astype(f32),
        params["n3_w"].astype(f32), params["n3_b"].astype(f32),
    )


# ----------------------------- wrapper ----------------------------------------------

def transformer_decoder_layer(tgt_tbd, mem_sbd, prepared_weights, *, nhead, eps=1e-5,
                              block_b=None, vmem_limit_bytes=48 * 1024 * 1024):
    """tgt_tbd: (T, B, D), mem_sbd: (S, B, D)  (PyTorch seq-first layout, f32)."""
    T, B, D = tgt_tbd.shape
    S = mem_sbd.shape[0]
    if block_b is None:
        # >= 2 grid points so the "parallel" batch axis can actually use both v7x
        # TensorCores; harmless 2-step sequential grid on single-TC v5e/v6e.
        block_b = max(1, B // 2)

    # TODO(synk): fold these layout transposes into the BlockSpec index_map (or take
    #             batch-first inputs) to drop two full-activation HBM passes.
    tgt = jnp.transpose(tgt_tbd, (1, 0, 2))   # (B, T, D)
    mem = jnp.transpose(mem_sbd, (1, 0, 2))   # (B, S, D)

    def full_spec(w):
        n = w.ndim
        # Constant index_map: the whole weight is resident for every grid step.
        # At production sizes these could be single-buffered (pl.Buffered(1)).
        return pl.BlockSpec(w.shape, lambda b: (0,) * n)

    in_specs = [
        pl.BlockSpec((block_b, T, D), lambda b: (b, 0, 0)),   # tgt tile
        pl.BlockSpec((block_b, S, D), lambda b: (b, 0, 0)),   # memory tile
    ] + [full_spec(w) for w in prepared_weights]

    out_spec = pl.BlockSpec((block_b, T, D), lambda b: (b, 0, 0))

    kernel = functools.partial(decoder_layer_kernel, nhead=nhead, eps=eps)

    out = pl.pallas_call(
        kernel,
        out_shape=jax.ShapeDtypeStruct((B, T, D), jnp.float32),
        grid_spec=pltpu.PrefetchScalarGridSpec(
            num_scalar_prefetch=0,
            grid=(pl.cdiv(B, block_b),),
            in_specs=in_specs,
            out_specs=out_spec,
        ),
        compiler_params=pltpu.CompilerParams(
            dimension_semantics=("parallel",),        # batch tiles are independent
            vmem_limit_bytes=vmem_limit_bytes,        # <= ~48 MiB fits v7x's 64 MiB/TC
        ),
    )(tgt, mem, *prepared_weights)

    return jnp.transpose(out, (1, 0, 2))   # back to (T, B, D)


# ----------------------------- pure-JAX reference (for verification) ---------------

def _ref_layernorm(x, w, b, eps):
    mu = jnp.mean(x, axis=-1, keepdims=True)
    var = jnp.mean((x - mu) ** 2, axis=-1, keepdims=True)
    return (x - mu) / jnp.sqrt(var + eps) * w + b


def _ref_mha(q_in, kv_in, in_w, in_b, out_w, out_b, nhead):
    D = q_in.shape[-1]
    Dh = D // nhead
    q = q_in @ in_w[:D].T + in_b[0, :D]
    k = kv_in @ in_w[D:2 * D].T + in_b[0, D:2 * D]
    v = kv_in @ in_w[2 * D:].T + in_b[0, 2 * D:]
    Tq, Tk = q.shape[0], k.shape[0]
    q = q.reshape(Tq, nhead, Dh).transpose(1, 0, 2) / math.sqrt(Dh)
    k = k.reshape(Tk, nhead, Dh).transpose(1, 0, 2)
    v = v.reshape(Tk, nhead, Dh).transpose(1, 0, 2)
    s = jnp.einsum("hqd,hkd->hqk", q, k)
    p = jax.nn.softmax(s, axis=-1)
    o = jnp.einsum("hqk,hkd->hqd", p, v).transpose(1, 0, 2).reshape(Tq, D)
    return o @ out_w.T + out_b[0]


def reference_decoder_layer(tgt_tbd, mem_sbd, p, *, nhead, eps=1e-5):
    T, B, D = tgt_tbd.shape
    outs = []
    for b in range(B):
        x = tgt_tbd[:, b, :]
        mem = mem_sbd[:, b, :]
        sa = _ref_mha(x, x, p["sa_in_w"], p["sa_in_b"], p["sa_out_w"], p["sa_out_b"], nhead)
        x = _ref_layernorm(x + sa, p["n1_w"][0], p["n1_b"][0], eps)
        ca = _ref_mha(x, mem, p["ca_in_w"], p["ca_in_b"], p["ca_out_w"], p["ca_out_b"], nhead)
        x = _ref_layernorm(x + ca, p["n2_w"][0], p["n2_b"][0], eps)
        h = jnp.maximum(x @ p["lin1_w"].T + p["lin1_b"][0], 0.0)
        ff = h @ p["lin2_w"].T + p["lin2_b"][0]
        x = _ref_layernorm(x + ff, p["n3_w"][0], p["n3_b"][0], eps)
        outs.append(x)
    return jnp.stack(outs, axis=1)


# ----------------------------- main -------------------------------------------------

if __name__ == "__main__":
    d_model = 32
    nhead = 4
    dim_feedforward = 64
    T = 8       # tgt seq len
    S = 8       # memory seq len
    B = 2       # batch

    key = jax.random.PRNGKey(0)
    keys = jax.random.split(key, 16)

    def xavier(k, shape):
        fan_in, fan_out = shape[-1], shape[-2]
        lim = math.sqrt(6.0 / (fan_in + fan_out))
        return jax.random.uniform(k, shape, jnp.float32, -lim, lim)

    params = {
        # self-attention (MultiheadAttention in_proj / out_proj, PyTorch layout)
        "sa_in_w": xavier(keys[0], (3 * d_model, d_model)),
        "sa_in_b": jnp.zeros((1, 3 * d_model), jnp.float32),
        "sa_out_w": xavier(keys[1], (d_model, d_model)),
        "sa_out_b": jnp.zeros((1, d_model), jnp.float32),
        # cross-attention
        "ca_in_w": xavier(keys[2], (3 * d_model, d_model)),
        "ca_in_b": jnp.zeros((1, 3 * d_model), jnp.float32),
        "ca_out_w": xavier(keys[3], (d_model, d_model)),
        "ca_out_b": jnp.zeros((1, d_model), jnp.float32),
        # feed-forward
        "lin1_w": xavier(keys[4], (dim_feedforward, d_model)),
        "lin1_b": 0.01 * jax.random.normal(keys[5], (1, dim_feedforward), jnp.float32),
        "lin2_w": xavier(keys[6], (d_model, dim_feedforward)),
        "lin2_b": 0.01 * jax.random.normal(keys[7], (1, d_model), jnp.float32),
        # layer norms
        "n1_w": jnp.ones((1, d_model), jnp.float32),
        "n1_b": jnp.zeros((1, d_model), jnp.float32),
        "n2_w": jnp.ones((1, d_model), jnp.float32),
        "n2_b": jnp.zeros((1, d_model), jnp.float32),
        "n3_w": jnp.ones((1, d_model), jnp.float32),
        "n3_b": jnp.zeros((1, d_model), jnp.float32),
    }

    tgt = jax.random.normal(keys[8], (T, B, d_model), jnp.float32)   # (seq, batch, d_model)
    memory = jax.random.normal(keys[9], (S, B, d_model), jnp.float32)

    # One-time weight prep (cached by callers in real use); kernel-layout bf16 weights.
    prepared = prepare_decoder_params(params, nhead=nhead)
    prepared = jax.tree_util.tree_map(jax.block_until_ready, prepared)

    out = transformer_decoder_layer(tgt, memory, prepared, nhead=nhead)
    out = jax.block_until_ready(out)

    ref = reference_decoder_layer(tgt, memory, params, nhead=nhead)
    assert out.shape == (T, B, d_model)
    # bf16 MXU inputs (f32 accumulation) + approx EUP reciprocal in the softmax give
    # ~1e-2-level absolute error on the layernormed outputs vs. the exact f32 reference.
    assert jnp.max(jnp.abs(out - ref)) < 1e-1, "kernel mismatch vs reference"

    print("KERNEL_OK")
</pallas_src>

<mosaic_0001>
module attributes {stable_mosaic.version = 11 : i64} {
  func.func @decoder_layer_kernel(%arg0: i32, %arg1: memref<1x8x32xf32, #tpu.memory_space<vmem>>, %arg2: memref<1x8x32xf32, #tpu.memory_space<vmem>>, %arg3: memref<32x96xbf16, #tpu.memory_space<vmem>>, %arg4: memref<1x96xf32, #tpu.memory_space<vmem>>, %arg5: memref<32x32xbf16, #tpu.memory_space<vmem>>, %arg6: memref<1x32xf32, #tpu.memory_space<vmem>>, %arg7: memref<32x32xbf16, #tpu.memory_space<vmem>>, %arg8: memref<1x32xf32, #tpu.memory_space<vmem>>, %arg9: memref<32x64xbf16, #tpu.memory_space<vmem>>, %arg10: memref<1x64xf32, #tpu.memory_space<vmem>>, %arg11: memref<32x32xbf16, #tpu.memory_space<vmem>>, %arg12: memref<1x32xf32, #tpu.memory_space<vmem>>, %arg13: memref<32x64xbf16, #tpu.memory_space<vmem>>, %arg14: memref<1x64xf32, #tpu.memory_space<vmem>>, %arg15: memref<64x32xbf16, #tpu.memory_space<vmem>>, %arg16: memref<1x32xf32, #tpu.memory_space<vmem>>, %arg17: memref<1x32xf32, #tpu.memory_space<vmem>>, %arg18: memref<1x32xf32, #tpu.memory_space<vmem>>, %arg19: memref<1x32xf32, #tpu.memory_space<vmem>>, %arg20: memref<1x32xf32, #tpu.memory_space<vmem>>, %arg21: memref<1x32xf32, #tpu.memory_space<vmem>>, %arg22: memref<1x32xf32, #tpu.memory_space<vmem>>, %arg23: memref<1x8x32xf32, #tpu.memory_space<vmem>>) attributes {dimension_semantics = [#tpu.dimension_semantics<parallel>], iteration_bounds = array<i64: 2>, scalar_prefetch = 0 : i64, scratch_operands = 0 : i64, tpu.core_type = #tpu.core_type<tc>, window_params = [{transform_indices = @transform_0, window_bounds = array<i64: 1, 8, 32>}, {transform_indices = @transform_1, window_bounds = array<i64: 1, 8, 32>}, {pipeline_mode = #tpu.pipeline_mode<synchronous>, transform_indices = @transform_2, window_bounds = array<i64: 32, 96>}, {pipeline_mode = #tpu.pipeline_mode<synchronous>, transform_indices = @transform_3, window_bounds = array<i64: 1, 96>}, {pipeline_mode = #tpu.pipeline_mode<synchronous>, transform_indices = @transform_4, window_bounds = array<i64: 32, 32>}, {pipeline_mode = #tpu.pipeline_mode<synchronous>, transform_indices = @transform_5, window_bounds = array<i64: 1, 32>}, {pipeline_mode = #tpu.pipeline_mode<synchronous>, transform_indices = @transform_6, window_bounds = array<i64: 32, 32>}, {pipeline_mode = #tpu.pipeline_mode<synchronous>, transform_indices = @transform_7, window_bounds = array<i64: 1, 32>}, {pipeline_mode = #tpu.pipeline_mode<synchronous>, transform_indices = @transform_8, window_bounds = array<i64: 32, 64>}, {pipeline_mode = #tpu.pipeline_mode<synchronous>, transform_indices = @transform_9, window_bounds = array<i64: 1, 64>}, {pipeline_mode = #tpu.pipeline_mode<synchronous>, transform_indices = @transform_10, window_bounds = array<i64: 32, 32>}, {pipeline_mode = #tpu.pipeline_mode<synchronous>, transform_indices = @transform_11, window_bounds = array<i64: 1, 32>}, {pipeline_mode = #tpu.pipeline_mode<synchronous>, transform_indices = @transform_12, window_bounds = array<i64: 32, 64>}, {pipeline_mode = #tpu.pipeline_mode<synchronous>, transform_indices = @transform_13, window_bounds = array<i64: 1, 64>}, {pipeline_mode = #tpu.pipeline_mode<synchronous>, transform_indices = @transform_14, window_bounds = array<i64: 64, 32>}, {pipeline_mode = #tpu.pipeline_mode<synchronous>, transform_indices = @transform_15, window_bounds = array<i64: 1, 32>}, {pipeline_mode = #tpu.pipeline_mode<synchronous>, transform_indices = @transform_16, window_bounds = array<i64: 1, 32>}, {pipeline_mode = #tpu.pipeline_mode<synchronous>, transform_indices = @transform_17, window_bounds = array<i64: 1, 32>}, {pipeline_mode = #tpu.pipeline_mode<synchronous>, transform_indices = @transform_18, window_bounds = array<i64: 1, 32>}, {pipeline_mode = #tpu.pipeline_mode<synchronous>, transform_indices = @transform_19, window_bounds = array<i64: 1, 32>}, {pipeline_mode = #tpu.pipeline_mode<synchronous>, transform_indices = @transform_20, window_bounds = array<i64: 1, 32>}, {pipeline_mode = #tpu.pipeline_mode<synchronous>, transform_indices = @transform_21, window_bounds = array<i64: 1, 32>}, {transform_indices = @transform_22, window_bounds = array<i64: 1, 8, 32>}]} {
    %c0 = arith.constant 0 : index
    %c0_0 = arith.constant 0 : index
    %c0_1 = arith.constant 0 : index
    %0 = vector.load %arg1[%c0, %c0_0, %c0_1] : memref<1x8x32xf32, #tpu.memory_space<vmem>>, vector<1x8x32xf32>
    %1 = vector.shape_cast %0 : vector<1x8x32xf32> to vector<8x32xf32>
    %c0_2 = arith.constant 0 : index
    %c0_3 = arith.constant 0 : index
    %c0_4 = arith.constant 0 : index
    %2 = vector.load %arg2[%c0_2, %c0_3, %c0_4] : memref<1x8x32xf32, #tpu.memory_space<vmem>>, vector<1x8x32xf32>
    %3 = vector.shape_cast %2 : vector<1x8x32xf32> to vector<8x32xf32>
    %4 = arith.truncf %1 : vector<8x32xf32> to vector<8x32xbf16>
    %c0_5 = arith.constant 0 : index
    %c0_6 = arith.constant 0 : index
    %5 = vector.load %arg3[%c0_5, %c0_6] : memref<32x96xbf16, #tpu.memory_space<vmem>>, vector<32x96xbf16>
    %cst = arith.constant dense<0.000000e+00> : vector<8x96xf32>
    %6 = tpu.matmul %4, %5, %cst {dimension_numbers = #tpu.dot_dimension_numbers<[1], [0], [0], [1], [0, 0, 1, 1], [], []>} : vector<8x32xbf16>, vector<32x96xbf16>, vector<8x96xf32> -> vector<8x96xf32>
    %c0_7 = arith.constant 0 : index
    %c0_8 = arith.constant 0 : index
    %7 = vector.load %arg4[%c0_7, %c0_8] : memref<1x96xf32, #tpu.memory_space<vmem>>, vector<1x96xf32>
    %8 = vector.broadcast %7 : vector<1x96xf32> to vector<8x96xf32>
    %9 = arith.addf %6, %8 : vector<8x96xf32>
    %10 = arith.truncf %9 : vector<8x96xf32> to vector<8x96xbf16>
    %11 = vector.extract_strided_slice %10 {offsets = [0, 0], sizes = [8, 32], strides = [1, 1]} : vector<8x96xbf16> to vector<8x32xbf16>
    %12 = vector.shape_cast %11 : vector<8x32xbf16> to vector<1x8x32xbf16>
    %13 = vector.extract_strided_slice %10 {offsets = [0, 32], sizes = [8, 32], strides = [1, 1]} : vector<8x96xbf16> to vector<8x32xbf16>
    %14 = vector.shape_cast %13 : vector<8x32xbf16> to vector<1x8x32xbf16>
    %15 = vector.extract_strided_slice %10 {offsets = [0, 64], sizes = [8, 32], strides = [1, 1]} : vector<8x96xbf16> to vector<8x32xbf16>
    %16 = vector.shape_cast %15 : vector<8x32xbf16> to vector<1x8x32xbf16>
    %17 = vector.extract_strided_slice %12 {offsets = [0, 0, 0], sizes = [1, 8, 8], strides = [1, 1, 1]} : vector<1x8x32xbf16> to vector<1x8x8xbf16>
    %18 = vector.extract_strided_slice %14 {offsets = [0, 0, 0], sizes = [1, 8, 8], strides = [1, 1, 1]} : vector<1x8x32xbf16> to vector<1x8x8xbf16>
    "tpu.trace_start"() <{level = 10 : i32, message = "bqd,bkd->bqk"}> : () -> ()
    %cst_9 = arith.constant dense<0.000000e+00> : vector<1x8x8xf32>
    %19 = tpu.matmul %17, %18, %cst_9 {dimension_numbers = #tpu.dot_dimension_numbers<[2], [2], [1], [1], [0, 0, 0, 1, 1, 1], [0], [0]>} : vector<1x8x8xbf16>, vector<1x8x8xbf16>, vector<1x8x8xf32> -> vector<1x8x8xf32>
    "tpu.trace_stop"() : () -> ()
    %cst_10 = arith.constant dense<0xFF800000> : vector<1x8xf32>
    %20 = vector.multi_reduction <maximumf>, %19, %cst_10 [2] : vector<1x8x8xf32> to vector<1x8xf32>
    %21 = vector.shape_cast %20 : vector<1x8xf32> to vector<1x8x1xf32>
    %22 = vector.broadcast %21 : vector<1x8x1xf32> to vector<1x8x8xf32>
    %23 = arith.subf %19, %22 : vector<1x8x8xf32>
    %24 = math.exp %23 : vector<1x8x8xf32>
    %cst_11 = arith.constant dense<0.000000e+00> : vector<1x8xf32>
    %25 = vector.multi_reduction <add>, %24, %cst_11 [2] : vector<1x8x8xf32> to vector<1x8xf32>
    %26 = vector.shape_cast %25 : vector<1x8xf32> to vector<1x8x1xf32>
    %27 = tpu.reciprocal %26 {approx = true} : vector<1x8x1xf32> -> vector<1x8x1xf32>
    %28 = vector.broadcast %27 : vector<1x8x1xf32> to vector<1x8x8xf32>
    %29 = arith.mulf %24, %28 : vector<1x8x8xf32>
    %30 = arith.truncf %29 : vector<1x8x8xf32> to vector<1x8x8xbf16>
    %31 = vector.extract_strided_slice %16 {offsets = [0, 0, 0], sizes = [1, 8, 8], strides = [1, 1, 1]} : vector<1x8x32xbf16> to vector<1x8x8xbf16>
    "tpu.trace_start"() <{level = 10 : i32, message = "bqk,bkd->bqd"}> : () -> ()
    %cst_12 = arith.constant dense<0.000000e+00> : vector<1x8x8xf32>
    %32 = tpu.matmul %30, %31, %cst_12 {dimension_numbers = #tpu.dot_dimension_numbers<[2], [1], [1], [2], [0, 0, 0, 1, 1, 2], [0], [0]>} : vector<1x8x8xbf16>, vector<1x8x8xbf16>, vector<1x8x8xf32> -> vector<1x8x8xf32>
    "tpu.trace_stop"() : () -> ()
    %33 = vector.extract_strided_slice %12 {offsets = [0, 0, 8], sizes = [1, 8, 8], strides = [1, 1, 1]} : vector<1x8x32xbf16> to vector<1x8x8xbf16>
    %34 = vector.extract_strided_slice %14 {offsets = [0, 0, 8], sizes = [1, 8, 8], strides = [1, 1, 1]} : vector<1x8x32xbf16> to vector<1x8x8xbf16>
    "tpu.trace_start"() <{level = 10 : i32, message = "bqd,bkd->bqk"}> : () -> ()
    %cst_13 = arith.constant dense<0.000000e+00> : vector<1x8x8xf32>
    %35 = tpu.matmul %33, %34, %cst_13 {dimension_numbers = #tpu.dot_dimension_numbers<[2], [2], [1], [1], [0, 0, 0, 1, 1, 1], [0], [0]>} : vector<1x8x8xbf16>, vector<1x8x8xbf16>, vector<1x8x8xf32> -> vector<1x8x8xf32>
    "tpu.trace_stop"() : () -> ()
    %cst_14 = arith.constant dense<0xFF800000> : vector<1x8xf32>
    %36 = vector.multi_reduction <maximumf>, %35, %cst_14 [2] : vector<1x8x8xf32> to vector<1x8xf32>
    %37 = vector.shape_cast %36 : vector<1x8xf32> to vector<1x8x1xf32>
    %38 = vector.broadcast %37 : vector<1x8x1xf32> to vector<1x8x8xf32>
    %39 = arith.subf %35, %38 : vector<1x8x8xf32>
    %40 = math.exp %39 : vector<1x8x8xf32>
    %cst_15 = arith.constant dense<0.000000e+00> : vector<1x8xf32>
    %41 = vector.multi_reduction <add>, %40, %cst_15 [2] : vector<1x8x8xf32> to vector<1x8xf32>
    %42 = vector.shape_cast %41 : vector<1x8xf32> to vector<1x8x1xf32>
    %43 = tpu.reciprocal %42 {approx = true} : vector<1x8x1xf32> -> vector<1x8x1xf32>
    %44 = vector.broadcast %43 : vector<1x8x1xf32> to vector<1x8x8xf32>
    %45 = arith.mulf %40, %44 : vector<1x8x8xf32>
    %46 = arith.truncf %45 : vector<1x8x8xf32> to vector<1x8x8xbf16>
    %47 = vector.extract_strided_slice %16 {offsets = [0, 0, 8], sizes = [1, 8, 8], strides = [1, 1, 1]} : vector<1x8x32xbf16> to vector<1x8x8xbf16>
    "tpu.trace_start"() <{level = 10 : i32, message = "bqk,bkd->bqd"}> : () -> ()
    %cst_16 = arith.constant dense<0.000000e+00> : vector<1x8x8xf32>
    %48 = tpu.matmul %46, %47, %cst_16 {dimension_numbers = #tpu.dot_dimension_numbers<[2], [1], [1], [2], [0, 0, 0, 1, 1, 2], [0], [0]>} : vector<1x8x8xbf16>, vector<1x8x8xbf16>, vector<1x8x8xf32> -> vector<1x8x8xf32>
    "tpu.trace_stop"() : () -> ()
    %49 = vector.extract_strided_slice %12 {offsets = [0, 0, 16], sizes = [1, 8, 8], strides = [1, 1, 1]} : vector<1x8x32xbf16> to vector<1x8x8xbf16>
    %50 = vector.extract_strided_slice %14 {offsets = [0, 0, 16], sizes = [1, 8, 8], strides = [1, 1, 1]} : vector<1x8x32xbf16> to vector<1x8x8xbf16>
    "tpu.trace_start"() <{level = 10 : i32, message = "bqd,bkd->bqk"}> : () -> ()
    %cst_17 = arith.constant dense<0.000000e+00> : vector<1x8x8xf32>
    %51 = tpu.matmul %49, %50, %cst_17 {dimension_numbers = #tpu.dot_dimension_numbers<[2], [2], [1], [1], [0, 0, 0, 1, 1, 1], [0], [0]>} : vector<1x8x8xbf16>, vector<1x8x8xbf16>, vector<1x8x8xf32> -> vector<1x8x8xf32>
    "tpu.trace_stop"() : () -> ()
    %cst_18 = arith.constant dense<0xFF800000> : vector<1x8xf32>
    %52 = vector.multi_reduction <maximumf>, %51, %cst_18 [2] : vector<1x8x8xf32> to vector<1x8xf32>
    %53 = vector.shape_cast %52 : vector<1x8xf32> to vector<1x8x1xf32>
    %54 = vector.broadcast %53 : vector<1x8x1xf32> to vector<1x8x8xf32>
    %55 = arith.subf %51, %54 : vector<1x8x8xf32>
    %56 = math.exp %55 : vector<1x8x8xf32>
    %cst_19 = arith.constant dense<0.000000e+00> : vector<1x8xf32>
    %57 = vector.multi_reduction <add>, %56, %cst_19 [2] : vector<1x8x8xf32> to vector<1x8xf32>
    %58 = vector.shape_cast %57 : vector<1x8xf32> to vector<1x8x1xf32>
    %59 = tpu.reciprocal %58 {approx = true} : vector<1x8x1xf32> -> vector<1x8x1xf32>
    %60 = vector.broadcast %59 : vector<1x8x1xf32> to vector<1x8x8xf32>
    %61 = arith.mulf %56, %60 : vector<1x8x8xf32>
    %62 = arith.truncf %61 : vector<1x8x8xf32> to vector<1x8x8xbf16>
    %63 = vector.extract_strided_slice %16 {offsets = [0, 0, 16], sizes = [1, 8, 8], strides = [1, 1, 1]} : vector<1x8x32xbf16> to vector<1x8x8xbf16>
    "tpu.trace_start"() <{level = 10 : i32, message = "bqk,bkd->bqd"}> : () -> ()
    %cst_20 = arith.constant dense<0.000000e+00> : vector<1x8x8xf32>
    %64 = tpu.matmul %62, %63, %cst_20 {dimension_numbers = #tpu.dot_dimension_numbers<[2], [1], [1], [2], [0, 0, 0, 1, 1, 2], [0], [0]>} : vector<1x8x8xbf16>, vector<1x8x8xbf16>, vector<1x8x8xf32> -> vector<1x8x8xf32>
    "tpu.trace_stop"() : () -> ()
    %65 = vector.extract_strided_slice %12 {offsets = [0, 0, 24], sizes = [1, 8, 8], strides = [1, 1, 1]} : vector<1x8x32xbf16> to vector<1x8x8xbf16>
    %66 = vector.extract_strided_slice %14 {offsets = [0, 0, 24], sizes = [1, 8, 8], strides = [1, 1, 1]} : vector<1x8x32xbf16> to vector<1x8x8xbf16>
    "tpu.trace_start"() <{level = 10 : i32, message = "bqd,bkd->bqk"}> : () -> ()
    %cst_21 = arith.constant dense<0.000000e+00> : vector<1x8x8xf32>
    %67 = tpu.matmul %65, %66, %cst_21 {dimension_numbers = #tpu.dot_dimension_numbers<[2], [2], [1], [1], [0, 0, 0, 1, 1, 1], [0], [0]>} : vector<1x8x8xbf16>, vector<1x8x8xbf16>, vector<1x8x8xf32> -> vector<1x8x8xf32>
    "tpu.trace_stop"() : () -> ()
    %cst_22 = arith.constant dense<0xFF800000> : vector<1x8xf32>
    %68 = vector.multi_reduction <maximumf>, %67, %cst_22 [2] : vector<1x8x8xf32> to vector<1x8xf32>
    %69 = vector.shape_cast %68 : vector<1x8xf32> to vector<1x8x1xf32>
    %70 = vector.broadcast %69 : vector<1x8x1xf32> to vector<1x8x8xf32>
    %71 = arith.subf %67, %70 : vector<1x8x8xf32>
    %72 = math.exp %71 : vector<1x8x8xf32>
    %cst_23 = arith.constant dense<0.000000e+00> : vector<1x8xf32>
    %73 = vector.multi_reduction <add>, %72, %cst_23 [2] : vector<1x8x8xf32> to vector<1x8xf32>
    %74 = vector.shape_cast %73 : vector<1x8xf32> to vector<1x8x1xf32>
    %75 = tpu.reciprocal %74 {approx = true} : vector<1x8x1xf32> -> vector<1x8x1xf32>
    %76 = vector.broadcast %75 : vector<1x8x1xf32> to vector<1x8x8xf32>
    %77 = arith.mulf %72, %76 : vector<1x8x8xf32>
    %78 = arith.truncf %77 : vector<1x8x8xf32> to vector<1x8x8xbf16>
    %79 = vector.extract_strided_slice %16 {offsets = [0, 0, 24], sizes = [1, 8, 8], strides = [1, 1, 1]} : vector<1x8x32xbf16> to vector<1x8x8xbf16>
    "tpu.trace_start"() <{level = 10 : i32, message = "bqk,bkd->bqd"}> : () -> ()
    %cst_24 = arith.constant dense<0.000000e+00> : vector<1x8x8xf32>
    %80 = tpu.matmul %78, %79, %cst_24 {dimension_numbers = #tpu.dot_dimension_numbers<[2], [1], [1], [2], [0, 0, 0, 1, 1, 2], [0], [0]>} : vector<1x8x8xbf16>, vector<1x8x8xbf16>, vector<1x8x8xf32> -> vector<1x8x8xf32>
    "tpu.trace_stop"() : () -> ()
    %81 = tpu.concatenate %32, %48, %64, %80 in 2 : vector<1x8x8xf32>, vector<1x8x8xf32>, vector<1x8x8xf32>, vector<1x8x8xf32> -> vector<1x8x32xf32>
    %82 = vector.shape_cast %81 : vector<1x8x32xf32> to vector<8x32xf32>
    %83 = arith.truncf %82 : vector<8x32xf32> to vector<8x32xbf16>
    %c0_25 = arith.constant 0 : index
    %c0_26 = arith.constant 0 : index
    %84 = vector.load %arg5[%c0_25, %c0_26] : memref<32x32xbf16, #tpu.memory_space<vmem>>, vector<32x32xbf16>
    %cst_27 = arith.constant dense<0.000000e+00> : vector<8x32xf32>
    %85 = tpu.matmul %83, %84, %cst_27 {dimension_numbers = #tpu.dot_dimension_numbers<[1], [0], [0], [1], [0, 0, 1, 1], [], []>} : vector<8x32xbf16>, vector<32x32xbf16>, vector<8x32xf32> -> vector<8x32xf32>
    %c0_28 = arith.constant 0 : index
    %c0_29 = arith.constant 0 : index
    %86 = vector.load %arg6[%c0_28, %c0_29] : memref<1x32xf32, #tpu.memory_space<vmem>>, vector<1x32xf32>
    %87 = vector.broadcast %86 : vector<1x32xf32> to vector<8x32xf32>
    %88 = arith.addf %85, %87 : vector<8x32xf32>
    %89 = arith.addf %1, %88 : vector<8x32xf32>
    %cst_30 = arith.constant dense<0.000000e+00> : vector<8xf32>
    %90 = vector.multi_reduction <add>, %89, %cst_30 [1] : vector<8x32xf32> to vector<8xf32>
    %91 = vector.shape_cast %90 : vector<8xf32> to vector<8x1xf32>
    %cst_31 = arith.constant 3.200000e+01 : f32
    %92 = vector.broadcast %cst_31 : f32 to vector<8x1xf32>
    %93 = arith.divf %91, %92 : vector<8x1xf32>
    %94 = vector.broadcast %93 : vector<8x1xf32> to vector<8x32xf32>
    %95 = arith.subf %89, %94 : vector<8x32xf32>
    %96 = arith.mulf %95, %95 : vector<8x32xf32>
    %cst_32 = arith.constant dense<0.000000e+00> : vector<8xf32>
    %97 = vector.multi_reduction <add>, %96, %cst_32 [1] : vector<8x32xf32> to vector<8xf32>
    %98 = vector.shape_cast %97 : vector<8xf32> to vector<8x1xf32>
    %cst_33 = arith.constant 3.200000e+01 : f32
    %99 = vector.broadcast %cst_33 : f32 to vector<8x1xf32>
    %100 = arith.divf %98, %99 : vector<8x1xf32>
    %101 = vector.broadcast %93 : vector<8x1xf32> to vector<8x32xf32>
    %102 = arith.subf %89, %101 : vector<8x32xf32>
    %cst_34 = arith.constant 9.99999974E-6 : f32
    %103 = vector.broadcast %cst_34 : f32 to vector<8x1xf32>
    %104 = arith.addf %100, %103 : vector<8x1xf32>
    %105 = math.rsqrt %104 : vector<8x1xf32>
    %106 = vector.broadcast %105 : vector<8x1xf32> to vector<8x32xf32>
    %107 = arith.mulf %102, %106 : vector<8x32xf32>
    %c0_35 = arith.constant 0 : index
    %c0_36 = arith.constant 0 : index
    %108 = vector.load %arg17[%c0_35, %c0_36] : memref<1x32xf32, #tpu.memory_space<vmem>>, vector<1x32xf32>
    %109 = vector.broadcast %108 : vector<1x32xf32> to vector<8x32xf32>
    %110 = arith.mulf %107, %109 : vector<8x32xf32>
    %c0_37 = arith.constant 0 : index
    %c0_38 = arith.constant 0 : index
    %111 = vector.load %arg18[%c0_37, %c0_38] : memref<1x32xf32, #tpu.memory_space<vmem>>, vector<1x32xf32>
    %112 = vector.broadcast %111 : vector<1x32xf32> to vector<8x32xf32>
    %113 = arith.addf %110, %112 : vector<8x32xf32>
    %114 = arith.truncf %113 : vector<8x32xf32> to vector<8x32xbf16>
    %c0_39 = arith.constant 0 : index
    %c0_40 = arith.constant 0 : index
    %115 = vector.load %arg7[%c0_39, %c0_40] : memref<32x32xbf16, #tpu.memory_space<vmem>>, vector<32x32xbf16>
    %cst_41 = arith.constant dense<0.000000e+00> : vector<8x32xf32>
    %116 = tpu.matmul %114, %115, %cst_41 {dimension_numbers = #tpu.dot_dimension_numbers<[1], [0], [0], [1], [0, 0, 1, 1], [], []>} : vector<8x32xbf16>, vector<32x32xbf16>, vector<8x32xf32> -> vector<8x32xf32>
    %c0_42 = arith.constant 0 : index
    %c0_43 = arith.constant 0 : index
    %117 = vector.load %arg8[%c0_42, %c0_43] : memref<1x32xf32, #tpu.memory_space<vmem>>, vector<1x32xf32>
    %118 = vector.broadcast %117 : vector<1x32xf32> to vector<8x32xf32>
    %119 = arith.addf %116, %118 : vector<8x32xf32>
    %120 = arith.truncf %3 : vector<8x32xf32> to vector<8x32xbf16>
    %c0_44 = arith.constant 0 : index
    %c0_45 = arith.constant 0 : index
    %121 = vector.load %arg9[%c0_44, %c0_45] : memref<32x64xbf16, #tpu.memory_space<vmem>>, vector<32x64xbf16>
    %cst_46 = arith.constant dense<0.000000e+00> : vector<8x64xf32>
    %122 = tpu.matmul %120, %121, %cst_46 {dimension_numbers = #tpu.dot_dimension_numbers<[1], [0], [0], [1], [0, 0, 1, 1], [], []>} : vector<8x32xbf16>, vector<32x64xbf16>, vector<8x64xf32> -> vector<8x64xf32>
    %c0_47 = arith.constant 0 : index
    %c0_48 = arith.constant 0 : index
    %123 = vector.load %arg10[%c0_47, %c0_48] : memref<1x64xf32, #tpu.memory_space<vmem>>, vector<1x64xf32>
    %124 = vector.broadcast %123 : vector<1x64xf32> to vector<8x64xf32>
    %125 = arith.addf %122, %124 : vector<8x64xf32>
    %126 = arith.truncf %125 : vector<8x64xf32> to vector<8x64xbf16>
    %127 = arith.truncf %119 : vector<8x32xf32> to vector<8x32xbf16>
    %128 = vector.shape_cast %127 : vector<8x32xbf16> to vector<1x8x32xbf16>
    %129 = vector.extract_strided_slice %126 {offsets = [0, 0], sizes = [8, 32], strides = [1, 1]} : vector<8x64xbf16> to vector<8x32xbf16>
    %130 = vector.shape_cast %129 : vector<8x32xbf16> to vector<1x8x32xbf16>
    %131 = vector.extract_strided_slice %126 {offsets = [0, 32], sizes = [8, 32], strides = [1, 1]} : vector<8x64xbf16> to vector<8x32xbf16>
    %132 = vector.shape_cast %131 : vector<8x32xbf16> to vector<1x8x32xbf16>
    %133 = vector.extract_strided_slice %128 {offsets = [0, 0, 0], sizes = [1, 8, 8], strides = [1, 1, 1]} : vector<1x8x32xbf16> to vector<1x8x8xbf16>
    %134 = vector.extract_strided_slice %130 {offsets = [0, 0, 0], sizes = [1, 8, 8], strides = [1, 1, 1]} : vector<1x8x32xbf16> to vector<1x8x8xbf16>
    "tpu.trace_start"() <{level = 10 : i32, message = "bqd,bkd->bqk"}> : () -> ()
    %cst_49 = arith.constant dense<0.000000e+00> : vector<1x8x8xf32>
    %135 = tpu.matmul %133, %134, %cst_49 {dimension_numbers = #tpu.dot_dimension_numbers<[2], [2], [1], [1], [0, 0, 0, 1, 1, 1], [0], [0]>} : vector<1x8x8xbf16>, vector<1x8x8xbf16>, vector<1x8x8xf32> -> vector<1x8x8xf32>
    "tpu.trace_stop"() : () -> ()
    %cst_50 = arith.constant dense<0xFF800000> : vector<1x8xf32>
    %136 = vector.multi_reduction <maximumf>, %135, %cst_50 [2] : vector<1x8x8xf32> to vector<1x8xf32>
    %137 = vector.shape_cast %136 : vector<1x8xf32> to vector<1x8x1xf32>
    %138 = vector.broadcast %137 : vector<1x8x1xf32> to vector<1x8x8xf32>
    %139 = arith.subf %135, %138 : vector<1x8x8xf32>
    %140 = math.exp %139 : vector<1x8x8xf32>
    %cst_51 = arith.constant dense<0.000000e+00> : vector<1x8xf32>
    %141 = vector.multi_reduction <add>, %140, %cst_51 [2] : vector<1x8x8xf32> to vector<1x8xf32>
    %142 = vector.shape_cast %141 : vector<1x8xf32> to vector<1x8x1xf32>
    %143 = tpu.reciprocal %142 {approx = true} : vector<1x8x1xf32> -> vector<1x8x1xf32>
    %144 = vector.broadcast %143 : vector<1x8x1xf32> to vector<1x8x8xf32>
    %145 = arith.mulf %140, %144 : vector<1x8x8xf32>
    %146 = arith.truncf %145 : vector<1x8x8xf32> to vector<1x8x8xbf16>
    %147 = vector.extract_strided_slice %132 {offsets = [0, 0, 0], sizes = [1, 8, 8], strides = [1, 1, 1]} : vector<1x8x32xbf16> to vector<1x8x8xbf16>
    "tpu.trace_start"() <{level = 10 : i32, message = "bqk,bkd->bqd"}> : () -> ()
    %cst_52 = arith.constant dense<0.000000e+00> : vector<1x8x8xf32>
    %148 = tpu.matmul %146, %147, %cst_52 {dimension_numbers = #tpu.dot_dimension_numbers<[2], [1], [1], [2], [0, 0, 0, 1, 1, 2], [0], [0]>} : vector<1x8x8xbf16>, vector<1x8x8xbf16>, vector<1x8x8xf32> -> vector<1x8x8xf32>
    "tpu.trace_stop"() : () -> ()
    %149 = vector.extract_strided_slice %128 {offsets = [0, 0, 8], sizes = [1, 8, 8], strides = [1, 1, 1]} : vector<1x8x32xbf16> to vector<1x8x8xbf16>
    %150 = vector.extract_strided_slice %130 {offsets = [0, 0, 8], sizes = [1, 8, 8], strides = [1, 1, 1]} : vector<1x8x32xbf16> to vector<1x8x8xbf16>
    "tpu.trace_start"() <{level = 10 : i32, message = "bqd,bkd->bqk"}> : () -> ()
    %cst_53 = arith.constant dense<0.000000e+00> : vector<1x8x8xf32>
    %151 = tpu.matmul %149, %150, %cst_53 {dimension_numbers = #tpu.dot_dimension_numbers<[2], [2], [1], [1], [0, 0, 0, 1, 1, 1], [0], [0]>} : vector<1x8x8xbf16>, vector<1x8x8xbf16>, vector<1x8x8xf32> -> vector<1x8x8xf32>
    "tpu.trace_stop"() : () -> ()
    %cst_54 = arith.constant dense<0xFF800000> : vector<1x8xf32>
    %152 = vector.multi_reduction <maximumf>, %151, %cst_54 [2] : vector<1x8x8xf32> to vector<1x8xf32>
    %153 = vector.shape_cast %152 : vector<1x8xf32> to vector<1x8x1xf32>
    %154 = vector.broadcast %153 : vector<1x8x1xf32> to vector<1x8x8xf32>
    %155 = arith.subf %151, %154 : vector<1x8x8xf32>
    %156 = math.exp %155 : vector<1x8x8xf32>
    %cst_55 = arith.constant dense<0.000000e+00> : vector<1x8xf32>
    %157 = vector.multi_reduction <add>, %156, %cst_55 [2] : vector<1x8x8xf32> to vector<1x8xf32>
    %158 = vector.shape_cast %157 : vector<1x8xf32> to vector<1x8x1xf32>
    %159 = tpu.reciprocal %158 {approx = true} : vector<1x8x1xf32> -> vector<1x8x1xf32>
    %160 = vector.broadcast %159 : vector<1x8x1xf32> to vector<1x8x8xf32>
    %161 = arith.mulf %156, %160 : vector<1x8x8xf32>
    %162 = arith.truncf %161 : vector<1x8x8xf32> to vector<1x8x8xbf16>
    %163 = vector.extract_strided_slice %132 {offsets = [0, 0, 8], sizes = [1, 8, 8], strides = [1, 1, 1]} : vector<1x8x32xbf16> to vector<1x8x8xbf16>
    "tpu.trace_start"() <{level = 10 : i32, message = "bqk,bkd->bqd"}> : () -> ()
    %cst_56 = arith.constant dense<0.000000e+00> : vector<1x8x8xf32>
    %164 = tpu.matmul %162, %163, %cst_56 {dimension_numbers = #tpu.dot_dimension_numbers<[2], [1], [1], [2], [0, 0, 0, 1, 1, 2], [0], [0]>} : vector<1x8x8xbf16>, vector<1x8x8xbf16>, vector<1x8x8xf32> -> vector<1x8x8xf32>
    "tpu.trace_stop"() : () -> ()
    %165 = vector.extract_strided_slice %128 {offsets = [0, 0, 16], sizes = [1, 8, 8], strides = [1, 1, 1]} : vector<1x8x32xbf16> to vector<1x8x8xbf16>
    %166 = vector.extract_strided_slice %130 {offsets = [0, 0, 16], sizes = [1, 8, 8], strides = [1, 1, 1]} : vector<1x8x32xbf16> to vector<1x8x8xbf16>
    "tpu.trace_start"() <{level = 10 : i32, message = "bqd,bkd->bqk"}> : () -> ()
    %cst_57 = arith.constant dense<0.000000e+00> : vector<1x8x8xf32>
    %167 = tpu.matmul %165, %166, %cst_57 {dimension_numbers = #tpu.dot_dimension_numbers<[2], [2], [1], [1], [0, 0, 0, 1, 1, 1], [0], [0]>} : vector<1x8x8xbf16>, vector<1x8x8xbf16>, vector<1x8x8xf32> -> vector<1x8x8xf32>
    "tpu.trace_stop"() : () -> ()
    %cst_58 = arith.constant dense<0xFF800000> : vector<1x8xf32>
    %168 = vector.multi_reduction <maximumf>, %167, %cst_58 [2] : vector<1x8x8xf32> to vector<1x8xf32>
    %169 = vector.shape_cast %168 : vector<1x8xf32> to vector<1x8x1xf32>
    %170 = vector.broadcast %169 : vector<1x8x1xf32> to vector<1x8x8xf32>
    %171 = arith.subf %167, %170 : vector<1x8x8xf32>
    %172 = math.exp %171 : vector<1x8x8xf32>
    %cst_59 = arith.constant dense<0.000000e+00> : vector<1x8xf32>
    %173 = vector.multi_reduction <add>, %172, %cst_59 [2] : vector<1x8x8xf32> to vector<1x8xf32>
    %174 = vector.shape_cast %173 : vector<1x8xf32> to vector<1x8x1xf32>
    %175 = tpu.reciprocal %174 {approx = true} : vector<1x8x1xf32> -> vector<1x8x1xf32>
    %176 = vector.broadcast %175 : vector<1x8x1xf32> to vector<1x8x8xf32>
    %177 = arith.mulf %172, %176 : vector<1x8x8xf32>
    %178 = arith.truncf %177 : vector<1x8x8xf32> to vector<1x8x8xbf16>
    %179 = vector.extract_strided_slice %132 {offsets = [0, 0, 16], sizes = [1, 8, 8], strides = [1, 1, 1]} : vector<1x8x32xbf16> to vector<1x8x8xbf16>
    "tpu.trace_start"() <{level = 10 : i32, message = "bqk,bkd->bqd"}> : () -> ()
    %cst_60 = arith.constant dense<0.000000e+00> : vector<1x8x8xf32>
    %180 = tpu.matmul %178, %179, %cst_60 {dimension_numbers = #tpu.dot_dimension_numbers<[2], [1], [1], [2], [0, 0, 0, 1, 1, 2], [0], [0]>} : vector<1x8x8xbf16>, vector<1x8x8xbf16>, vector<1x8x8xf32> -> vector<1x8x8xf32>
    "tpu.trace_stop"() : () -> ()
    %181 = vector.extract_strided_slice %128 {offsets = [0, 0, 24], sizes = [1, 8, 8], strides = [1, 1, 1]} : vector<1x8x32xbf16> to vector<1x8x8xbf16>
    %182 = vector.extract_strided_slice %130 {offsets = [0, 0, 24], sizes = [1, 8, 8], strides = [1, 1, 1]} : vector<1x8x32xbf16> to vector<1x8x8xbf16>
    "tpu.trace_start"() <{level = 10 : i32, message = "bqd,bkd->bqk"}> : () -> ()
    %cst_61 = arith.constant dense<0.000000e+00> : vector<1x8x8xf32>
    %183 = tpu.matmul %181, %182, %cst_61 {dimension_numbers = #tpu.dot_dimension_numbers<[2], [2], [1], [1], [0, 0, 0, 1, 1, 1], [0], [0]>} : vector<1x8x8xbf16>, vector<1x8x8xbf16>, vector<1x8x8xf32> -> vector<1x8x8xf32>
    "tpu.trace_stop"() : () -> ()
    %cst_62 = arith.constant dense<0xFF800000> : vector<1x8xf32>
    %184 = vector.multi_reduction <maximumf>, %183, %cst_62 [2] : vector<1x8x8xf32> to vector<1x8xf32>
    %185 = vector.shape_cast %184 : vector<1x8xf32> to vector<1x8x1xf32>
    %186 = vector.broadcast %185 : vector<1x8x1xf32> to vector<1x8x8xf32>
    %187 = arith.subf %183, %186 : vector<1x8x8xf32>
    %188 = math.exp %187 : vector<1x8x8xf32>
    %cst_63 = arith.constant dense<0.000000e+00> : vector<1x8xf32>
    %189 = vector.multi_reduction <add>, %188, %cst_63 [2] : vector<1x8x8xf32> to vector<1x8xf32>
    %190 = vector.shape_cast %189 : vector<1x8xf32> to vector<1x8x1xf32>
    %191 = tpu.reciprocal %190 {approx = true} : vector<1x8x1xf32> -> vector<1x8x1xf32>
    %192 = vector.broadcast %191 : vector<1x8x1xf32> to vector<1x8x8xf32>
    %193 = arith.mulf %188, %192 : vector<1x8x8xf32>
    %194 = arith.truncf %193 : vector<1x8x8xf32> to vector<1x8x8xbf16>
    %195 = vector.extract_strided_slice %132 {offsets = [0, 0, 24], sizes = [1, 8, 8], strides = [1, 1, 1]} : vector<1x8x32xbf16> to vector<1x8x8xbf16>
    "tpu.trace_start"() <{level = 10 : i32, message = "bqk,bkd->bqd"}> : () -> ()
    %cst_64 = arith.constant dense<0.000000e+00> : vector<1x8x8xf32>
    %196 = tpu.matmul %194, %195, %cst_64 {dimension_numbers = #tpu.dot_dimension_numbers<[2], [1], [1], [2], [0, 0, 0, 1, 1, 2], [0], [0]>} : vector<1x8x8xbf16>, vector<1x8x8xbf16>, vector<1x8x8xf32> -> vector<1x8x8xf32>
    "tpu.trace_stop"() : () -> ()
    %197 = tpu.concatenate %148, %164, %180, %196 in 2 : vector<1x8x8xf32>, vector<1x8x8xf32>, vector<1x8x8xf32>, vector<1x8x8xf32> -> vector<1x8x32xf32>
    %198 = vector.shape_cast %197 : vector<1x8x32xf32> to vector<8x32xf32>
    %199 = arith.truncf %198 : vector<8x32xf32> to vector<8x32xbf16>
    %c0_65 = arith.constant 0 : index
    %c0_66 = arith.constant 0 : index
    %200 = vector.load %arg11[%c0_65, %c0_66] : memref<32x32xbf16, #tpu.memory_space<vmem>>, vector<32x32xbf16>
    %cst_67 = arith.constant dense<0.000000e+00> : vector<8x32xf32>
    %201 = tpu.matmul %199, %200, %cst_67 {dimension_numbers = #tpu.dot_dimension_numbers<[1], [0], [0], [1], [0, 0, 1, 1], [], []>} : vector<8x32xbf16>, vector<32x32xbf16>, vector<8x32xf32> -> vector<8x32xf32>
    %c0_68 = arith.constant 0 : index
    %c0_69 = arith.constant 0 : index
    %202 = vector.load %arg12[%c0_68, %c0_69] : memref<1x32xf32, #tpu.memory_space<vmem>>, vector<1x32xf32>
    %203 = vector.broadcast %202 : vector<1x32xf32> to vector<8x32xf32>
    %204 = arith.addf %201, %203 : vector<8x32xf32>
    %205 = arith.addf %113, %204 : vector<8x32xf32>
    %cst_70 = arith.constant dense<0.000000e+00> : vector<8xf32>
    %206 = vector.multi_reduction <add>, %205, %cst_70 [1] : vector<8x32xf32> to vector<8xf32>
    %207 = vector.shape_cast %206 : vector<8xf32> to vector<8x1xf32>
    %cst_71 = arith.constant 3.200000e+01 : f32
    %208 = vector.broadcast %cst_71 : f32 to vector<8x1xf32>
    %209 = arith.divf %207, %208 : vector<8x1xf32>
    %210 = vector.broadcast %209 : vector<8x1xf32> to vector<8x32xf32>
    %211 = arith.subf %205, %210 : vector<8x32xf32>
    %212 = arith.mulf %211, %211 : vector<8x32xf32>
    %cst_72 = arith.constant dense<0.000000e+00> : vector<8xf32>
    %213 = vector.multi_reduction <add>, %212, %cst_72 [1] : vector<8x32xf32> to vector<8xf32>
    %214 = vector.shape_cast %213 : vector<8xf32> to vector<8x1xf32>
    %cst_73 = arith.constant 3.200000e+01 : f32
    %215 = vector.broadcast %cst_73 : f32 to vector<8x1xf32>
    %216 = arith.divf %214, %215 : vector<8x1xf32>
    %217 = vector.broadcast %209 : vector<8x1xf32> to vector<8x32xf32>
    %218 = arith.subf %205, %217 : vector<8x32xf32>
    %cst_74 = arith.constant 9.99999974E-6 : f32
    %219 = vector.broadcast %cst_74 : f32 to vector<8x1xf32>
    %220 = arith.addf %216, %219 : vector<8x1xf32>
    %221 = math.rsqrt %220 : vector<8x1xf32>
    %222 = vector.broadcast %221 : vector<8x1xf32> to vector<8x32xf32>
    %223 = arith.mulf %218, %222 : vector<8x32xf32>
    %c0_75 = arith.constant 0 : index
    %c0_76 = arith.constant 0 : index
    %224 = vector.load %arg19[%c0_75, %c0_76] : memref<1x32xf32, #tpu.memory_space<vmem>>, vector<1x32xf32>
    %225 = vector.broadcast %224 : vector<1x32xf32> to vector<8x32xf32>
    %226 = arith.mulf %223, %225 : vector<8x32xf32>
    %c0_77 = arith.constant 0 : index
    %c0_78 = arith.constant 0 : index
    %227 = vector.load %arg20[%c0_77, %c0_78] : memref<1x32xf32, #tpu.memory_space<vmem>>, vector<1x32xf32>
    %228 = vector.broadcast %227 : vector<1x32xf32> to vector<8x32xf32>
    %229 = arith.addf %226, %228 : vector<8x32xf32>
    %230 = arith.truncf %229 : vector<8x32xf32> to vector<8x32xbf16>
    %c0_79 = arith.constant 0 : index
    %c0_80 = arith.constant 0 : index
    %231 = vector.load %arg13[%c0_79, %c0_80] : memref<32x64xbf16, #tpu.memory_space<vmem>>, vector<32x64xbf16>
    %cst_81 = arith.constant dense<0.000000e+00> : vector<8x64xf32>
    %232 = tpu.matmul %230, %231, %cst_81 {dimension_numbers = #tpu.dot_dimension_numbers<[1], [0], [0], [1], [0, 0, 1, 1], [], []>} : vector<8x32xbf16>, vector<32x64xbf16>, vector<8x64xf32> -> vector<8x64xf32>
    %c0_82 = arith.constant 0 : index
    %c0_83 = arith.constant 0 : index
    %233 = vector.load %arg14[%c0_82, %c0_83] : memref<1x64xf32, #tpu.memory_space<vmem>>, vector<1x64xf32>
    %234 = vector.broadcast %233 : vector<1x64xf32> to vector<8x64xf32>
    %235 = arith.addf %232, %234 : vector<8x64xf32>
    %cst_84 = arith.constant 0.000000e+00 : f32
    %236 = vector.broadcast %cst_84 : f32 to vector<8x64xf32>
    %237 = arith.maximumf %235, %236 : vector<8x64xf32>
    %238 = arith.truncf %237 : vector<8x64xf32> to vector<8x64xbf16>
    %c0_85 = arith.constant 0 : index
    %c0_86 = arith.constant 0 : index
    %239 = vector.load %arg15[%c0_85, %c0_86] : memref<64x32xbf16, #tpu.memory_space<vmem>>, vector<64x32xbf16>
    %cst_87 = arith.constant dense<0.000000e+00> : vector<8x32xf32>
    %240 = tpu.matmul %238, %239, %cst_87 {dimension_numbers = #tpu.dot_dimension_numbers<[1], [0], [0], [1], [0, 0, 1, 1], [], []>} : vector<8x64xbf16>, vector<64x32xbf16>, vector<8x32xf32> -> vector<8x32xf32>
    %c0_88 = arith.constant 0 : index
    %c0_89 = arith.constant 0 : index
    %241 = vector.load %arg16[%c0_88, %c0_89] : memref<1x32xf32, #tpu.memory_space<vmem>>, vector<1x32xf32>
    %242 = vector.broadcast %241 : vector<1x32xf32> to vector<8x32xf32>
    %243 = arith.addf %240, %242 : vector<8x32xf32>
    %244 = arith.addf %229, %243 : vector<8x32xf32>
    %cst_90 = arith.constant dense<0.000000e+00> : vector<8xf32>
    %245 = vector.multi_reduction <add>, %244, %cst_90 [1] : vector<8x32xf32> to vector<8xf32>
    %246 = vector.shape_cast %245 : vector<8xf32> to vector<8x1xf32>
    %cst_91 = arith.constant 3.200000e+01 : f32
    %247 = vector.broadcast %cst_91 : f32 to vector<8x1xf32>
    %248 = arith.divf %246, %247 : vector<8x1xf32>
    %249 = vector.broadcast %248 : vector<8x1xf32> to vector<8x32xf32>
    %250 = arith.subf %244, %249 : vector<8x32xf32>
    %251 = arith.mulf %250, %250 : vector<8x32xf32>
    %cst_92 = arith.constant dense<0.000000e+00> : vector<8xf32>
    %252 = vector.multi_reduction <add>, %251, %cst_92 [1] : vector<8x32xf32> to vector<8xf32>
    %253 = vector.shape_cast %252 : vector<8xf32> to vector<8x1xf32>
    %cst_93 = arith.constant 3.200000e+01 : f32
    %254 = vector.broadcast %cst_93 : f32 to vector<8x1xf32>
    %255 = arith.divf %253, %254 : vector<8x1xf32>
    %256 = vector.broadcast %248 : vector<8x1xf32> to vector<8x32xf32>
    %257 = arith.subf %244, %256 : vector<8x32xf32>
    %cst_94 = arith.constant 9.99999974E-6 : f32
    %258 = vector.broadcast %cst_94 : f32 to vector<8x1xf32>
    %259 = arith.addf %255, %258 : vector<8x1xf32>
    %260 = math.rsqrt %259 : vector<8x1xf32>
    %261 = vector.broadcast %260 : vector<8x1xf32> to vector<8x32xf32>
    %262 = arith.mulf %257, %261 : vector<8x32xf32>
    %c0_95 = arith.constant 0 : index
    %c0_96 = arith.constant 0 : index
    %263 = vector.load %arg21[%c0_95, %c0_96] : memref<1x32xf32, #tpu.memory_space<vmem>>, vector<1x32xf32>
    %264 = vector.broadcast %263 : vector<1x32xf32> to vector<8x32xf32>
    %265 = arith.mulf %262, %264 : vector<8x32xf32>
    %c0_97 = arith.constant 0 : index
    %c0_98 = arith.constant 0 : index
    %266 = vector.load %arg22[%c0_97, %c0_98] : memref<1x32xf32, #tpu.memory_space<vmem>>, vector<1x32xf32>
    %267 = vector.broadcast %266 : vector<1x32xf32> to vector<8x32xf32>
    %268 = arith.addf %265, %267 : vector<8x32xf32>
    %269 = vector.shape_cast %268 : vector<8x32xf32> to vector<1x8x32xf32>
    %c0_99 = arith.constant 0 : index
    %c0_100 = arith.constant 0 : index
    %c0_101 = arith.constant 0 : index
    %270 = vector.load %arg23[%c0_99, %c0_100, %c0_101] : memref<1x8x32xf32, #tpu.memory_space<vmem>>, vector<1x8x32xf32>
    tpu.vector_store %arg23[%c0_99, %c0_100, %c0_101], %269 {strides = array<i32>} : memref<1x8x32xf32, #tpu.memory_space<vmem>>, vector<1x8x32xf32>,
    return
  }
  func.func @transform_0(%arg0: i32) -> (i32, i32, i32) {
    %c0_i32 = arith.constant 0 : i32
    %c0_i32_0 = arith.constant 0 : i32
    %c0_i32_1 = arith.constant 0 : i32
    return %arg0, %c0_i32, %c0_i32_0 : i32, i32, i32
  }
  func.func @transform_1(%arg0: i32) -> (i32, i32, i32) {
    %c0_i32 = arith.constant 0 : i32
    %c0_i32_0 = arith.constant 0 : i32
    %c0_i32_1 = arith.constant 0 : i32
    return %arg0, %c0_i32, %c0_i32_0 : i32, i32, i32
  }
  func.func @transform_2(%arg0: i32) -> (i32, i32) {
    %c0_i32 = arith.constant 0 : i32
    %c0_i32_0 = arith.constant 0 : i32
    %c0_i32_1 = arith.constant 0 : i32
    return %c0_i32, %c0_i32_0 : i32, i32
  }
  func.func @transform_3(%arg0: i32) -> (i32, i32) {
    %c0_i32 = arith.constant 0 : i32
    %c0_i32_0 = arith.constant 0 : i32
    %c0_i32_1 = arith.constant 0 : i32
    return %c0_i32, %c0_i32_0 : i32, i32
  }
  func.func @transform_4(%arg0: i32) -> (i32, i32) {
    %c0_i32 = arith.constant 0 : i32
    %c0_i32_0 = arith.constant 0 : i32
    %c0_i32_1 = arith.constant 0 : i32
    return %c0_i32, %c0_i32_0 : i32, i32
  }
  func.func @transform_5(%arg0: i32) -> (i32, i32) {
    %c0_i32 = arith.constant 0 : i32
    %c0_i32_0 = arith.constant 0 : i32
    %c0_i32_1 = arith.constant 0 : i32
    return %c0_i32, %c0_i32_0 : i32, i32
  }
  func.func @transform_6(%arg0: i32) -> (i32, i32) {
    %c0_i32 = arith.constant 0 : i32
    %c0_i32_0 = arith.constant 0 : i32
    %c0_i32_1 = arith.constant 0 : i32
    return %c0_i32, %c0_i32_0 : i32, i32
  }
  func.func @transform_7(%arg0: i32) -> (i32, i32) {
    %c0_i32 = arith.constant 0 : i32
    %c0_i32_0 = arith.constant 0 : i32
    %c0_i32_1 = arith.constant 0 : i32
    return %c0_i32, %c0_i32_0 : i32, i32
  }
  func.func @transform_8(%arg0: i32) -> (i32, i32) {
    %c0_i32 = arith.constant 0 : i32
    %c0_i32_0 = arith.constant 0 : i32
    %c0_i32_1 = arith.constant 0 : i32
    return %c0_i32, %c0_i32_0 : i32, i32
  }
  func.func @transform_9(%arg0: i32) -> (i32, i32) {
    %c0_i32 = arith.constant 0 : i32
    %c0_i32_0 = arith.constant 0 : i32
    %c0_i32_1 = arith.constant 0 : i32
    return %c0_i32, %c0_i32_0 : i32, i32
  }
  func.func @transform_10(%arg0: i32) -> (i32, i32) {
    %c0_i32 = arith.constant 0 : i32
    %c0_i32_0 = arith.constant 0 : i32
    %c0_i32_1 = arith.constant 0 : i32
    return %c0_i32, %c0_i32_0 : i32, i32
  }
  func.func @transform_11(%arg0: i32) -> (i32, i32) {
    %c0_i32 = arith.constant 0 : i32
    %c0_i32_0 = arith.constant 0 : i32
    %c0_i32_1 = arith.constant 0 : i32
    return %c0_i32, %c0_i32_0 : i32, i32
  }
  func.func @transform_12(%arg0: i32) -> (i32, i32) {
    %c0_i32 = arith.constant 0 : i32
    %c0_i32_0 = arith.constant 0 : i32
    %c0_i32_1 = arith.constant 0 : i32
    return %c0_i32, %c0_i32_0 : i32, i32
  }
  func.func @transform_13(%arg0: i32) -> (i32, i32) {
    %c0_i32 = arith.constant 0 : i32
    %c0_i32_0 = arith.constant 0 : i32
    %c0_i32_1 = arith.constant 0 : i32
    return %c0_i32, %c0_i32_0 : i32, i32
  }
  func.func @transform_14(%arg0: i32) -> (i32, i32) {
    %c0_i32 = arith.constant 0 : i32
    %c0_i32_0 = arith.constant 0 : i32
    %c0_i32_1 = arith.constant 0 : i32
    return %c0_i32, %c0_i32_0 : i32, i32
  }
  func.func @transform_15(%arg0: i32) -> (i32, i32) {
    %c0_i32 = arith.constant 0 : i32
    %c0_i32_0 = arith.constant 0 : i32
    %c0_i32_1 = arith.constant 0 : i32
    return %c0_i32, %c0_i32_0 : i32, i32
  }
  func.func @transform_16(%arg0: i32) -> (i32, i32) {
    %c0_i32 = arith.constant 0 : i32
    %c0_i32_0 = arith.constant 0 : i32
    %c0_i32_1 = arith.constant 0 : i32
    return %c0_i32, %c0_i32_0 : i32, i32
  }
  func.func @transform_17(%arg0: i32) -> (i32, i32) {
    %c0_i32 = arith.constant 0 : i32
    %c0_i32_0 = arith.constant 0 : i32
    %c0_i32_1 = arith.constant 0 : i32
    return %c0_i32, %c0_i32_0 : i32, i32
  }
  func.func @transform_18(%arg0: i32) -> (i32, i32) {
    %c0_i32 = arith.constant 0 : i32
    %c0_i32_0 = arith.constant 0 : i32
    %c0_i32_1 = arith.constant 0 : i32
    return %c0_i32, %c0_i32_0 : i32, i32
  }
  func.func @transform_19(%arg0: i32) -> (i32, i32) {
    %c0_i32 = arith.constant 0 : i32
    %c0_i32_0 = arith.constant 0 : i32
    %c0_i32_1 = arith.constant 0 : i32
    return %c0_i32, %c0_i32_0 : i32, i32
  }
  func.func @transform_20(%arg0: i32) -> (i32, i32) {
    %c0_i32 = arith.constant 0 : i32
    %c0_i32_0 = arith.constant 0 : i32
    %c0_i32_1 = arith.constant 0 : i32
    return %c0_i32, %c0_i32_0 : i32, i32
  }
  func.func @transform_21(%arg0: i32) -> (i32, i32) {
    %c0_i32 = arith.constant 0 : i32
    %c0_i32_0 = arith.constant 0 : i32
    %c0_i32_1 = arith.constant 0 : i32
    return %c0_i32, %c0_i32_0 : i32, i32
  }
  func.func @transform_22(%arg0: i32) -> (i32, i32, i32) {
    %c0_i32 = arith.constant 0 : i32
    %c0_i32_0 = arith.constant 0 : i32
    %c0_i32_1 = arith.constant 0 : i32
    return %arg0, %c0_i32, %c0_i32_0 : i32, i32, i32
  }
}

</mosaic_0001>

<llo_original>
// kernel: tpu_custom_call.1
$region0: #{tpu_custom_call.1}
  #allocation0 [shape = 'u32[]', space=smem, size = 0x4, offset = 0x4, fixed_abs, tag = 'smem constant byte address 0x4 - core index']
  #allocation1 [shape = 'u32[144,128]{1,0:T(1,128)}', space=vmem, size = 0x12000, scoped, tag = 'internal scratch']
  %s0 = inlined_call_operand.vmem [shape: f32[2,8,32], index: 0, kind: input, shape index: {}]
  %s1 = inlined_call_operand.vmem [shape: f32[2,8,32], index: 1, kind: input, shape index: {}]
  %s2 = inlined_call_operand.vmem [shape: bf16[32,96], index: 2, kind: input, shape index: {}]
  %s3 = inlined_call_operand.vmem [shape: f32[1,96], index: 3, kind: input, shape index: {}]
  %s4 = inlined_call_operand.hbm [shape: bf16[32,32], index: 4, kind: input, shape index: {}]
  %s5 = inlined_call_operand.vmem [shape: f32[1,32], index: 5, kind: input, shape index: {}]
  %s6 = inlined_call_operand.hbm [shape: bf16[32,32], index: 6, kind: input, shape index: {}]
  %s7 = inlined_call_operand.hbm [shape: f32[1,32], index: 7, kind: input, shape index: {}]
  %s8 = inlined_call_operand.hbm [shape: bf16[32,64], index: 8, kind: input, shape index: {}]
  %s9 = inlined_call_operand.hbm [shape: f32[1,64], index: 9, kind: input, shape index: {}]
  %s10 = inlined_call_operand.vmem [shape: bf16[32,32], index: 10, kind: input, shape index: {}]
  %s11 = inlined_call_operand.vmem [shape: f32[1,32], index: 11, kind: input, shape index: {}]
  %s12 = inlined_call_operand.hbm [shape: bf16[32,64], index: 12, kind: input, shape index: {}]
  %s13 = inlined_call_operand.vmem [shape: f32[1,64], index: 13, kind: input, shape index: {}]
  %s14 = inlined_call_operand.vmem [shape: bf16[64,32], index: 14, kind: input, shape index: {}]
  %s15 = inlined_call_operand.vmem [shape: f32[1,32], index: 15, kind: input, shape index: {}]
  %s16 = inlined_call_operand.vmem [shape: f32[1,32], index: 16, kind: input, shape index: {}]
  %s17 = inlined_call_operand.vmem [shape: f32[1,32], index: 17, kind: input, shape index: {}]
  %s18 = inlined_call_operand.vmem [shape: f32[1,32], index: 18, kind: input, shape index: {}]
  %s19 = inlined_call_operand.vmem [shape: f32[1,32], index: 19, kind: input, shape index: {}]
  %s20 = inlined_call_operand.vmem [shape: f32[1,32], index: 20, kind: input, shape index: {}]
  %s21 = inlined_call_operand.vmem [shape: f32[1,32], index: 21, kind: input, shape index: {}]
  %s22 = inlined_call_operand.hbm [shape: f32[2,8,32], index: 22, kind: output, shape index: {}]
  %s23 = sld [smem:[#allocation0]]
  $region145: #{tpu_custom_call.1} parent=0
    _
  %s25 = ssub.s32 1, %s23
  %s26 = scalar_select 0, %s25, %s23
  $region1: #{tpu_custom_call.1} parent=0
    #allocation2 [shape = 'u8[8192]{0}', space=vmem, size = 0x2000, scoped, tag = 'input window, operand 4, single buffered']
    #allocation3 [shape = 's32[2]{0}', space=sflag, size = 0x8, scoped, tag = 'scoped memory for tpu_custom_call.1']
    #allocation4 [shape = 's32[2]{0}', space=sflag, size = 0x8, scoped, tag = 'scoped memory for tpu_custom_call.1']
    #allocation5 [shape = 'u8[8192]{0}', space=vmem, size = 0x2000, scoped, tag = 'input window, operand 6, single buffered']
    #allocation6 [shape = 's32[1]{0}', space=sflag, size = 0x4, scoped, tag = 'scoped memory for tpu_custom_call.1']
    #allocation7 [shape = 'u8[512]{0}', space=vmem, size = 0x400, scoped, tag = 'input window, operand 7, single buffered']
    #allocation8 [shape = 'u8[8192]{0}', space=vmem, size = 0x2000, scoped, tag = 'input window, operand 8, single buffered']
    #allocation9 [shape = 's32[1]{0}', space=sflag, size = 0x4, scoped, tag = 'scoped memory for tpu_custom_call.1']
    #allocation10 [shape = 'u8[512]{0}', space=vmem, size = 0x400, scoped, tag = 'input window, operand 9, single buffered']
    #allocation11 [shape = 'u8[8192]{0}', space=vmem, size = 0x2000, scoped, tag = 'input window, operand 12, single buffered']
    #allocation12 [shape = 's32[1]{0}', space=sflag, size = 0x4, scoped, tag = 'scoped memory for tpu_custom_call.1']
    #allocation13 [shape = 'u8[8192]{0}', space=vmem, size = 0x2000, scoped, tag = 'output window, operand 0']
    %27 = vsyncpa [#allocation3], 0
    %28 = vsyncpa [#allocation6], 0
    %29 = vsyncpa [#allocation9], 0
    %30 = vsyncpa [#allocation12], 0
    %31 = vsyncpa [#allocation4], 0
    %s32 = scalar_lea.sflag [#allocation4], 1
    %33 = vsyncpa %s32, 0
    loop: start=0, step=1, limit=4
    $region2: #{tpu_custom_call.1} parent=1 // loop_pre_header
      _
    $region3: #{tpu_custom_call.1} parent=1 // loop_header
      %s35 = sphi 0, %s39
      %p36 = scmp.ge.s32.totalorder %s35, 4
      %s45 = sphi 0, %s47
      %s48 = sphi 0, %s45
      %s49 = sphi 0, %s48
      %s65 = sphi 0, %s49
      %s71 = sphi 0, %s73
      %s74 = sphi 0, %s71
      %s75 = sphi 0, %s74
      %s91 = sphi 0, %s75
      %s95 = sphi 0, %s95
      %s97 = sphi 0, %s95
      %s98 = sphi 0, %s97
      %s112 = sphi 0, %s98
      %s116 = sphi 0, %s116
      %s118 = sphi 0, %s116
      %s119 = sphi 0, %s118
      %s133 = sphi 0, %s119
      %s137 = sphi 0, %s137
      %s139 = sphi 0, %s137
      %s140 = sphi 0, %s139
      %s154 = sphi 0, %s140
      %s158 = sphi 0, %s158
      %s160 = sphi 0, %s158
      %s161 = sphi 0, %s160
      %s175 = sphi 0, %s161
      %s179 = sphi 0, %s179
      %s181 = sphi 0, %s179
      %s182 = sphi 0, %s181
      %s196 = sphi 0, %s182
      %s200 = sphi 0, %s200
      %s202 = sphi 0, %s200
      %s203 = sphi 0, %s202
      %s217 = sphi 0, %s203
      %s221 = sphi 0, %s221
      %s223 = sphi 0, %s221
      %s224 = sphi 0, %s223
      %s238 = sphi 0, %s224
      %s242 = sphi 0, %s242
      %s244 = sphi 0, %s242
      %s245 = sphi 0, %s244
      %s259 = sphi 0, %s245
      %s263 = sphi 0, %s263
      %s265 = sphi 0, %s263
      %s266 = sphi 0, %s265
      %s280 = sphi 0, %s266
      %s284 = sphi 0, %s284
      %s286 = sphi 0, %s284
      %s287 = sphi 0, %s286
      %s301 = sphi 0, %s287
      %s305 = sphi 0, %s305
      %s307 = sphi 0, %s305
      %s308 = sphi 0, %s307
      %s322 = sphi 0, %s308
      %s326 = sphi 0, %s326
      %s328 = sphi 0, %s326
      %s329 = sphi 0, %s328
      %s343 = sphi 0, %s329
      %s347 = sphi 0, %s347
      %s349 = sphi 0, %s347
      %s350 = sphi 0, %s349
      %s364 = sphi 0, %s350
      %s368 = sphi 0, %s368
      %s370 = sphi 0, %s368
      %s371 = sphi 0, %s370
      %s385 = sphi 0, %s371
      %s389 = sphi 0, %s389
      %s391 = sphi 0, %s389
      %s392 = sphi 0, %s391
      %s406 = sphi 0, %s392
      %s410 = sphi 0, %s410
      %s412 = sphi 0, %s410
      %s413 = sphi 0, %s412
      %s427 = sphi 0, %s413
      %s431 = sphi 0, %s431
      %s433 = sphi 0, %s431
      %s434 = sphi 0, %s433
      %s448 = sphi 0, %s434
      %s452 = sphi 0, %s452
      %s454 = sphi 0, %s452
      %s455 = sphi 0, %s454
      %s469 = sphi 0, %s455
      %s473 = sphi 0, %s473
      %s475 = sphi 0, %s473
      %s476 = sphi 0, %s475
      %s490 = sphi 0, %s476
      %s494 = sphi 0, %s494
      %s496 = sphi 0, %s494
      %s497 = sphi 0, %s496
      %s511 = sphi 0, %s497
      %s517 = sphi 0, %s519
      %s520 = sphi 0, %s517
      %s521 = sphi 0, %s520
      %s537 = sphi 0, %s521
    $region4: #{tpu_custom_call.1} parent=1 // loop_header_branch
      %38 = sbr.rel (%p36) target = $region8
    $region5: #{tpu_custom_call.1} parent=1 // loop_body
      %s40 = ssub.s32 %s35, 1
      %s41 = ssub.s32 %s35, 2
      %s42 = sadd.s32 %s35, 1
      %s43 = ssub.s32 %s35, %s42
      %p44 = scmp.eq.s32.totalorder %s43, 0
      %s46 = sadd.s32 %s45, 1
      %s47 = scalar_select %p44, %s45, %s46
      %p50 = pneg %p44
      %p51 = scmp.eq.s32.totalorder %s35, 1
      %p52 = por %p50, %p51
      %p53 = scmp.ne.s32.totalorder %s45, %s48
      %p54 = scmp.eq.s32.totalorder %s35, 0
      %p55 = por %p53, %p54
      %p56 = scmp.ne.s32.totalorder %s45, %s48
      %p57 = scmp.eq.s32.totalorder %s40, 1
      %p58 = por %p56, %p57
      %p59 = scmp.ne.s32.totalorder %s48, %s49
      %p60 = scmp.eq.s32.totalorder %s40, 0
      %p61 = por %p59, %p60
      %p62 = scmp.ne.s32.totalorder %s48, %s49
      %p63 = scmp.eq.s32.totalorder %s41, 1
      %p64 = por %p62, %p63
      %p66 = scmp.ne.s32.totalorder %s49, %s65
      %p67 = scmp.eq.s32.totalorder %s41, 0
      %p68 = por %p66, %p67
      %s69 = ssub.s32 %s35, %s42
      %p70 = scmp.eq.s32.totalorder %s69, 0
      %s72 = sadd.s32 %s71, 1
      %s73 = scalar_select %p70, %s71, %s72
      %p76 = pneg %p70
      %p77 = scmp.eq.s32.totalorder %s35, 1
      %p78 = por %p76, %p77
      %p79 = scmp.ne.s32.totalorder %s71, %s74
      %p80 = scmp.eq.s32.totalorder %s35, 0
      %p81 = por %p79, %p80
      %p82 = scmp.ne.s32.totalorder %s71, %s74
      %p83 = scmp.eq.s32.totalorder %s40, 1
      %p84 = por %p82, %p83
      %p85 = scmp.ne.s32.totalorder %s74, %s75
      %p86 = scmp.eq.s32.totalorder %s40, 0
      %p87 = por %p85, %p86
      %p88 = scmp.ne.s32.totalorder %s74, %s75
      %p89 = scmp.eq.s32.totalorder %s41, 1
      %p90 = por %p88, %p89
      %p92 = scmp.ne.s32.totalorder %s75, %s91
      %p93 = scmp.eq.s32.totalorder %s41, 0
      %p94 = por %p92, %p93
      %s96 = sadd.s32 %s95, 1
      %p99 = scmp.eq.s32.totalorder %s35, 1
      %p100 = scmp.ne.s32.totalorder %s95, %s97
      %p101 = scmp.eq.s32.totalorder %s35, 0
      %p102 = por %p100, %p101
      %p103 = scmp.ne.s32.totalorder %s95, %s97
      %p104 = scmp.eq.s32.totalorder %s40, 1
      %p105 = por %p103, %p104
      %p106 = scmp.ne.s32.totalorder %s97, %s98
      %p107 = scmp.eq.s32.totalorder %s40, 0
      %p108 = por %p106, %p107
      %p109 = scmp.ne.s32.totalorder %s97, %s98
      %p110 = scmp.eq.s32.totalorder %s41, 1
      %p111 = por %p109, %p110
      %p113 = scmp.ne.s32.totalorder %s98, %s112
      %p114 = scmp.eq.s32.totalorder %s41, 0
      %p115 = por %p113, %p114
      %s117 = sadd.s32 %s116, 1
      %p120 = scmp.eq.s32.totalorder %s35, 1
      %p121 = scmp.ne.s32.totalorder %s116, %s118
      %p122 = scmp.eq.s32.totalorder %s35, 0
      %p123 = por %p121, %p122
      %p124 = scmp.ne.s32.totalorder %s116, %s118
      %p125 = scmp.eq.s32.totalorder %s40, 1
      %p126 = por %p124, %p125
      %p127 = scmp.ne.s32.totalorder %s118, %s119
      %p128 = scmp.eq.s32.totalorder %s40, 0
      %p129 = por %p127, %p128
      %p130 = scmp.ne.s32.totalorder %s118, %s119
      %p131 = scmp.eq.s32.totalorder %s41, 1
      %p132 = por %p130, %p131
      %p134 = scmp.ne.s32.totalorder %s119, %s133
      %p135 = scmp.eq.s32.totalorder %s41, 0
      %p136 = por %p134, %p135
      %s138 = sadd.s32 %s137, 1
      %p141 = scmp.eq.s32.totalorder %s35, 1
      %p142 = scmp.ne.s32.totalorder %s137, %s139
      %p143 = scmp.eq.s32.totalorder %s35, 0
      %p144 = por %p142, %p143
      %p145 = scmp.ne.s32.totalorder %s137, %s139
      %p146 = scmp.eq.s32.totalorder %s40, 1
      %p147 = por %p145, %p146
      %p148 = scmp.ne.s32.totalorder %s139, %s140
      %p149 = scmp.eq.s32.totalorder %s40, 0
      %p150 = por %p148, %p149
      %p151 = scmp.ne.s32.totalorder %s139, %s140
      %p152 = scmp.eq.s32.totalorder %s41, 1
      %p153 = por %p151, %p152
      %p155 = scmp.ne.s32.totalorder %s140, %s154
      %p156 = scmp.eq.s32.totalorder %s41, 0
      %p157 = por %p155, %p156
      %s159 = sadd.s32 %s158, 1
      %p162 = scmp.eq.s32.totalorder %s35, 1
      %p163 = scmp.ne.s32.totalorder %s158, %s160
      %p164 = scmp.eq.s32.totalorder %s35, 0
      %p165 = por %p163, %p164
      %p166 = scmp.ne.s32.totalorder %s158, %s160
      %p167 = scmp.eq.s32.totalorder %s40, 1
      %p168 = por %p166, %p167
      %p169 = scmp.ne.s32.totalorder %s160, %s161
      %p170 = scmp.eq.s32.totalorder %s40, 0
      %p171 = por %p169, %p170
      %p172 = scmp.ne.s32.totalorder %s160, %s161
      %p173 = scmp.eq.s32.totalorder %s41, 1
      %p174 = por %p172, %p173
      %p176 = scmp.ne.s32.totalorder %s161, %s175
      %p177 = scmp.eq.s32.totalorder %s41, 0
      %p178 = por %p176, %p177
      %s180 = sadd.s32 %s179, 1
      %p183 = scmp.eq.s32.totalorder %s35, 1
      %p184 = scmp.ne.s32.totalorder %s179, %s181
      %p185 = scmp.eq.s32.totalorder %s35, 0
      %p186 = por %p184, %p185
      %p187 = scmp.ne.s32.totalorder %s179, %s181
      %p188 = scmp.eq.s32.totalorder %s40, 1
      %p189 = por %p187, %p188
      %p190 = scmp.ne.s32.totalorder %s181, %s182
      %p191 = scmp.eq.s32.totalorder %s40, 0
      %p192 = por %p190, %p191
      %p193 = scmp.ne.s32.totalorder %s181, %s182
      %p194 = scmp.eq.s32.totalorder %s41, 1
      %p195 = por %p193, %p194
      %p197 = scmp.ne.s32.totalorder %s182, %s196
      %p198 = scmp.eq.s32.totalorder %s41, 0
      %p199 = por %p197, %p198
      %s201 = sadd.s32 %s200, 1
      %p204 = scmp.eq.s32.totalorder %s35, 1
      %p205 = scmp.ne.s32.totalorder %s200, %s202
      %p206 = scmp.eq.s32.totalorder %s35, 0
      %p207 = por %p205, %p206
      %p208 = scmp.ne.s32.totalorder %s200, %s202
      %p209 = scmp.eq.s32.totalorder %s40, 1
      %p210 = por %p208, %p209
      %p211 = scmp.ne.s32.totalorder %s202, %s203
      %p212 = scmp.eq.s32.totalorder %s40, 0
      %p213 = por %p211, %p212
      %p214 = scmp.ne.s32.totalorder %s202, %s203
      %p215 = scmp.eq.s32.totalorder %s41, 1
      %p216 = por %p214, %p215
      %p218 = scmp.ne.s32.totalorder %s203, %s217
      %p219 = scmp.eq.s32.totalorder %s41, 0
      %p220 = por %p218, %p219
      %s222 = sadd.s32 %s221, 1
      %p225 = scmp.eq.s32.totalorder %s35, 1
      %p226 = scmp.ne.s32.totalorder %s221, %s223
      %p227 = scmp.eq.s32.totalorder %s35, 0
      %p228 = por %p226, %p227
      %p229 = scmp.ne.s32.totalorder %s221, %s223
      %p230 = scmp.eq.s32.totalorder %s40, 1
      %p231 = por %p229, %p230
      %p232 = scmp.ne.s32.totalorder %s223, %s224
      %p233 = scmp.eq.s32.totalorder %s40, 0
      %p234 = por %p232, %p233
      %p235 = scmp.ne.s32.totalorder %s223, %s224
      %p236 = scmp.eq.s32.totalorder %s41, 1
      %p237 = por %p235, %p236
      %p239 = scmp.ne.s32.totalorder %s224, %s238
      %p240 = scmp.eq.s32.totalorder %s41, 0
      %p241 = por %p239, %p240
      %s243 = sadd.s32 %s242, 1
      %p246 = scmp.eq.s32.totalorder %s35, 1
      %p247 = scmp.ne.s32.totalorder %s242, %s244
      %p248 = scmp.eq.s32.totalorder %s35, 0
      %p249 = por %p247, %p248
      %p250 = scmp.ne.s32.totalorder %s242, %s244
      %p251 = scmp.eq.s32.totalorder %s40, 1
      %p252 = por %p250, %p251
      %p253 = scmp.ne.s32.totalorder %s244, %s245
      %p254 = scmp.eq.s32.totalorder %s40, 0
      %p255 = por %p253, %p254
      %p256 = scmp.ne.s32.totalorder %s244, %s245
      %p257 = scmp.eq.s32.totalorder %s41, 1
      %p258 = por %p256, %p257
      %p260 = scmp.ne.s32.totalorder %s245, %s259
      %p261 = scmp.eq.s32.totalorder %s41, 0
      %p262 = por %p260, %p261
      %s264 = sadd.s32 %s263, 1
      %p267 = scmp.eq.s32.totalorder %s35, 1
      %p268 = scmp.ne.s32.totalorder %s263, %s265
      %p269 = scmp.eq.s32.totalorder %s35, 0
      %p270 = por %p268, %p269
      %p271 = scmp.ne.s32.totalorder %s263, %s265
      %p272 = scmp.eq.s32.totalorder %s40, 1
      %p273 = por %p271, %p272
      %p274 = scmp.ne.s32.totalorder %s265, %s266
      %p275 = scmp.eq.s32.totalorder %s40, 0
      %p276 = por %p274, %p275
      %p277 = scmp.ne.s32.totalorder %s265, %s266
      %p278 = scmp.eq.s32.totalorder %s41, 1
      %p279 = por %p277, %p278
      %p281 = scmp.ne.s32.totalorder %s266, %s280
      %p282 = scmp.eq.s32.totalorder %s41, 0
      %p283 = por %p281, %p282
      %s285 = sadd.s32 %s284, 1
      %p288 = scmp.eq.s32.totalorder %s35, 1
      %p289 = scmp.ne.s32.totalorder %s284, %s286
      %p290 = scmp.eq.s32.totalorder %s35, 0
      %p291 = por %p289, %p290
      %p292 = scmp.ne.s32.totalorder %s284, %s286
      %p293 = scmp.eq.s32.totalorder %s40, 1
      %p294 = por %p292, %p293
      %p295 = scmp.ne.s32.totalorder %s286, %s287
      %p296 = scmp.eq.s32.totalorder %s40, 0
      %p297 = por %p295, %p296
      %p298 = scmp.ne.s32.totalorder %s286, %s287
      %p299 = scmp.eq.s32.totalorder %s41, 1
      %p300 = por %p298, %p299
      %p302 = scmp.ne.s32.totalorder %s287, %s301
      %p303 = scmp.eq.s32.totalorder %s41, 0
      %p304 = por %p302, %p303
      %s306 = sadd.s32 %s305, 1
      %p309 = scmp.eq.s32.totalorder %s35, 1
      %p310 = scmp.ne.s32.totalorder %s305, %s307
      %p311 = scmp.eq.s32.totalorder %s35, 0
      %p312 = por %p310, %p311
      %p313 = scmp.ne.s32.totalorder %s305, %s307
      %p314 = scmp.eq.s32.totalorder %s40, 1
      %p315 = por %p313, %p314
      %p316 = scmp.ne.s32.totalorder %s307, %s308
      %p317 = scmp.eq.s32.totalorder %s40, 0
      %p318 = por %p316, %p317
      %p319 = scmp.ne.s32.totalorder %s307, %s308
      %p320 = scmp.eq.s32.totalorder %s41, 1
      %p321 = por %p319, %p320
      %p323 = scmp.ne.s32.totalorder %s308, %s322
      %p324 = scmp.eq.s32.totalorder %s41, 0
      %p325 = por %p323, %p324
      %s327 = sadd.s32 %s326, 1
      %p330 = scmp.eq.s32.totalorder %s35, 1
      %p331 = scmp.ne.s32.totalorder %s326, %s328
      %p332 = scmp.eq.s32.totalorder %s35, 0
      %p333 = por %p331, %p332
      %p334 = scmp.ne.s32.totalorder %s326, %s328
      %p335 = scmp.eq.s32.totalorder %s40, 1
      %p336 = por %p334, %p335
      %p337 = scmp.ne.s32.totalorder %s328, %s329
      %p338 = scmp.eq.s32.totalorder %s40, 0
      %p339 = por %p337, %p338
      %p340 = scmp.ne.s32.totalorder %s328, %s329
      %p341 = scmp.eq.s32.totalorder %s41, 1
      %p342 = por %p340, %p341
      %p344 = scmp.ne.s32.totalorder %s329, %s343
      %p345 = scmp.eq.s32.totalorder %s41, 0
      %p346 = por %p344, %p345
      %s348 = sadd.s32 %s347, 1
      %p351 = scmp.eq.s32.totalorder %s35, 1
      %p352 = scmp.ne.s32.totalorder %s347, %s349
      %p353 = scmp.eq.s32.totalorder %s35, 0
      %p354 = por %p352, %p353
      %p355 = scmp.ne.s32.totalorder %s347, %s349
      %p356 = scmp.eq.s32.totalorder %s40, 1
      %p357 = por %p355, %p356
      %p358 = scmp.ne.s32.totalorder %s349, %s350
      %p359 = scmp.eq.s32.totalorder %s40, 0
      %p360 = por %p358, %p359
      %p361 = scmp.ne.s32.totalorder %s349, %s350
      %p362 = scmp.eq.s32.totalorder %s41, 1
      %p363 = por %p361, %p362
      %p365 = scmp.ne.s32.totalorder %s350, %s364
      %p366 = scmp.eq.s32.totalorder %s41, 0
      %p367 = por %p365, %p366
      %s369 = sadd.s32 %s368, 1
      %p372 = scmp.eq.s32.totalorder %s35, 1
      %p373 = scmp.ne.s32.totalorder %s368, %s370
      %p374 = scmp.eq.s32.totalorder %s35, 0
      %p375 = por %p373, %p374
      %p376 = scmp.ne.s32.totalorder %s368, %s370
      %p377 = scmp.eq.s32.totalorder %s40, 1
      %p378 = por %p376, %p377
      %p379 = scmp.ne.s32.totalorder %s370, %s371
      %p380 = scmp.eq.s32.totalorder %s40, 0
      %p381 = por %p379, %p380
      %p382 = scmp.ne.s32.totalorder %s370, %s371
      %p383 = scmp.eq.s32.totalorder %s41, 1
      %p384 = por %p382, %p383
      %p386 = scmp.ne.s32.totalorder %s371, %s385
      %p387 = scmp.eq.s32.totalorder %s41, 0
      %p388 = por %p386, %p387
      %s390 = sadd.s32 %s389, 1
      %p393 = scmp.eq.s32.totalorder %s35, 1
      %p394 = scmp.ne.s32.totalorder %s389, %s391
      %p395 = scmp.eq.s32.totalorder %s35, 0
      %p396 = por %p394, %p395
      %p397 = scmp.ne.s32.totalorder %s389, %s391
      %p398 = scmp.eq.s32.totalorder %s40, 1
      %p399 = por %p397, %p398
      %p400 = scmp.ne.s32.totalorder %s391, %s392
      %p401 = scmp.eq.s32.totalorder %s40, 0
      %p402 = por %p400, %p401
      %p403 = scmp.ne.s32.totalorder %s391, %s392
      %p404 = scmp.eq.s32.totalorder %s41, 1
      %p405 = por %p403, %p404
      %p407 = scmp.ne.s32.totalorder %s392, %s406
      %p408 = scmp.eq.s32.totalorder %s41, 0
      %p409 = por %p407, %p408
      %s411 = sadd.s32 %s410, 1
      %p414 = scmp.eq.s32.totalorder %s35, 1
      %p415 = scmp.ne.s32.totalorder %s410, %s412
      %p416 = scmp.eq.s32.totalorder %s35, 0
      %p417 = por %p415, %p416
      %p418 = scmp.ne.s32.totalorder %s410, %s412
      %p419 = scmp.eq.s32.totalorder %s40, 1
      %p420 = por %p418, %p419
      %p421 = scmp.ne.s32.totalorder %s412, %s413
      %p422 = scmp.eq.s32.totalorder %s40, 0
      %p423 = por %p421, %p422
      %p424 = scmp.ne.s32.totalorder %s412, %s413
      %p425 = scmp.eq.s32.totalorder %s41, 1
      %p426 = por %p424, %p425
      %p428 = scmp.ne.s32.totalorder %s413, %s427
      %p429 = scmp.eq.s32.totalorder %s41, 0
      %p430 = por %p428, %p429
      %s432 = sadd.s32 %s431, 1
      %p435 = scmp.eq.s32.totalorder %s35, 1
      %p436 = scmp.ne.s32.totalorder %s431, %s433
      %p437 = scmp.eq.s32.totalorder %s35, 0
      %p438 = por %p436, %p437
      %p439 = scmp.ne.s32.totalorder %s431, %s433
      %p440 = scmp.eq.s32.totalorder %s40, 1
      %p441 = por %p439, %p440
      %p442 = scmp.ne.s32.totalorder %s433, %s434
      %p443 = scmp.eq.s32.totalorder %s40, 0
      %p444 = por %p442, %p443
      %p445 = scmp.ne.s32.totalorder %s433, %s434
      %p446 = scmp.eq.s32.totalorder %s41, 1
      %p447 = por %p445, %p446
      %p449 = scmp.ne.s32.totalorder %s434, %s448
      %p450 = scmp.eq.s32.totalorder %s41, 0
      %p451 = por %p449, %p450
      %s453 = sadd.s32 %s452, 1
      %p456 = scmp.eq.s32.totalorder %s35, 1
      %p457 = scmp.ne.s32.totalorder %s452, %s454
      %p458 = scmp.eq.s32.totalorder %s35, 0
      %p459 = por %p457, %p458
      %p460 = scmp.ne.s32.totalorder %s452, %s454
      %p461 = scmp.eq.s32.totalorder %s40, 1
      %p462 = por %p460, %p461
      %p463 = scmp.ne.s32.totalorder %s454, %s455
      %p464 = scmp.eq.s32.totalorder %s40, 0
      %p465 = por %p463, %p464
      %p466 = scmp.ne.s32.totalorder %s454, %s455
      %p467 = scmp.eq.s32.totalorder %s41, 1
      %p468 = por %p466, %p467
      %p470 = scmp.ne.s32.totalorder %s455, %s469
      %p471 = scmp.eq.s32.totalorder %s41, 0
      %p472 = por %p470, %p471
      %s474 = sadd.s32 %s473, 1
      %p477 = scmp.eq.s32.totalorder %s35, 1
      %p478 = scmp.ne.s32.totalorder %s473, %s475
      %p479 = scmp.eq.s32.totalorder %s35, 0
      %p480 = por %p478, %p479
      %p481 = scmp.ne.s32.totalorder %s473, %s475
      %p482 = scmp.eq.s32.totalorder %s40, 1
      %p483 = por %p481, %p482
      %p484 = scmp.ne.s32.totalorder %s475, %s476
      %p485 = scmp.eq.s32.totalorder %s40, 0
      %p486 = por %p484, %p485
      %p487 = scmp.ne.s32.totalorder %s475, %s476
      %p488 = scmp.eq.s32.totalorder %s41, 1
      %p489 = por %p487, %p488
      %p491 = scmp.ne.s32.totalorder %s476, %s490
      %p492 = scmp.eq.s32.totalorder %s41, 0
      %p493 = por %p491, %p492
      %s495 = sadd.s32 %s494, 1
      %p498 = scmp.eq.s32.totalorder %s35, 1
      %p499 = scmp.ne.s32.totalorder %s494, %s496
      %p500 = scmp.eq.s32.totalorder %s35, 0
      %p501 = por %p499, %p500
      %p502 = scmp.ne.s32.totalorder %s494, %s496
      %p503 = scmp.eq.s32.totalorder %s40, 1
      %p504 = por %p502, %p503
      %p505 = scmp.ne.s32.totalorder %s496, %s497
      %p506 = scmp.eq.s32.totalorder %s40, 0
      %p507 = por %p505, %p506
      %p508 = scmp.ne.s32.totalorder %s496, %s497
      %p509 = scmp.eq.s32.totalorder %s41, 1
      %p510 = por %p508, %p509
      %p512 = scmp.ne.s32.totalorder %s497, %s511
      %p513 = scmp.eq.s32.totalorder %s41, 0
      %p514 = por %p512, %p513
      %s515 = ssub.s32 %s35, %s42
      %p516 = scmp.eq.s32.totalorder %s515, 0
      %s518 = sadd.s32 %s517, 1
      %s519 = scalar_select %p516, %s517, %s518
      %p522 = pneg %p516
      %p523 = scmp.eq.s32.totalorder %s35, 1
      %p524 = por %p522, %p523
      %p525 = scmp.ne.s32.totalorder %s517, %s520
      %p526 = scmp.eq.s32.totalorder %s35, 0
      %p527 = por %p525, %p526
      %p528 = scmp.ne.s32.totalorder %s517, %s520
      %p529 = scmp.eq.s32.totalorder %s40, 1
      %p530 = por %p528, %p529
      %p531 = scmp.ne.s32.totalorder %s520, %s521
      %p532 = scmp.eq.s32.totalorder %s40, 0
      %p533 = por %p531, %p532
      %p534 = scmp.ne.s32.totalorder %s520, %s521
      %p535 = scmp.eq.s32.totalorder %s41, 1
      %p536 = por %p534, %p535
      %p538 = scmp.ne.s32.totalorder %s521, %s537
      %p539 = scmp.eq.s32.totalorder %s41, 0
      %p540 = por %p538, %p539
      %p541 = scmp.le.s32.totalorder 1, %s35
      %p542 = scmp.lt.s32.totalorder %s35, 3
      %p543 = pnand %p541, %p542
      %p544 = pneg %p543
      // Predicated region
      $region9: #{tpu_custom_call.1} parent=5 // pred_check
        _
      $region10: #{tpu_custom_call.1} parent=5 // pred_check_branch
        %546 = sbr.rel (%p543) target = $region12
      $region11: #{tpu_custom_call.1} parent=5 // pred_region
        %s547 = ssub.s32 %s35, 1
        // Predicated region
        $region13: #{tpu_custom_call.1} parent=11 // pred_check
          %p548 = pneg %p108
        $region14: #{tpu_custom_call.1} parent=11 // pred_check_branch
          %550 = sbr.rel (%p548) target = $region16
        $region15: #{tpu_custom_call.1} parent=11 // pred_region
          _
        $region16: #{tpu_custom_call.1} parent=11 // pred_fallthru
          _
        // Predicated region
        $region17: #{tpu_custom_call.1} parent=11 // pred_check
          %p551 = pneg %p129
        $region18: #{tpu_custom_call.1} parent=11 // pred_check_branch
          %553 = sbr.rel (%p551) target = $region20
        $region19: #{tpu_custom_call.1} parent=11 // pred_region
          _
        $region20: #{tpu_custom_call.1} parent=11 // pred_fallthru
          _
        // Predicated region
        $region21: #{tpu_custom_call.1} parent=11 // pred_check
          %p554 = pneg %p150
        $region22: #{tpu_custom_call.1} parent=11 // pred_check_branch
          %556 = sbr.rel (%p554) target = $region24
        $region23: #{tpu_custom_call.1} parent=11 // pred_region
          %s558 = ssub.s32 256, 256
          %559 = vsyncadd [#allocation3], %s558
          %s560 = sshll.u32 [#allocation2], 4
          %s561 = int_to_ptr.vmem [resolvable:$true] %s560
          %566 = dma.hbm_to_vmem [thread:$0]  %s4, 256, %s561, [#allocation3], 64, 64, 4
        $region24: #{tpu_custom_call.1} parent=11 // pred_fallthru
          _
        // Predicated region
        $region25: #{tpu_custom_call.1} parent=11 // pred_check
          %p567 = pneg %p171
        $region26: #{tpu_custom_call.1} parent=11 // pred_check_branch
          %569 = sbr.rel (%p567) target = $region28
        $region27: #{tpu_custom_call.1} parent=11 // pred_region
          _
        $region28: #{tpu_custom_call.1} parent=11 // pred_fallthru
          _
        // Predicated region
        $region29: #{tpu_custom_call.1} parent=11 // pred_check
          %p570 = pneg %p192
        $region30: #{tpu_custom_call.1} parent=11 // pred_check_branch
          %572 = sbr.rel (%p570) target = $region32
        $region31: #{tpu_custom_call.1} parent=11 // pred_region
          %s574 = ssub.s32 256, 256
          %575 = vsyncadd [#allocation6], %s574
          %s576 = sshll.u32 [#allocation5], 4
          %s577 = int_to_ptr.vmem [resolvable:$true] %s576
          %582 = dma.hbm_to_vmem [thread:$0]  %s6, 256, %s577, [#allocation6], 64, 64, 4
        $region32: #{tpu_custom_call.1} parent=11 // pred_fallthru
          _
        // Predicated region
        $region33: #{tpu_custom_call.1} parent=11 // pred_check
          %p583 = pneg %p213
        $region34: #{tpu_custom_call.1} parent=11 // pred_check_branch
          %585 = sbr.rel (%p583) target = $region36
        $region35: #{tpu_custom_call.1} parent=11 // pred_region
          %s587 = ssub.s32 16, 16
          %588 = vsyncadd [#allocation6], %s587
          %s590 = sshll.u32 [#allocation7], 4
          %s591 = int_to_ptr.vmem [resolvable:$true] %s590
          %593 = dma.hbm_to_vmem [thread:$0]  %s7, 16, %s591, [#allocation6]
        $region36: #{tpu_custom_call.1} parent=11 // pred_fallthru
          _
        // Predicated region
        $region37: #{tpu_custom_call.1} parent=11 // pred_check
          %p594 = pneg %p234
        $region38: #{tpu_custom_call.1} parent=11 // pred_check_branch
          %596 = sbr.rel (%p594) target = $region40
        $region39: #{tpu_custom_call.1} parent=11 // pred_region
          %s598 = ssub.s32 256, 256
          %599 = vsyncadd [#allocation9], %s598
          %s600 = sshll.u32 [#allocation8], 4
          %s601 = int_to_ptr.vmem [resolvable:$true] %s600
          %606 = dma.hbm_to_vmem [thread:$0]  %s8, 256, %s601, [#allocation9], 64, 64, 4
        $region40: #{tpu_custom_call.1} parent=11 // pred_fallthru
          _
        // Predicated region
        $region41: #{tpu_custom_call.1} parent=11 // pred_check
          %p607 = pneg %p255
        $region42: #{tpu_custom_call.1} parent=11 // pred_check_branch
          %609 = sbr.rel (%p607) target = $region44
        $region43: #{tpu_custom_call.1} parent=11 // pred_region
          %s611 = ssub.s32 16, 16
          %612 = vsyncadd [#allocation9], %s611
          %s614 = sshll.u32 [#allocation10], 4
          %s615 = int_to_ptr.vmem [resolvable:$true] %s614
          %617 = dma.hbm_to_vmem [thread:$0]  %s9, 16, %s615, [#allocation9]
        $region44: #{tpu_custom_call.1} parent=11 // pred_fallthru
          _
        // Predicated region
        $region45: #{tpu_custom_call.1} parent=11 // pred_check
          %p618 = pneg %p276
        $region46: #{tpu_custom_call.1} parent=11 // pred_check_branch
          %620 = sbr.rel (%p618) target = $region48
        $region47: #{tpu_custom_call.1} parent=11 // pred_region
          _
        $region48: #{tpu_custom_call.1} parent=11 // pred_fallthru
          _
        // Predicated region
        $region49: #{tpu_custom_call.1} parent=11 // pred_check
          %p621 = pneg %p297
        $region50: #{tpu_custom_call.1} parent=11 // pred_check_branch
          %623 = sbr.rel (%p621) target = $region52
        $region51: #{tpu_custom_call.1} parent=11 // pred_region
          _
        $region52: #{tpu_custom_call.1} parent=11 // pred_fallthru
          _
        // Predicated region
        $region53: #{tpu_custom_call.1} parent=11 // pred_check
          %p624 = pneg %p318
        $region54: #{tpu_custom_call.1} parent=11 // pred_check_branch
          %626 = sbr.rel (%p624) target = $region56
        $region55: #{tpu_custom_call.1} parent=11 // pred_region
          %s628 = ssub.s32 256, 256
          %629 = vsyncadd [#allocation12], %s628
          %s630 = sshll.u32 [#allocation11], 4
          %s631 = int_to_ptr.vmem [resolvable:$true] %s630
          %636 = dma.hbm_to_vmem [thread:$0]  %s12, 256, %s631, [#allocation12], 64, 64, 4
        $region56: #{tpu_custom_call.1} parent=11 // pred_fallthru
          _
        // Predicated region
        $region57: #{tpu_custom_call.1} parent=11 // pred_check
          %p637 = pneg %p339
        $region58: #{tpu_custom_call.1} parent=11 // pred_check_branch
          %639 = sbr.rel (%p637) target = $region60
        $region59: #{tpu_custom_call.1} parent=11 // pred_region
          _
        $region60: #{tpu_custom_call.1} parent=11 // pred_fallthru
          _
        // Predicated region
        $region61: #{tpu_custom_call.1} parent=11 // pred_check
          %p640 = pneg %p360
        $region62: #{tpu_custom_call.1} parent=11 // pred_check_branch
          %642 = sbr.rel (%p640) target = $region64
        $region63: #{tpu_custom_call.1} parent=11 // pred_region
          _
        $region64: #{tpu_custom_call.1} parent=11 // pred_fallthru
          _
        // Predicated region
        $region65: #{tpu_custom_call.1} parent=11 // pred_check
          %p643 = pneg %p381
        $region66: #{tpu_custom_call.1} parent=11 // pred_check_branch
          %645 = sbr.rel (%p643) target = $region68
        $region67: #{tpu_custom_call.1} parent=11 // pred_region
          _
        $region68: #{tpu_custom_call.1} parent=11 // pred_fallthru
          _
        // Predicated region
        $region69: #{tpu_custom_call.1} parent=11 // pred_check
          %p646 = pneg %p402
        $region70: #{tpu_custom_call.1} parent=11 // pred_check_branch
          %648 = sbr.rel (%p646) target = $region72
        $region71: #{tpu_custom_call.1} parent=11 // pred_region
          _
        $region72: #{tpu_custom_call.1} parent=11 // pred_fallthru
          _
        // Predicated region
        $region73: #{tpu_custom_call.1} parent=11 // pred_check
          %p649 = pneg %p423
        $region74: #{tpu_custom_call.1} parent=11 // pred_check_branch
          %651 = sbr.rel (%p649) target = $region76
        $region75: #{tpu_custom_call.1} parent=11 // pred_region
          _
        $region76: #{tpu_custom_call.1} parent=11 // pred_fallthru
          _
        // Predicated region
        $region77: #{tpu_custom_call.1} parent=11 // pred_check
          %p652 = pneg %p444
        $region78: #{tpu_custom_call.1} parent=11 // pred_check_branch
          %654 = sbr.rel (%p652) target = $region80
        $region79: #{tpu_custom_call.1} parent=11 // pred_region
          _
        $region80: #{tpu_custom_call.1} parent=11 // pred_fallthru
          _
        // Predicated region
        $region81: #{tpu_custom_call.1} parent=11 // pred_check
          %p655 = pneg %p465
        $region82: #{tpu_custom_call.1} parent=11 // pred_check_branch
          %657 = sbr.rel (%p655) target = $region84
        $region83: #{tpu_custom_call.1} parent=11 // pred_region
          _
        $region84: #{tpu_custom_call.1} parent=11 // pred_fallthru
          _
        // Predicated region
        $region85: #{tpu_custom_call.1} parent=11 // pred_check
          %p658 = pneg %p486
        $region86: #{tpu_custom_call.1} parent=11 // pred_check_branch
          %660 = sbr.rel (%p658) target = $region88
        $region87: #{tpu_custom_call.1} parent=11 // pred_region
          _
        $region88: #{tpu_custom_call.1} parent=11 // pred_fallthru
          _
        // Predicated region
        $region89: #{tpu_custom_call.1} parent=11 // pred_check
          %p661 = pneg %p507
        $region90: #{tpu_custom_call.1} parent=11 // pred_check_branch
          %663 = sbr.rel (%p661) target = $region92
        $region91: #{tpu_custom_call.1} parent=11 // pred_region
          _
        $region92: #{tpu_custom_call.1} parent=11 // pred_fallthru
          _
      $region12: #{tpu_custom_call.1} parent=5 // pred_fallthru
        _
      %p664 = scmp.lt.s32.totalorder %s35, 2
      // Predicated region
      $region93: #{tpu_custom_call.1} parent=5 // pred_check
        %p665 = pneg %p664
      $region94: #{tpu_custom_call.1} parent=5 // pred_check_branch
        %667 = sbr.rel (%p665) target = $region96
      $region95: #{tpu_custom_call.1} parent=5 // pred_region
        // Predicated region
        $region97: #{tpu_custom_call.1} parent=95 // pred_check
          %p668 = pneg %p55
        $region98: #{tpu_custom_call.1} parent=95 // pred_check_branch
          %670 = sbr.rel (%p668) target = $region100
        $region99: #{tpu_custom_call.1} parent=95 // pred_region
          %p671 = scmp.lt.s32.totalorder %s35, 1
          %s672 = scalar_select %p671, %s35, 1
          %s673 = smul.addr %s672, 8
          %s674 = scalar_lea.vmem %s0, %s673
        $region100: #{tpu_custom_call.1} parent=95 // pred_fallthru
          _
        // Predicated region
        $region101: #{tpu_custom_call.1} parent=95 // pred_check
          %p675 = pneg %p81
        $region102: #{tpu_custom_call.1} parent=95 // pred_check_branch
          %677 = sbr.rel (%p675) target = $region104
        $region103: #{tpu_custom_call.1} parent=95 // pred_region
          %p678 = scmp.lt.s32.totalorder %s35, 1
          %s679 = scalar_select %p678, %s35, 1
          %s680 = smul.addr %s679, 8
          %s681 = scalar_lea.vmem %s1, %s680
        $region104: #{tpu_custom_call.1} parent=95 // pred_fallthru
          _
      $region96: #{tpu_custom_call.1} parent=5 // pred_fallthru
        _
      %p682 = scmp.le.s32.totalorder 1, %s35
      %p683 = scmp.lt.s32.totalorder %s35, 3
      %p684 = pnand %p682, %p683
      %p685 = pneg %p684
      // Predicated region
      $region105: #{tpu_custom_call.1} parent=5 // pred_check
        _
      $region106: #{tpu_custom_call.1} parent=5 // pred_check_branch
        %687 = sbr.rel (%p684) target = $region108
      $region107: #{tpu_custom_call.1} parent=5 // pred_region
        %s688 = ssub.s32 %s35, 1
        // Predicated region
        $region109: #{tpu_custom_call.1} parent=107 // pred_check
          %p689 = pneg %p150
        $region110: #{tpu_custom_call.1} parent=107 // pred_check_branch
          %691 = sbr.rel (%p689) target = $region112
        $region111: #{tpu_custom_call.1} parent=107 // pred_region
          %692 = dma.done [#allocation3], 256
        $region112: #{tpu_custom_call.1} parent=107 // pred_fallthru
          _
        // Predicated region
        $region113: #{tpu_custom_call.1} parent=107 // pred_check
          %p693 = pneg %p192
        $region114: #{tpu_custom_call.1} parent=107 // pred_check_branch
          %695 = sbr.rel (%p693) target = $region116
        $region115: #{tpu_custom_call.1} parent=107 // pred_region
          %696 = dma.done [#allocation6], 256
        $region116: #{tpu_custom_call.1} parent=107 // pred_fallthru
          _
        // Predicated region
        $region117: #{tpu_custom_call.1} parent=107 // pred_check
          %p697 = pneg %p213
        $region118: #{tpu_custom_call.1} parent=107 // pred_check_branch
          %699 = sbr.rel (%p697) target = $region120
        $region119: #{tpu_custom_call.1} parent=107 // pred_region
          %700 = dma.done [#allocation6], 16
        $region120: #{tpu_custom_call.1} parent=107 // pred_fallthru
          _
        // Predicated region
        $region121: #{tpu_custom_call.1} parent=107 // pred_check
          %p701 = pneg %p234
        $region122: #{tpu_custom_call.1} parent=107 // pred_check_branch
          %703 = sbr.rel (%p701) target = $region124
        $region123: #{tpu_custom_call.1} parent=107 // pred_region
          %704 = dma.done [#allocation9], 256
        $region124: #{tpu_custom_call.1} parent=107 // pred_fallthru
          _
        // Predicated region
        $region125: #{tpu_custom_call.1} parent=107 // pred_check
          %p705 = pneg %p255
        $region126: #{tpu_custom_call.1} parent=107 // pred_check_branch
          %707 = sbr.rel (%p705) target = $region128
        $region127: #{tpu_custom_call.1} parent=107 // pred_region
          %708 = dma.done [#allocation9], 16
        $region128: #{tpu_custom_call.1} parent=107 // pred_fallthru
          _
        // Predicated region
        $region129: #{tpu_custom_call.1} parent=107 // pred_check
          %p709 = pneg %p318
        $region130: #{tpu_custom_call.1} parent=107 // pred_check_branch
          %711 = sbr.rel (%p709) target = $region132
        $region131: #{tpu_custom_call.1} parent=107 // pred_region
          %712 = dma.done [#allocation12], 256
        $region132: #{tpu_custom_call.1} parent=107 // pred_fallthru
          _
        %p713 = scmp.lt.s32.totalorder %s40, 1
        %s714 = scalar_select %p713, %s40, 1
        %s715 = smul.addr %s714, 8
        %s716 = scalar_lea.vmem %s0, %s715
        %p717 = pneg %p61
        %p718 = pneg %p58
        %p719 = scmp.lt.s32.totalorder %s40, 1
        %s720 = scalar_select %p719, %s40, 1
        %s721 = smul.addr %s720, 8
        %s722 = scalar_lea.vmem %s1, %s721
        %p723 = pneg %p87
        %p724 = pneg %p84
        %p725 = pneg %p108
        %p726 = pneg %p105
        %p727 = pneg %p129
        %p728 = pneg %p126
        %p729 = pneg %p150
        %p730 = pneg %p147
        %p731 = pneg %p171
        %p732 = pneg %p168
        %p733 = pneg %p192
        %p734 = pneg %p189
        %p735 = pneg %p213
        %p736 = pneg %p210
        %p737 = pneg %p234
        %p738 = pneg %p231
        %p739 = pneg %p255
        %p740 = pneg %p252
        %p741 = pneg %p276
        %p742 = pneg %p273
        %p743 = pneg %p297
        %p744 = pneg %p294
        %p745 = pneg %p318
        %p746 = pneg %p315
        %p747 = pneg %p339
        %p748 = pneg %p336
        %p749 = pneg %p360
        %p750 = pneg %p357
        %p751 = pneg %p381
        %p752 = pneg %p378
        %p753 = pneg %p402
        %p754 = pneg %p399
        %p755 = pneg %p423
        %p756 = pneg %p420
        %p757 = pneg %p444
        %p758 = pneg %p441
        %p759 = pneg %p465
        %p760 = pneg %p462
        %p761 = pneg %p486
        %p762 = pneg %p483
        %p763 = pneg %p507
        %p764 = pneg %p504
        %p765 = pneg %p533
        %p766 = pneg %p530
        %s767 = sand.u32 %s520, 1
        %s768 = scalar_lea.sflag [#allocation4], %s767
        %s769 = sand.u32 %s520, 1
        %s770 = smul.addr %s769, 8
        %s771 = scalar_lea.vmem [#allocation13], %s770
        %p772 = scmp.lt.s32.totalorder %s40, 1
        %s773 = scalar_select %p772, %s40, 1
        %s774 = smul.addr %s773, 8
        %s775 = scalar_lea.vmem %s0, %s774
        %p776 = scmp.lt.s32.totalorder %s40, 1
        %s777 = scalar_select %p776, %s40, 1
        %s778 = smul.addr %s777, 8
        %s779 = scalar_lea.vmem %s1, %s778
        %v781 = vld [vmem:[%s775] sm:$0xff]
        %v782 = vld [vmem:[%s779] sm:$0xff]
        %v783 = vpack.c.bf16 %v781, %v781
        %v784 = vld [vmem:[%s2] sm:$0xf]
        %v785 = vld [vmem:[%s2 + $0x4] sm:$0xf]
        %v786 = vld [vmem:[%s2 + $0x8] sm:$0xf]
        %v787 = vld [vmem:[%s2 + $0xc] sm:$0xf]
        %v788 = vld [vmem:[%s3] sm:$0x1]
        %v790 = vlaneseq
        %v791 = vshrl.u32 %v790, 7
        %v792 = vsub.s32 0, %v791
        %v793 = vrot.slane %v788, %v792
        %v799 = vunpack.c.l.b16 %v784
        %v800 = vunpack.c.l.b16 %v785
        %v801 = vunpack.c.l.b16 %v786
        %v802 = vunpack.c.l.b16 %v787
        %v803 = vpack.c.b16 %v800, %v799
        %v804 = vpack.c.b16 %v802, %v801
        %vm807 = vcmask 261120
        %v809 = vsel %vm807, %v783, 0
        %811 = vmatprep.subr.bf16.mxu0 0
        %812 = vmatpush1.bf16.msra.mxu0 %v803
        %813 = vmatprep.subr.bf16.mxu0 0
        %814 = vmatpush1.bf16.msra.mxu0 %v804
        %815 = vmatprep.subr.bf16.mxu0 0
        %816 = vmatpush1.bf16.msra.mxu0 0
        %817 = vmatprep.subr.bf16.mxu0 0
        %818 = vmatpush1.bf16.msra.mxu0 0
        %819 = vmatprep.subr.bf16.mxu0 0
        %820 = vmatpush1.bf16.msra.mxu0 0
        %821 = vmatprep.subr.bf16.mxu0 0
        %822 = vmatpush1.bf16.msra.mxu0 0
        %823 = vmatprep.subr.bf16.mxu0 0
        %824 = vmatpush1.bf16.msra.mxu0 0
        %825 = vmatprep.subr.bf16.mxu0 0
        %826 = vmatpush1.bf16.msra.mxu0 0
        %827 = vmatprep.subr.bf16.mxu0 0
        %828 = vmatpush1.bf16.msra.mxu0 0
        %829 = vmatprep.subr.bf16.mxu0 0
        %830 = vmatpush1.bf16.msra.mxu0 0
        %831 = vmatprep.subr.bf16.mxu0 0
        %832 = vmatpush1.bf16.msra.mxu0 0
        %833 = vmatprep.subr.bf16.mxu0 0
        %834 = vmatpush1.bf16.msra.mxu0 0
        %835 = vmatprep.subr.bf16.mxu0 0
        %836 = vmatpush1.bf16.msra.mxu0 0
        %837 = vmatprep.subr.bf16.mxu0 0
        %838 = vmatpush1.bf16.msra.mxu0 0
        %839 = vmatprep.subr.bf16.mxu0 0
        %840 = vmatpush1.bf16.msra.mxu0 0
        %841 = vmatprep.subr.bf16.mxu0 0
        %842 = vmatpush1.bf16.msra.mxu0 0
        %843 = vmatprep.mubr.bf16.mxu0 0
        %844 = vmatmul.mubr.bf16.gmra.mrb[0].mxu0 %v809
        %v845 = vpop.f32.mrb[0].mxu0
        %v846 = vadd.f32 %v793, %v845
        %v847 = vpop.f32.mrb[0].mxu0
        %v848 = vpop.f32.mrb[0].mxu0
        %v849 = vpop.f32.mrb[0].mxu0
        %850 = vdwg.mxu0
        %v851 = vpack.c.bf16 %v846, %v846
        %853 = vrot.lane.b32.xlu0 %v851, 96
        %v854 = vpop.permute.xlu0 %853
        %vm855 = vcmask 64512
        %v857 = vsel %vm855, %v851, 0
        %v860 = vsel %vm855, %v854, 0
        %862 = vmatprep.subr.bf16.mxu0 0
        %863 = vmatpush1.bf16.xpose.msra.mxu0 %v860
        %864 = vmatprep.subr.bf16.mxu0 0
        %865 = vmatpush1.bf16.xpose.msra.mxu0 0
        %866 = vmatprep.subr.bf16.mxu0 0
        %867 = vmatpush1.bf16.xpose.msra.mxu0 0
        %868 = vmatprep.subr.bf16.mxu0 0
        %869 = vmatpush1.bf16.xpose.msra.mxu0 0
        %870 = vmatprep.subr.bf16.mxu0 0
        %871 = vmatpush1.bf16.xpose.msra.mxu0 0
        %872 = vmatprep.subr.bf16.mxu0 0
        %873 = vmatpush1.bf16.xpose.msra.mxu0 0
        %874 = vmatprep.subr.bf16.mxu0 0
        %875 = vmatpush1.bf16.xpose.msra.mxu0 0
        %876 = vmatprep.subr.bf16.mxu0 0
        %877 = vmatpush1.bf16.xpose.msra.mxu0 0
        %878 = vmatprep.subr.bf16.mxu0 0
        %879 = vmatpush1.bf16.xpose.msra.mxu0 0
        %880 = vmatprep.subr.bf16.mxu0 0
        %881 = vmatpush1.bf16.xpose.msra.mxu0 0
        %882 = vmatprep.subr.bf16.mxu0 0
        %883 = vmatpush1.bf16.xpose.msra.mxu0 0
        %884 = vmatprep.subr.bf16.mxu0 0
        %885 = vmatpush1.bf16.xpose.msra.mxu0 0
        %886 = vmatprep.subr.bf16.mxu0 0
        %887 = vmatpush1.bf16.xpose.msra.mxu0 0
        %888 = vmatprep.subr.bf16.mxu0 0
        %889 = vmatpush1.bf16.xpose.msra.mxu0 0
        %890 = vmatprep.subr.bf16.mxu0 0
        %891 = vmatpush1.bf16.xpose.msra.mxu0 0
        %892 = vmatprep.subr.bf16.mxu0 0
        %893 = vmatpush1.bf16.xpose.msra.mxu0 0
        %894 = vmatprep.mubr.bf16.mxu0 0
        %895 = vmatmul.mubr.bf16.gmra.mrb[0].mxu0 %v857
        %v896 = vpop.f32.mrb[0].mxu0
        %v897 = vadd.f32 0.0, %v896
        %v898 = vpop.f32.mrb[0].mxu0
        %v899 = vpop.f32.mrb[0].mxu0
        %v900 = vpop.f32.mrb[0].mxu0
        %901 = vdwg.mxu0
        %v902 = vsel %vm855, %v897, -inf
        %903 = vmax.xlane.f32.xlu0 %v902
        %v904 = vpop.xlane.xlu0 %903
        %v905 = vsub.f32 %v897, %v904
        %v906 = vmul.f32 %v905, 1.442695
        %v907 = vpow.pop %v906
        %v908 = vsel %vm855, %v907, 0.0
        %909 = vadd.xlane.f32.xlu0 %v908
        %v910 = vpop.xlane.xlu0 %909
        %v911 = vrcp.pop %v910
        %v912 = vmul.f32 %v907, %v911
        %v913 = vpack.c.bf16 %v912, %v912
        %914 = vrot.lane.b32.xlu0 %v851, 64
        %v915 = vpop.permute.xlu0 %914
        %v917 = vsel %vm855, %v913, 0
        %vm919 = vcmask 1043456
        %v921 = vsel %vm919, %v915, 0
        %923 = vmatprep.subr.bf16.mxu0 0
        %924 = vmatpush1.bf16.msra.mxu0 %v921
        %925 = vmatprep.subr.bf16.mxu0 0
        %926 = vmatpush1.bf16.msra.mxu0 0
        %927 = vmatprep.subr.bf16.mxu0 0
        %928 = vmatpush1.bf16.msra.mxu0 0
        %929 = vmatprep.subr.bf16.mxu0 0
        %930 = vmatpush1.bf16.msra.mxu0 0
        %931 = vmatprep.subr.bf16.mxu0 0
        %932 = vmatpush1.bf16.msra.mxu0 0
        %933 = vmatprep.subr.bf16.mxu0 0
        %934 = vmatpush1.bf16.msra.mxu0 0
        %935 = vmatprep.subr.bf16.mxu0 0
        %936 = vmatpush1.bf16.msra.mxu0 0
        %937 = vmatprep.subr.bf16.mxu0 0
        %938 = vmatpush1.bf16.msra.mxu0 0
        %939 = vmatprep.subr.bf16.mxu0 0
        %940 = vmatpush1.bf16.msra.mxu0 0
        %941 = vmatprep.subr.bf16.mxu0 0
        %942 = vmatpush1.bf16.msra.mxu0 0
        %943 = vmatprep.subr.bf16.mxu0 0
        %944 = vmatpush1.bf16.msra.mxu0 0
        %945 = vmatprep.subr.bf16.mxu0 0
        %946 = vmatpush1.bf16.msra.mxu0 0
        %947 = vmatprep.subr.bf16.mxu0 0
        %948 = vmatpush1.bf16.msra.mxu0 0
        %949 = vmatprep.subr.bf16.mxu0 0
        %950 = vmatpush1.bf16.msra.mxu0 0
        %951 = vmatprep.subr.bf16.mxu0 0
        %952 = vmatpush1.bf16.msra.mxu0 0
        %953 = vmatprep.subr.bf16.mxu0 0
        %954 = vmatpush1.bf16.msra.mxu0 0
        %955 = vmatprep.mubr.bf16.mxu0 0
        %956 = vmatmul.mubr.bf16.gmra.mrb[0].mxu0 %v917
        %v957 = vpop.f32.mrb[0].mxu0
        %v958 = vadd.f32 0.0, %v957
        %v959 = vpop.f32.mrb[0].mxu0
        %v960 = vpop.f32.mrb[0].mxu0
        %v961 = vpop.f32.mrb[0].mxu0
        %962 = vdwg.mxu0
        %963 = vrot.lane.b32.xlu0 %v851, 120
        %v964 = vpop.permute.xlu0 %963
        %965 = vrot.lane.b32.xlu0 %v851, 88
        %v966 = vpop.permute.xlu0 %965
        %v968 = vsel %vm855, %v964, 0
        %v971 = vsel %vm855, %v966, 0
        %973 = vmatprep.subr.bf16.mxu0 0
        %974 = vmatpush1.bf16.xpose.msra.mxu0 %v971
        %975 = vmatprep.subr.bf16.mxu0 0
        %976 = vmatpush1.bf16.xpose.msra.mxu0 0
        %977 = vmatprep.subr.bf16.mxu0 0
        %978 = vmatpush1.bf16.xpose.msra.mxu0 0
        %979 = vmatprep.subr.bf16.mxu0 0
        %980 = vmatpush1.bf16.xpose.msra.mxu0 0
        %981 = vmatprep.subr.bf16.mxu0 0
        %982 = vmatpush1.bf16.xpose.msra.mxu0 0
        %983 = vmatprep.subr.bf16.mxu0 0
        %984 = vmatpush1.bf16.xpose.msra.mxu0 0
        %985 = vmatprep.subr.bf16.mxu0 0
        %986 = vmatpush1.bf16.xpose.msra.mxu0 0
        %987 = vmatprep.subr.bf16.mxu0 0
        %988 = vmatpush1.bf16.xpose.msra.mxu0 0
        %989 = vmatprep.subr.bf16.mxu0 0
        %990 = vmatpush1.bf16.xpose.msra.mxu0 0
        %991 = vmatprep.subr.bf16.mxu0 0
        %992 = vmatpush1.bf16.xpose.msra.mxu0 0
        %993 = vmatprep.subr.bf16.mxu0 0
        %994 = vmatpush1.bf16.xpose.msra.mxu0 0
        %995 = vmatprep.subr.bf16.mxu0 0
        %996 = vmatpush1.bf16.xpose.msra.mxu0 0
        %997 = vmatprep.subr.bf16.mxu0 0
        %998 = vmatpush1.bf16.xpose.msra.mxu0 0
        %999 = vmatprep.subr.bf16.mxu0 0
        %1000 = vmatpush1.bf16.xpose.msra.mxu0 0
        %1001 = vmatprep.subr.bf16.mxu0 0
        %1002 = vmatpush1.bf16.xpose.msra.mxu0 0
        %1003 = vmatprep.subr.bf16.mxu0 0
        %1004 = vmatpush1.bf16.xpose.msra.mxu0 0
        %1005 = vmatprep.mubr.bf16.mxu0 0
        %1006 = vmatmul.mubr.bf16.gmra.mrb[0].mxu0 %v968
        %v1007 = vpop.f32.mrb[0].mxu0
        %v1008 = vadd.f32 0.0, %v1007
        %v1009 = vpop.f32.mrb[0].mxu0
        %v1010 = vpop.f32.mrb[0].mxu0
        %v1011 = vpop.f32.mrb[0].mxu0
        %1012 = vdwg.mxu0
        %v1013 = vsel %vm855, %v1008, -inf
        %1014 = vmax.xlane.f32.xlu0 %v1013
        %v1015 = vpop.xlane.xlu0 %1014
        %v1016 = vsub.f32 %v1008, %v1015
        %v1017 = vmul.f32 %v1016, 1.442695
        %v1018 = vpow.pop %v1017
        %v1019 = vsel %vm855, %v1018, 0.0
        %1020 = vadd.xlane.f32.xlu0 %v1019
        %v1021 = vpop.xlane.xlu0 %1020
        %v1022 = vrcp.pop %v1021
        %v1023 = vmul.f32 %v1018, %v1022
        %v1024 = vpack.c.bf16 %v1023, %v1023
        %1025 = vrot.lane.b32.xlu0 %v851, 56
        %v1026 = vpop.permute.xlu0 %1025
        %v1028 = vsel %vm855, %v1024, 0
        %v1031 = vsel %vm919, %v1026, 0
        %1033 = vmatprep.subr.bf16.mxu0 0
        %1034 = vmatpush1.bf16.msra.mxu0 %v1031
        %1035 = vmatprep.subr.bf16.mxu0 0
        %1036 = vmatpush1.bf16.msra.mxu0 0
        %1037 = vmatprep.subr.bf16.mxu0 0
        %1038 = vmatpush1.bf16.msra.mxu0 0
        %1039 = vmatprep.subr.bf16.mxu0 0
        %1040 = vmatpush1.bf16.msra.mxu0 0
        %1041 = vmatprep.subr.bf16.mxu0 0
        %1042 = vmatpush1.bf16.msra.mxu0 0
        %1043 = vmatprep.subr.bf16.mxu0 0
        %1044 = vmatpush1.bf16.msra.mxu0 0
        %1045 = vmatprep.subr.bf16.mxu0 0
        %1046 = vmatpush1.bf16.msra.mxu0 0
        %1047 = vmatprep.subr.bf16.mxu0 0
        %1048 = vmatpush1.bf16.msra.mxu0 0
        %1049 = vmatprep.subr.bf16.mxu0 0
        %1050 = vmatpush1.bf16.msra.mxu0 0
        %1051 = vmatprep.subr.bf16.mxu0 0
        %1052 = vmatpush1.bf16.msra.mxu0 0
        %1053 = vmatprep.subr.bf16.mxu0 0
        %1054 = vmatpush1.bf16.msra.mxu0 0
        %1055 = vmatprep.subr.bf16.mxu0 0
        %1056 = vmatpush1.bf16.msra.mxu0 0
        %1057 = vmatprep.subr.bf16.mxu0 0
        %1058 = vmatpush1.bf16.msra.mxu0 0
        %1059 = vmatprep.subr.bf16.mxu0 0
        %1060 = vmatpush1.bf16.msra.mxu0 0
        %1061 = vmatprep.subr.bf16.mxu0 0
        %1062 = vmatpush1.bf16.msra.mxu0 0
        %1063 = vmatprep.subr.bf16.mxu0 0
        %1064 = vmatpush1.bf16.msra.mxu0 0
        %1065 = vmatprep.mubr.bf16.mxu0 0
        %1066 = vmatmul.mubr.bf16.gmra.mrb[0].mxu0 %v1028
        %v1067 = vpop.f32.mrb[0].mxu0
        %v1068 = vadd.f32 0.0, %v1067
        %v1069 = vpop.f32.mrb[0].mxu0
        %v1070 = vpop.f32.mrb[0].mxu0
        %v1071 = vpop.f32.mrb[0].mxu0
        %1072 = vdwg.mxu0
        %1073 = vrot.lane.b32.xlu0 %v851, 112
        %v1074 = vpop.permute.xlu0 %1073
        %1075 = vrot.lane.b32.xlu0 %v851, 80
        %v1076 = vpop.permute.xlu0 %1075
        %v1078 = vsel %vm855, %v1074, 0
        %v1081 = vsel %vm855, %v1076, 0
        %1083 = vmatprep.subr.bf16.mxu0 0
        %1084 = vmatpush1.bf16.xpose.msra.mxu0 %v1081
        %1085 = vmatprep.subr.bf16.mxu0 0
        %1086 = vmatpush1.bf16.xpose.msra.mxu0 0
        %1087 = vmatprep.subr.bf16.mxu0 0
        %1088 = vmatpush1.bf16.xpose.msra.mxu0 0
        %1089 = vmatprep.subr.bf16.mxu0 0
        %1090 = vmatpush1.bf16.xpose.msra.mxu0 0
        %1091 = vmatprep.subr.bf16.mxu0 0
        %1092 = vmatpush1.bf16.xpose.msra.mxu0 0
        %1093 = vmatprep.subr.bf16.mxu0 0
        %1094 = vmatpush1.bf16.xpose.msra.mxu0 0
        %1095 = vmatprep.subr.bf16.mxu0 0
        %1096 = vmatpush1.bf16.xpose.msra.mxu0 0
        %1097 = vmatprep.subr.bf16.mxu0 0
        %1098 = vmatpush1.bf16.xpose.msra.mxu0 0
        %1099 = vmatprep.subr.bf16.mxu0 0
        %1100 = vmatpush1.bf16.xpose.msra.mxu0 0
        %1101 = vmatprep.subr.bf16.mxu0 0
        %1102 = vmatpush1.bf16.xpose.msra.mxu0 0
        %1103 = vmatprep.subr.bf16.mxu0 0
        %1104 = vmatpush1.bf16.xpose.msra.mxu0 0
        %1105 = vmatprep.subr.bf16.mxu0 0
        %1106 = vmatpush1.bf16.xpose.msra.mxu0 0
        %1107 = vmatprep.subr.bf16.mxu0 0
        %1108 = vmatpush1.bf16.xpose.msra.mxu0 0
        %1109 = vmatprep.subr.bf16.mxu0 0
        %1110 = vmatpush1.bf16.xpose.msra.mxu0 0
        %1111 = vmatprep.subr.bf16.mxu0 0
        %1112 = vmatpush1.bf16.xpose.msra.mxu0 0
        %1113 = vmatprep.subr.bf16.mxu0 0
        %1114 = vmatpush1.bf16.xpose.msra.mxu0 0
        %1115 = vmatprep.mubr.bf16.mxu0 0
        %1116 = vmatmul.mubr.bf16.gmra.mrb[0].mxu0 %v1078
        %v1117 = vpop.f32.mrb[0].mxu0
        %v1118 = vadd.f32 0.0, %v1117
        %v1119 = vpop.f32.mrb[0].mxu0
        %v1120 = vpop.f32.mrb[0].mxu0
        %v1121 = vpop.f32.mrb[0].mxu0
        %1122 = vdwg.mxu0
        %v1123 = vsel %vm855, %v1118, -inf
        %1124 = vmax.xlane.f32.xlu0 %v1123
        %v1125 = vpop.xlane.xlu0 %1124
        %v1126 = vsub.f32 %v1118, %v1125
        %v1127 = vmul.f32 %v1126, 1.442695
        %v1128 = vpow.pop %v1127
        %v1129 = vsel %vm855, %v1128, 0.0
        %1130 = vadd.xlane.f32.xlu0 %v1129
        %v1131 = vpop.xlane.xlu0 %1130
        %v1132 = vrcp.pop %v1131
        %v1133 = vmul.f32 %v1128, %v1132
        %v1134 = vpack.c.bf16 %v1133, %v1133
        %1135 = vrot.lane.b32.xlu0 %v851, 48
        %v1136 = vpop.permute.xlu0 %1135
        %v1138 = vsel %vm855, %v1134, 0
        %v1141 = vsel %vm919, %v1136, 0
        %1143 = vmatprep.subr.bf16.mxu0 0
        %1144 = vmatpush1.bf16.msra.mxu0 %v1141
        %1145 = vmatprep.subr.bf16.mxu0 0
        %1146 = vmatpush1.bf16.msra.mxu0 0
        %1147 = vmatprep.subr.bf16.mxu0 0
        %1148 = vmatpush1.bf16.msra.mxu0 0
        %1149 = vmatprep.subr.bf16.mxu0 0
        %1150 = vmatpush1.bf16.msra.mxu0 0
        %1151 = vmatprep.subr.bf16.mxu0 0
        %1152 = vmatpush1.bf16.msra.mxu0 0
        %1153 = vmatprep.subr.bf16.mxu0 0
        %1154 = vmatpush1.bf16.msra.mxu0 0
        %1155 = vmatprep.subr.bf16.mxu0 0
        %1156 = vmatpush1.bf16.msra.mxu0 0
        %1157 = vmatprep.subr.bf16.mxu0 0
        %1158 = vmatpush1.bf16.msra.mxu0 0
        %1159 = vmatprep.subr.bf16.mxu0 0
        %1160 = vmatpush1.bf16.msra.mxu0 0
        %1161 = vmatprep.subr.bf16.mxu0 0
        %1162 = vmatpush1.bf16.msra.mxu0 0
        %1163 = vmatprep.subr.bf16.mxu0 0
        %1164 = vmatpush1.bf16.msra.mxu0 0
        %1165 = vmatprep.subr.bf16.mxu0 0
        %1166 = vmatpush1.bf16.msra.mxu0 0
        %1167 = vmatprep.subr.bf16.mxu0 0
        %1168 = vmatpush1.bf16.msra.mxu0 0
        %1169 = vmatprep.subr.bf16.mxu0 0
        %1170 = vmatpush1.bf16.msra.mxu0 0
        %1171 = vmatprep.subr.bf16.mxu0 0
        %1172 = vmatpush1.bf16.msra.mxu0 0
        %1173 = vmatprep.subr.bf16.mxu0 0
        %1174 = vmatpush1.bf16.msra.mxu0 0
        %1175 = vmatprep.mubr.bf16.mxu0 0
        %1176 = vmatmul.mubr.bf16.gmra.mrb[0].mxu0 %v1138
        %v1177 = vpop.f32.mrb[0].mxu0
        %v1178 = vadd.f32 0.0, %v1177
        %v1179 = vpop.f32.mrb[0].mxu0
        %v1180 = vpop.f32.mrb[0].mxu0
        %v1181 = vpop.f32.mrb[0].mxu0
        %1182 = vdwg.mxu0
        %1183 = vrot.lane.b32.xlu0 %v851, 104
        %v1184 = vpop.permute.xlu0 %1183
        %1185 = vrot.lane.b32.xlu0 %v851, 72
        %v1186 = vpop.permute.xlu0 %1185
        %v1188 = vsel %vm855, %v1184, 0
        %v1191 = vsel %vm855, %v1186, 0
        %1193 = vmatprep.subr.bf16.mxu0 0
        %1194 = vmatpush1.bf16.xpose.msra.mxu0 %v1191
        %1195 = vmatprep.subr.bf16.mxu0 0
        %1196 = vmatpush1.bf16.xpose.msra.mxu0 0
        %1197 = vmatprep.subr.bf16.mxu0 0
        %1198 = vmatpush1.bf16.xpose.msra.mxu0 0
        %1199 = vmatprep.subr.bf16.mxu0 0
        %1200 = vmatpush1.bf16.xpose.msra.mxu0 0
        %1201 = vmatprep.subr.bf16.mxu0 0
        %1202 = vmatpush1.bf16.xpose.msra.mxu0 0
        %1203 = vmatprep.subr.bf16.mxu0 0
        %1204 = vmatpush1.bf16.xpose.msra.mxu0 0
        %1205 = vmatprep.subr.bf16.mxu0 0
        %1206 = vmatpush1.bf16.xpose.msra.mxu0 0
        %1207 = vmatprep.subr.bf16.mxu0 0
        %1208 = vmatpush1.bf16.xpose.msra.mxu0 0
        %1209 = vmatprep.subr.bf16.mxu0 0
        %1210 = vmatpush1.bf16.xpose.msra.mxu0 0
        %1211 = vmatprep.subr.bf16.mxu0 0
        %1212 = vmatpush1.bf16.xpose.msra.mxu0 0
        %1213 = vmatprep.subr.bf16.mxu0 0
        %1214 = vmatpush1.bf16.xpose.msra.mxu0 0
        %1215 = vmatprep.subr.bf16.mxu0 0
        %1216 = vmatpush1.bf16.xpose.msra.mxu0 0
        %1217 = vmatprep.subr.bf16.mxu0 0
        %1218 = vmatpush1.bf16.xpose.msra.mxu0 0
        %1219 = vmatprep.subr.bf16.mxu0 0
        %1220 = vmatpush1.bf16.xpose.msra.mxu0 0
        %1221 = vmatprep.subr.bf16.mxu0 0
        %1222 = vmatpush1.bf16.xpose.msra.mxu0 0
        %1223 = vmatprep.subr.bf16.mxu0 0
        %1224 = vmatpush1.bf16.xpose.msra.mxu0 0
        %1225 = vmatprep.mubr.bf16.mxu0 0
        %1226 = vmatmul.mubr.bf16.gmra.mrb[0].mxu0 %v1188
        %v1227 = vpop.f32.mrb[0].mxu0
        %v1228 = vadd.f32 0.0, %v1227
        %v1229 = vpop.f32.mrb[0].mxu0
        %v1230 = vpop.f32.mrb[0].mxu0
        %v1231 = vpop.f32.mrb[0].mxu0
        %1232 = vdwg.mxu0
        %v1233 = vsel %vm855, %v1228, -inf
        %1234 = vmax.xlane.f32.xlu0 %v1233
        %v1235 = vpop.xlane.xlu0 %1234
        %v1236 = vsub.f32 %v1228, %v1235
        %v1237 = vmul.f32 %v1236, 1.442695
        %v1238 = vpow.pop %v1237
        %v1239 = vsel %vm855, %v1238, 0.0
        %1240 = vadd.xlane.f32.xlu0 %v1239
        %v1241 = vpop.xlane.xlu0 %1240
        %v1242 = vrcp.pop %v1241
        %v1243 = vmul.f32 %v1238, %v1242
        %v1244 = vpack.c.bf16 %v1243, %v1243
        %1245 = vrot.lane.b32.xlu0 %v851, 40
        %v1246 = vpop.permute.xlu0 %1245
        %v1248 = vsel %vm855, %v1244, 0
        %v1251 = vsel %vm919, %v1246, 0
        %1253 = vmatprep.subr.bf16.mxu0 0
        %1254 = vmatpush1.bf16.msra.mxu0 %v1251
        %1255 = vmatprep.subr.bf16.mxu0 0
        %1256 = vmatpush1.bf16.msra.mxu0 0
        %1257 = vmatprep.subr.bf16.mxu0 0
        %1258 = vmatpush1.bf16.msra.mxu0 0
        %1259 = vmatprep.subr.bf16.mxu0 0
        %1260 = vmatpush1.bf16.msra.mxu0 0
        %1261 = vmatprep.subr.bf16.mxu0 0
        %1262 = vmatpush1.bf16.msra.mxu0 0
        %1263 = vmatprep.subr.bf16.mxu0 0
        %1264 = vmatpush1.bf16.msra.mxu0 0
        %1265 = vmatprep.subr.bf16.mxu0 0
        %1266 = vmatpush1.bf16.msra.mxu0 0
        %1267 = vmatprep.subr.bf16.mxu0 0
        %1268 = vmatpush1.bf16.msra.mxu0 0
        %1269 = vmatprep.subr.bf16.mxu0 0
        %1270 = vmatpush1.bf16.msra.mxu0 0
        %1271 = vmatprep.subr.bf16.mxu0 0
        %1272 = vmatpush1.bf16.msra.mxu0 0
        %1273 = vmatprep.subr.bf16.mxu0 0
        %1274 = vmatpush1.bf16.msra.mxu0 0
        %1275 = vmatprep.subr.bf16.mxu0 0
        %1276 = vmatpush1.bf16.msra.mxu0 0
        %1277 = vmatprep.subr.bf16.mxu0 0
        %1278 = vmatpush1.bf16.msra.mxu0 0
        %1279 = vmatprep.subr.bf16.mxu0 0
        %1280 = vmatpush1.bf16.msra.mxu0 0
        %1281 = vmatprep.subr.bf16.mxu0 0
        %1282 = vmatpush1.bf16.msra.mxu0 0
        %1283 = vmatprep.subr.bf16.mxu0 0
        %1284 = vmatpush1.bf16.msra.mxu0 0
        %1285 = vmatprep.mubr.bf16.mxu0 0
        %1286 = vmatmul.mubr.bf16.gmra.mrb[0].mxu0 %v1248
        %v1287 = vpop.f32.mrb[0].mxu0
        %v1288 = vadd.f32 0.0, %v1287
        %v1289 = vpop.f32.mrb[0].mxu0
        %v1290 = vpop.f32.mrb[0].mxu0
        %v1291 = vpop.f32.mrb[0].mxu0
        %1292 = vdwg.mxu0
        %1294 = vrot.lane.b32.xlu0 %v1068, 8
        %v1295 = vpop.permute.xlu0 %1294
        %1298 = vrot.lane.b32.xlu0 %v1178, 16
        %v1299 = vpop.permute.xlu0 %1298
        %1302 = vrot.lane.b32.xlu0 %v1288, 24
        %v1303 = vpop.permute.xlu0 %1302
        %v1305 = vsel %vm855, %v958, %v1295
        %vm1306 = vcmask 130048
        %v1307 = vsel %vm1306, %v1305, %v1299
        %vm1308 = vcmask 195584
        %v1309 = vsel %vm1308, %v1307, %v1303
        %v1310 = vpack.c.bf16 %v1309, %v1309
        %v1311 = vld [vmem:[#allocation2] sm:$0xf]
        %v1312 = vld [vmem:[#allocation2 + $0x4] sm:$0xf]
        %v1313 = vld [vmem:[#allocation2 + $0x8] sm:$0xf]
        %v1314 = vld [vmem:[#allocation2 + $0xc] sm:$0xf]
        %v1315 = vld [vmem:[%s5] sm:$0x1]
        %v1317 = vlaneseq
        %v1318 = vshrl.u32 %v1317, 7
        %v1319 = vsub.s32 0, %v1318
        %v1320 = vrot.slane %v1315, %v1319
        %v1326 = vunpack.c.l.b16 %v1311
        %v1327 = vunpack.c.l.b16 %v1312
        %v1328 = vunpack.c.l.b16 %v1313
        %v1329 = vunpack.c.l.b16 %v1314
        %v1330 = vpack.c.b16 %v1327, %v1326
        %v1331 = vpack.c.b16 %v1329, %v1328
        %v1335 = vsel %vm807, %v1310, 0
        %1337 = vmatprep.subr.bf16.mxu0 0
        %1338 = vmatpush1.bf16.msra.mxu0 %v1330
        %1339 = vmatprep.subr.bf16.mxu0 0
        %1340 = vmatpush1.bf16.msra.mxu0 %v1331
        %1341 = vmatprep.subr.bf16.mxu0 0
        %1342 = vmatpush1.bf16.msra.mxu0 0
        %1343 = vmatprep.subr.bf16.mxu0 0
        %1344 = vmatpush1.bf16.msra.mxu0 0
        %1345 = vmatprep.subr.bf16.mxu0 0
        %1346 = vmatpush1.bf16.msra.mxu0 0
        %1347 = vmatprep.subr.bf16.mxu0 0
        %1348 = vmatpush1.bf16.msra.mxu0 0
        %1349 = vmatprep.subr.bf16.mxu0 0
        %1350 = vmatpush1.bf16.msra.mxu0 0
        %1351 = vmatprep.subr.bf16.mxu0 0
        %1352 = vmatpush1.bf16.msra.mxu0 0
        %1353 = vmatprep.subr.bf16.mxu0 0
        %1354 = vmatpush1.bf16.msra.mxu0 0
        %1355 = vmatprep.subr.bf16.mxu0 0
        %1356 = vmatpush1.bf16.msra.mxu0 0
        %1357 = vmatprep.subr.bf16.mxu0 0
        %1358 = vmatpush1.bf16.msra.mxu0 0
        %1359 = vmatprep.subr.bf16.mxu0 0
        %1360 = vmatpush1.bf16.msra.mxu0 0
        %1361 = vmatprep.subr.bf16.mxu0 0
        %1362 = vmatpush1.bf16.msra.mxu0 0
        %1363 = vmatprep.subr.bf16.mxu0 0
        %1364 = vmatpush1.bf16.msra.mxu0 0
        %1365 = vmatprep.subr.bf16.mxu0 0
        %1366 = vmatpush1.bf16.msra.mxu0 0
        %1367 = vmatprep.subr.bf16.mxu0 0
        %1368 = vmatpush1.bf16.msra.mxu0 0
        %1369 = vmatprep.mubr.bf16.mxu0 0
        %1370 = vmatmul.mubr.bf16.gmra.mrb[0].mxu0 %v1335
        %v1371 = vpop.f32.mrb[0].mxu0
        %v1372 = vadd.f32 %v1320, %v1371
        %v1373 = vpop.f32.mrb[0].mxu0
        %v1374 = vpop.f32.mrb[0].mxu0
        %v1375 = vpop.f32.mrb[0].mxu0
        %1376 = vdwg.mxu0
        %v1377 = vadd.f32 %v781, %v1372
        %v1378 = vsel %vm807, %v1377, 0.0
        %1379 = vadd.xlane.f32.xlu0 %v1378
        %v1380 = vpop.xlane.xlu0 %1379
        %v1381 = vrcp.pop 32.0
        %v1382 = vmul.f32 %v1380, %v1381
        %v1383 = vsub.f32 %v1377, %v1382
        %v1384 = vmul.f32 %v1383, %v1383
        %v1385 = vsel %vm807, %v1384, 0.0
        %1386 = vadd.xlane.f32.xlu0 %v1385
        %v1387 = vpop.xlane.xlu0 %1386
        %v1388 = vmul.f32 %v1387, %v1381
        %v1389 = vadd.f32 %v1388, 1e-05
        %v1390 = vrsqrt.pop %v1389
        %v1391 = vmul.f32 %v1383, %v1390
        %v1392 = vld [vmem:[%s16] sm:$0x1]
        %v1394 = vlaneseq
        %v1395 = vshrl.u32 %v1394, 7
        %v1396 = vsub.s32 0, %v1395
        %v1397 = vrot.slane %v1392, %v1396
        %v1399 = vmul.f32 %v1391, %v1397
        %v1400 = vld [vmem:[%s17] sm:$0x1]
        %v1402 = vlaneseq
        %v1403 = vshrl.u32 %v1402, 7
        %v1404 = vsub.s32 0, %v1403
        %v1405 = vrot.slane %v1400, %v1404
        %v1407 = vadd.f32 %v1399, %v1405
        %v1408 = vpack.c.bf16 %v1407, %v1407
        %v1409 = vld [vmem:[#allocation5] sm:$0xf]
        %v1410 = vld [vmem:[#allocation5 + $0x4] sm:$0xf]
        %v1411 = vld [vmem:[#allocation5 + $0x8] sm:$0xf]
        %v1412 = vld [vmem:[#allocation5 + $0xc] sm:$0xf]
        %v1413 = vld [vmem:[#allocation7] sm:$0x1]
        %v1415 = vlaneseq
        %v1416 = vshrl.u32 %v1415, 7
        %v1417 = vsub.s32 0, %v1416
        %v1418 = vrot.slane %v1413, %v1417
        %v1424 = vunpack.c.l.b16 %v1409
        %v1425 = vunpack.c.l.b16 %v1410
        %v1426 = vunpack.c.l.b16 %v1411
        %v1427 = vunpack.c.l.b16 %v1412
        %v1428 = vpack.c.b16 %v1425, %v1424
        %v1429 = vpack.c.b16 %v1427, %v1426
        %v1433 = vsel %vm807, %v1408, 0
        %1435 = vmatprep.subr.bf16.mxu0 0
        %1436 = vmatpush1.bf16.msra.mxu0 %v1428
        %1437 = vmatprep.subr.bf16.mxu0 0
        %1438 = vmatpush1.bf16.msra.mxu0 %v1429
        %1439 = vmatprep.subr.bf16.mxu0 0
        %1440 = vmatpush1.bf16.msra.mxu0 0
        %1441 = vmatprep.subr.bf16.mxu0 0
        %1442 = vmatpush1.bf16.msra.mxu0 0
        %1443 = vmatprep.subr.bf16.mxu0 0
        %1444 = vmatpush1.bf16.msra.mxu0 0
        %1445 = vmatprep.subr.bf16.mxu0 0
        %1446 = vmatpush1.bf16.msra.mxu0 0
        %1447 = vmatprep.subr.bf16.mxu0 0
        %1448 = vmatpush1.bf16.msra.mxu0 0
        %1449 = vmatprep.subr.bf16.mxu0 0
        %1450 = vmatpush1.bf16.msra.mxu0 0
        %1451 = vmatprep.subr.bf16.mxu0 0
        %1452 = vmatpush1.bf16.msra.mxu0 0
        %1453 = vmatprep.subr.bf16.mxu0 0
        %1454 = vmatpush1.bf16.msra.mxu0 0
        %1455 = vmatprep.subr.bf16.mxu0 0
        %1456 = vmatpush1.bf16.msra.mxu0 0
        %1457 = vmatprep.subr.bf16.mxu0 0
        %1458 = vmatpush1.bf16.msra.mxu0 0
        %1459 = vmatprep.subr.bf16.mxu0 0
        %1460 = vmatpush1.bf16.msra.mxu0 0
        %1461 = vmatprep.subr.bf16.mxu0 0
        %1462 = vmatpush1.bf16.msra.mxu0 0
        %1463 = vmatprep.subr.bf16.mxu0 0
        %1464 = vmatpush1.bf16.msra.mxu0 0
        %1465 = vmatprep.subr.bf16.mxu0 0
        %1466 = vmatpush1.bf16.msra.mxu0 0
        %1467 = vmatprep.mubr.bf16.mxu0 0
        %1468 = vmatmul.mubr.bf16.gmra.mrb[0].mxu0 %v1433
        %v1469 = vpop.f32.mrb[0].mxu0
        %v1470 = vadd.f32 %v1418, %v1469
        %v1471 = vpop.f32.mrb[0].mxu0
        %v1472 = vpop.f32.mrb[0].mxu0
        %v1473 = vpop.f32.mrb[0].mxu0
        %1474 = vdwg.mxu0
        %v1475 = vpack.c.bf16 %v782, %v782
        %v1476 = vld [vmem:[#allocation8] sm:$0xf]
        %v1477 = vld [vmem:[#allocation8 + $0x4] sm:$0xf]
        %v1478 = vld [vmem:[#allocation8 + $0x8] sm:$0xf]
        %v1479 = vld [vmem:[#allocation8 + $0xc] sm:$0xf]
        %v1480 = vld [vmem:[#allocation10] sm:$0x1]
        %v1482 = vlaneseq
        %v1483 = vshrl.u32 %v1482, 7
        %v1484 = vsub.s32 0, %v1483
        %v1485 = vrot.slane %v1480, %v1484
        %v1491 = vunpack.c.l.b16 %v1476
        %v1492 = vunpack.c.l.b16 %v1477
        %v1493 = vunpack.c.l.b16 %v1478
        %v1494 = vunpack.c.l.b16 %v1479
        %v1495 = vpack.c.b16 %v1492, %v1491
        %v1496 = vpack.c.b16 %v1494, %v1493
        %v1500 = vsel %vm807, %v1475, 0
        %1502 = vmatprep.subr.bf16.mxu0 0
        %1503 = vmatpush1.bf16.msra.mxu0 %v1495
        %1504 = vmatprep.subr.bf16.mxu0 0
        %1505 = vmatpush1.bf16.msra.mxu0 %v1496
        %1506 = vmatprep.subr.bf16.mxu0 0
        %1507 = vmatpush1.bf16.msra.mxu0 0
        %1508 = vmatprep.subr.bf16.mxu0 0
        %1509 = vmatpush1.bf16.msra.mxu0 0
        %1510 = vmatprep.subr.bf16.mxu0 0
        %1511 = vmatpush1.bf16.msra.mxu0 0
        %1512 = vmatprep.subr.bf16.mxu0 0
        %1513 = vmatpush1.bf16.msra.mxu0 0
        %1514 = vmatprep.subr.bf16.mxu0 0
        %1515 = vmatpush1.bf16.msra.mxu0 0
        %1516 = vmatprep.subr.bf16.mxu0 0
        %1517 = vmatpush1.bf16.msra.mxu0 0
        %1518 = vmatprep.subr.bf16.mxu0 0
        %1519 = vmatpush1.bf16.msra.mxu0 0
        %1520 = vmatprep.subr.bf16.mxu0 0
        %1521 = vmatpush1.bf16.msra.mxu0 0
        %1522 = vmatprep.subr.bf16.mxu0 0
        %1523 = vmatpush1.bf16.msra.mxu0 0
        %1524 = vmatprep.subr.bf16.mxu0 0
        %1525 = vmatpush1.bf16.msra.mxu0 0
        %1526 = vmatprep.subr.bf16.mxu0 0
        %1527 = vmatpush1.bf16.msra.mxu0 0
        %1528 = vmatprep.subr.bf16.mxu0 0
        %1529 = vmatpush1.bf16.msra.mxu0 0
        %1530 = vmatprep.subr.bf16.mxu0 0
        %1531 = vmatpush1.bf16.msra.mxu0 0
        %1532 = vmatprep.subr.bf16.mxu0 0
        %1533 = vmatpush1.bf16.msra.mxu0 0
        %1534 = vmatprep.mubr.bf16.mxu0 0
        %1535 = vmatmul.mubr.bf16.gmra.mrb[0].mxu0 %v1500
        %v1536 = vpop.f32.mrb[0].mxu0
        %v1537 = vadd.f32 %v1485, %v1536
        %v1538 = vpop.f32.mrb[0].mxu0
        %v1539 = vpop.f32.mrb[0].mxu0
        %v1540 = vpop.f32.mrb[0].mxu0
        %1541 = vdwg.mxu0
        %v1542 = vpack.c.bf16 %v1537, %v1537
        %v1543 = vpack.c.bf16 %v1470, %v1470
        %v1545 = vsel %vm855, %v1543, 0
        %v1548 = vsel %vm855, %v1542, 0
        %1550 = vmatprep.subr.bf16.mxu0 0
        %1551 = vmatpush1.bf16.xpose.msra.mxu0 %v1548
        %1552 = vmatprep.subr.bf16.mxu0 0
        %1553 = vmatpush1.bf16.xpose.msra.mxu0 0
        %1554 = vmatprep.subr.bf16.mxu0 0
        %1555 = vmatpush1.bf16.xpose.msra.mxu0 0
        %1556 = vmatprep.subr.bf16.mxu0 0
        %1557 = vmatpush1.bf16.xpose.msra.mxu0 0
        %1558 = vmatprep.subr.bf16.mxu0 0
        %1559 = vmatpush1.bf16.xpose.msra.mxu0 0
        %1560 = vmatprep.subr.bf16.mxu0 0
        %1561 = vmatpush1.bf16.xpose.msra.mxu0 0
        %1562 = vmatprep.subr.bf16.mxu0 0
        %1563 = vmatpush1.bf16.xpose.msra.mxu0 0
        %1564 = vmatprep.subr.bf16.mxu0 0
        %1565 = vmatpush1.bf16.xpose.msra.mxu0 0
        %1566 = vmatprep.subr.bf16.mxu0 0
        %1567 = vmatpush1.bf16.xpose.msra.mxu0 0
        %1568 = vmatprep.subr.bf16.mxu0 0
        %1569 = vmatpush1.bf16.xpose.msra.mxu0 0
        %1570 = vmatprep.subr.bf16.mxu0 0
        %1571 = vmatpush1.bf16.xpose.msra.mxu0 0
        %1572 = vmatprep.subr.bf16.mxu0 0
        %1573 = vmatpush1.bf16.xpose.msra.mxu0 0
        %1574 = vmatprep.subr.bf16.mxu0 0
        %1575 = vmatpush1.bf16.xpose.msra.mxu0 0
        %1576 = vmatprep.subr.bf16.mxu0 0
        %1577 = vmatpush1.bf16.xpose.msra.mxu0 0
        %1578 = vmatprep.subr.bf16.mxu0 0
        %1579 = vmatpush1.bf16.xpose.msra.mxu0 0
        %1580 = vmatprep.subr.bf16.mxu0 0
        %1581 = vmatpush1.bf16.xpose.msra.mxu0 0
        %1582 = vmatprep.mubr.bf16.mxu0 0
        %1583 = vmatmul.mubr.bf16.gmra.mrb[0].mxu0 %v1545
        %v1584 = vpop.f32.mrb[0].mxu0
        %v1585 = vadd.f32 0.0, %v1584
        %v1586 = vpop.f32.mrb[0].mxu0
        %v1587 = vpop.f32.mrb[0].mxu0
        %v1588 = vpop.f32.mrb[0].mxu0
        %1589 = vdwg.mxu0
        %v1590 = vsel %vm855, %v1585, -inf
        %1591 = vmax.xlane.f32.xlu0 %v1590
        %v1592 = vpop.xlane.xlu0 %1591
        %v1593 = vsub.f32 %v1585, %v1592
        %v1594 = vmul.f32 %v1593, 1.442695
        %v1595 = vpow.pop %v1594
        %v1596 = vsel %vm855, %v1595, 0.0
        %1597 = vadd.xlane.f32.xlu0 %v1596
        %v1598 = vpop.xlane.xlu0 %1597
        %v1599 = vrcp.pop %v1598
        %v1600 = vmul.f32 %v1595, %v1599
        %v1601 = vpack.c.bf16 %v1600, %v1600
        %1603 = vrot.lane.b32.xlu0 %v1542, 96
        %v1604 = vpop.permute.xlu0 %1603
        %v1606 = vsel %vm855, %v1601, 0
        %v1609 = vsel %vm919, %v1604, 0
        %1611 = vmatprep.subr.bf16.mxu0 0
        %1612 = vmatpush1.bf16.msra.mxu0 %v1609
        %1613 = vmatprep.subr.bf16.mxu0 0
        %1614 = vmatpush1.bf16.msra.mxu0 0
        %1615 = vmatprep.subr.bf16.mxu0 0
        %1616 = vmatpush1.bf16.msra.mxu0 0
        %1617 = vmatprep.subr.bf16.mxu0 0
        %1618 = vmatpush1.bf16.msra.mxu0 0
        %1619 = vmatprep.subr.bf16.mxu0 0
        %1620 = vmatpush1.bf16.msra.mxu0 0
        %1621 = vmatprep.subr.bf16.mxu0 0
        %1622 = vmatpush1.bf16.msra.mxu0 0
        %1623 = vmatprep.subr.bf16.mxu0 0
        %1624 = vmatpush1.bf16.msra.mxu0 0
        %1625 = vmatprep.subr.bf16.mxu0 0
        %1626 = vmatpush1.bf16.msra.mxu0 0
        %1627 = vmatprep.subr.bf16.mxu0 0
        %1628 = vmatpush1.bf16.msra.mxu0 0
        %1629 = vmatprep.subr.bf16.mxu0 0
        %1630 = vmatpush1.bf16.msra.mxu0 0
        %1631 = vmatprep.subr.bf16.mxu0 0
        %1632 = vmatpush1.bf16.msra.mxu0 0
        %1633 = vmatprep.subr.bf16.mxu0 0
        %1634 = vmatpush1.bf16.msra.mxu0 0
        %1635 = vmatprep.subr.bf16.mxu0 0
        %1636 = vmatpush1.bf16.msra.mxu0 0
        %1637 = vmatprep.subr.bf16.mxu0 0
        %1638 = vmatpush1.bf16.msra.mxu0 0
        %1639 = vmatprep.subr.bf16.mxu0 0
        %1640 = vmatpush1.bf16.msra.mxu0 0
        %1641 = vmatprep.subr.bf16.mxu0 0
        %1642 = vmatpush1.bf16.msra.mxu0 0
        %1643 = vmatprep.mubr.bf16.mxu0 0
        %1644 = vmatmul.mubr.bf16.gmra.mrb[0].mxu0 %v1606
        %v1645 = vpop.f32.mrb[0].mxu0
        %v1646 = vadd.f32 0.0, %v1645
        %v1647 = vpop.f32.mrb[0].mxu0
        %v1648 = vpop.f32.mrb[0].mxu0
        %v1649 = vpop.f32.mrb[0].mxu0
        %1650 = vdwg.mxu0
        %1652 = vrot.lane.b32.xlu0 %v1543, 120
        %v1653 = vpop.permute.xlu0 %1652
        %1654 = vrot.lane.b32.xlu0 %v1542, 120
        %v1655 = vpop.permute.xlu0 %1654
        %v1657 = vsel %vm855, %v1653, 0
        %v1660 = vsel %vm855, %v1655, 0
        %1662 = vmatprep.subr.bf16.mxu0 0
        %1663 = vmatpush1.bf16.xpose.msra.mxu0 %v1660
        %1664 = vmatprep.subr.bf16.mxu0 0
        %1665 = vmatpush1.bf16.xpose.msra.mxu0 0
        %1666 = vmatprep.subr.bf16.mxu0 0
        %1667 = vmatpush1.bf16.xpose.msra.mxu0 0
        %1668 = vmatprep.subr.bf16.mxu0 0
        %1669 = vmatpush1.bf16.xpose.msra.mxu0 0
        %1670 = vmatprep.subr.bf16.mxu0 0
        %1671 = vmatpush1.bf16.xpose.msra.mxu0 0
        %1672 = vmatprep.subr.bf16.mxu0 0
        %1673 = vmatpush1.bf16.xpose.msra.mxu0 0
        %1674 = vmatprep.subr.bf16.mxu0 0
        %1675 = vmatpush1.bf16.xpose.msra.mxu0 0
        %1676 = vmatprep.subr.bf16.mxu0 0
        %1677 = vmatpush1.bf16.xpose.msra.mxu0 0
        %1678 = vmatprep.subr.bf16.mxu0 0
        %1679 = vmatpush1.bf16.xpose.msra.mxu0 0
        %1680 = vmatprep.subr.bf16.mxu0 0
        %1681 = vmatpush1.bf16.xpose.msra.mxu0 0
        %1682 = vmatprep.subr.bf16.mxu0 0
        %1683 = vmatpush1.bf16.xpose.msra.mxu0 0
        %1684 = vmatprep.subr.bf16.mxu0 0
        %1685 = vmatpush1.bf16.xpose.msra.mxu0 0
        %1686 = vmatprep.subr.bf16.mxu0 0
        %1687 = vmatpush1.bf16.xpose.msra.mxu0 0
        %1688 = vmatprep.subr.bf16.mxu0 0
        %1689 = vmatpush1.bf16.xpose.msra.mxu0 0
        %1690 = vmatprep.subr.bf16.mxu0 0
        %1691 = vmatpush1.bf16.xpose.msra.mxu0 0
        %1692 = vmatprep.subr.bf16.mxu0 0
        %1693 = vmatpush1.bf16.xpose.msra.mxu0 0
        %1694 = vmatprep.mubr.bf16.mxu0 0
        %1695 = vmatmul.mubr.bf16.gmra.mrb[0].mxu0 %v1657
        %v1696 = vpop.f32.mrb[0].mxu0
        %v1697 = vadd.f32 0.0, %v1696
        %v1698 = vpop.f32.mrb[0].mxu0
        %v1699 = vpop.f32.mrb[0].mxu0
        %v1700 = vpop.f32.mrb[0].mxu0
        %1701 = vdwg.mxu0
        %v1702 = vsel %vm855, %v1697, -inf
        %1703 = vmax.xlane.f32.xlu0 %v1702
        %v1704 = vpop.xlane.xlu0 %1703
        %v1705 = vsub.f32 %v1697, %v1704
        %v1706 = vmul.f32 %v1705, 1.442695
        %v1707 = vpow.pop %v1706
        %v1708 = vsel %vm855, %v1707, 0.0
        %1709 = vadd.xlane.f32.xlu0 %v1708
        %v1710 = vpop.xlane.xlu0 %1709
        %v1711 = vrcp.pop %v1710
        %v1712 = vmul.f32 %v1707, %v1711
        %v1713 = vpack.c.bf16 %v1712, %v1712
        %1714 = vrot.lane.b32.xlu0 %v1542, 88
        %v1715 = vpop.permute.xlu0 %1714
        %v1717 = vsel %vm855, %v1713, 0
        %v1720 = vsel %vm919, %v1715, 0
        %1722 = vmatprep.subr.bf16.mxu0 0
        %1723 = vmatpush1.bf16.msra.mxu0 %v1720
        %1724 = vmatprep.subr.bf16.mxu0 0
        %1725 = vmatpush1.bf16.msra.mxu0 0
        %1726 = vmatprep.subr.bf16.mxu0 0
        %1727 = vmatpush1.bf16.msra.mxu0 0
        %1728 = vmatprep.subr.bf16.mxu0 0
        %1729 = vmatpush1.bf16.msra.mxu0 0
        %1730 = vmatprep.subr.bf16.mxu0 0
        %1731 = vmatpush1.bf16.msra.mxu0 0
        %1732 = vmatprep.subr.bf16.mxu0 0
        %1733 = vmatpush1.bf16.msra.mxu0 0
        %1734 = vmatprep.subr.bf16.mxu0 0
        %1735 = vmatpush1.bf16.msra.mxu0 0
        %1736 = vmatprep.subr.bf16.mxu0 0
        %1737 = vmatpush1.bf16.msra.mxu0 0
        %1738 = vmatprep.subr.bf16.mxu0 0
        %1739 = vmatpush1.bf16.msra.mxu0 0
        %1740 = vmatprep.subr.bf16.mxu0 0
        %1741 = vmatpush1.bf16.msra.mxu0 0
        %1742 = vmatprep.subr.bf16.mxu0 0
        %1743 = vmatpush1.bf16.msra.mxu0 0
        %1744 = vmatprep.subr.bf16.mxu0 0
        %1745 = vmatpush1.bf16.msra.mxu0 0
        %1746 = vmatprep.subr.bf16.mxu0 0
        %1747 = vmatpush1.bf16.msra.mxu0 0
        %1748 = vmatprep.subr.bf16.mxu0 0
        %1749 = vmatpush1.bf16.msra.mxu0 0
        %1750 = vmatprep.subr.bf16.mxu0 0
        %1751 = vmatpush1.bf16.msra.mxu0 0
        %1752 = vmatprep.subr.bf16.mxu0 0
        %1753 = vmatpush1.bf16.msra.mxu0 0
        %1754 = vmatprep.mubr.bf16.mxu0 0
        %1755 = vmatmul.mubr.bf16.gmra.mrb[0].mxu0 %v1717
        %v1756 = vpop.f32.mrb[0].mxu0
        %v1757 = vadd.f32 0.0, %v1756
        %v1758 = vpop.f32.mrb[0].mxu0
        %v1759 = vpop.f32.mrb[0].mxu0
        %v1760 = vpop.f32.mrb[0].mxu0
        %1761 = vdwg.mxu0
        %1762 = vrot.lane.b32.xlu0 %v1543, 112
        %v1763 = vpop.permute.xlu0 %1762
        %1764 = vrot.lane.b32.xlu0 %v1542, 112
        %v1765 = vpop.permute.xlu0 %1764
        %v1767 = vsel %vm855, %v1763, 0
        %v1770 = vsel %vm855, %v1765, 0
        %1772 = vmatprep.subr.bf16.mxu0 0
        %1773 = vmatpush1.bf16.xpose.msra.mxu0 %v1770
        %1774 = vmatprep.subr.bf16.mxu0 0
        %1775 = vmatpush1.bf16.xpose.msra.mxu0 0
        %1776 = vmatprep.subr.bf16.mxu0 0
        %1777 = vmatpush1.bf16.xpose.msra.mxu0 0
        %1778 = vmatprep.subr.bf16.mxu0 0
        %1779 = vmatpush1.bf16.xpose.msra.mxu0 0
        %1780 = vmatprep.subr.bf16.mxu0 0
        %1781 = vmatpush1.bf16.xpose.msra.mxu0 0
        %1782 = vmatprep.subr.bf16.mxu0 0
        %1783 = vmatpush1.bf16.xpose.msra.mxu0 0
        %1784 = vmatprep.subr.bf16.mxu0 0
        %1785 = vmatpush1.bf16.xpose.msra.mxu0 0
        %1786 = vmatprep.subr.bf16.mxu0 0
        %1787 = vmatpush1.bf16.xpose.msra.mxu0 0
        %1788 = vmatprep.subr.bf16.mxu0 0
        %1789 = vmatpush1.bf16.xpose.msra.mxu0 0
        %1790 = vmatprep.subr.bf16.mxu0 0
        %1791 = vmatpush1.bf16.xpose.msra.mxu0 0
        %1792 = vmatprep.subr.bf16.mxu0 0
        %1793 = vmatpush1.bf16.xpose.msra.mxu0 0
        %1794 = vmatprep.subr.bf16.mxu0 0
        %1795 = vmatpush1.bf16.xpose.msra.mxu0 0
        %1796 = vmatprep.subr.bf16.mxu0 0
        %1797 = vmatpush1.bf16.xpose.msra.mxu0 0
        %1798 = vmatprep.subr.bf16.mxu0 0
        %1799 = vmatpush1.bf16.xpose.msra.mxu0 0
        %1800 = vmatprep.subr.bf16.mxu0 0
        %1801 = vmatpush1.bf16.xpose.msra.mxu0 0
        %1802 = vmatprep.subr.bf16.mxu0 0
        %1803 = vmatpush1.bf16.xpose.msra.mxu0 0
        %1804 = vmatprep.mubr.bf16.mxu0 0
        %1805 = vmatmul.mubr.bf16.gmra.mrb[0].mxu0 %v1767
        %v1806 = vpop.f32.mrb[0].mxu0
        %v1807 = vadd.f32 0.0, %v1806
        %v1808 = vpop.f32.mrb[0].mxu0
        %v1809 = vpop.f32.mrb[0].mxu0
        %v1810 = vpop.f32.mrb[0].mxu0
        %1811 = vdwg.mxu0
        %v1812 = vsel %vm855, %v1807, -inf
        %1813 = vmax.xlane.f32.xlu0 %v1812
        %v1814 = vpop.xlane.xlu0 %1813
        %v1815 = vsub.f32 %v1807, %v1814
        %v1816 = vmul.f32 %v1815, 1.442695
        %v1817 = vpow.pop %v1816
        %v1818 = vsel %vm855, %v1817, 0.0
        %1819 = vadd.xlane.f32.xlu0 %v1818
        %v1820 = vpop.xlane.xlu0 %1819
        %v1821 = vrcp.pop %v1820
        %v1822 = vmul.f32 %v1817, %v1821
        %v1823 = vpack.c.bf16 %v1822, %v1822
        %1824 = vrot.lane.b32.xlu0 %v1542, 80
        %v1825 = vpop.permute.xlu0 %1824
        %v1827 = vsel %vm855, %v1823, 0
        %v1830 = vsel %vm919, %v1825, 0
        %1832 = vmatprep.subr.bf16.mxu0 0
        %1833 = vmatpush1.bf16.msra.mxu0 %v1830
        %1834 = vmatprep.subr.bf16.mxu0 0
        %1835 = vmatpush1.bf16.msra.mxu0 0
        %1836 = vmatprep.subr.bf16.mxu0 0
        %1837 = vmatpush1.bf16.msra.mxu0 0
        %1838 = vmatprep.subr.bf16.mxu0 0
        %1839 = vmatpush1.bf16.msra.mxu0 0
        %1840 = vmatprep.subr.bf16.mxu0 0
        %1841 = vmatpush1.bf16.msra.mxu0 0
        %1842 = vmatprep.subr.bf16.mxu0 0
        %1843 = vmatpush1.bf16.msra.mxu0 0
        %1844 = vmatprep.subr.bf16.mxu0 0
        %1845 = vmatpush1.bf16.msra.mxu0 0
        %1846 = vmatprep.subr.bf16.mxu0 0
        %1847 = vmatpush1.bf16.msra.mxu0 0
        %1848 = vmatprep.subr.bf16.mxu0 0
        %1849 = vmatpush1.bf16.msra.mxu0 0
        %1850 = vmatprep.subr.bf16.mxu0 0
        %1851 = vmatpush1.bf16.msra.mxu0 0
        %1852 = vmatprep.subr.bf16.mxu0 0
        %1853 = vmatpush1.bf16.msra.mxu0 0
        %1854 = vmatprep.subr.bf16.mxu0 0
        %1855 = vmatpush1.bf16.msra.mxu0 0
        %1856 = vmatprep.subr.bf16.mxu0 0
        %1857 = vmatpush1.bf16.msra.mxu0 0
        %1858 = vmatprep.subr.bf16.mxu0 0
        %1859 = vmatpush1.bf16.msra.mxu0 0
        %1860 = vmatprep.subr.bf16.mxu0 0
        %1861 = vmatpush1.bf16.msra.mxu0 0
        %1862 = vmatprep.subr.bf16.mxu0 0
        %1863 = vmatpush1.bf16.msra.mxu0 0
        %1864 = vmatprep.mubr.bf16.mxu0 0
        %1865 = vmatmul.mubr.bf16.gmra.mrb[0].mxu0 %v1827
        %v1866 = vpop.f32.mrb[0].mxu0
        %v1867 = vadd.f32 0.0, %v1866
        %v1868 = vpop.f32.mrb[0].mxu0
        %v1869 = vpop.f32.mrb[0].mxu0
        %v1870 = vpop.f32.mrb[0].mxu0
        %1871 = vdwg.mxu0
        %1872 = vrot.lane.b32.xlu0 %v1543, 104
        %v1873 = vpop.permute.xlu0 %1872
        %1874 = vrot.lane.b32.xlu0 %v1542, 104
        %v1875 = vpop.permute.xlu0 %1874
        %v1877 = vsel %vm855, %v1873, 0
        %v1880 = vsel %vm855, %v1875, 0
        %1882 = vmatprep.subr.bf16.mxu0 0
        %1883 = vmatpush1.bf16.xpose.msra.mxu0 %v1880
        %1884 = vmatprep.subr.bf16.mxu0 0
        %1885 = vmatpush1.bf16.xpose.msra.mxu0 0
        %1886 = vmatprep.subr.bf16.mxu0 0
        %1887 = vmatpush1.bf16.xpose.msra.mxu0 0
        %1888 = vmatprep.subr.bf16.mxu0 0
        %1889 = vmatpush1.bf16.xpose.msra.mxu0 0
        %1890 = vmatprep.subr.bf16.mxu0 0
        %1891 = vmatpush1.bf16.xpose.msra.mxu0 0
        %1892 = vmatprep.subr.bf16.mxu0 0
        %1893 = vmatpush1.bf16.xpose.msra.mxu0 0
        %1894 = vmatprep.subr.bf16.mxu0 0
        %1895 = vmatpush1.bf16.xpose.msra.mxu0 0
        %1896 = vmatprep.subr.bf16.mxu0 0
        %1897 = vmatpush1.bf16.xpose.msra.mxu0 0
        %1898 = vmatprep.subr.bf16.mxu0 0
        %1899 = vmatpush1.bf16.xpose.msra.mxu0 0
        %1900 = vmatprep.subr.bf16.mxu0 0
        %1901 = vmatpush1.bf16.xpose.msra.mxu0 0
        %1902 = vmatprep.subr.bf16.mxu0 0
        %1903 = vmatpush1.bf16.xpose.msra.mxu0 0
        %1904 = vmatprep.subr.bf16.mxu0 0
        %1905 = vmatpush1.bf16.xpose.msra.mxu0 0
        %1906 = vmatprep.subr.bf16.mxu0 0
        %1907 = vmatpush1.bf16.xpose.msra.mxu0 0
        %1908 = vmatprep.subr.bf16.mxu0 0
        %1909 = vmatpush1.bf16.xpose.msra.mxu0 0
        %1910 = vmatprep.subr.bf16.mxu0 0
        %1911 = vmatpush1.bf16.xpose.msra.mxu0 0
        %1912 = vmatprep.subr.bf16.mxu0 0
        %1913 = vmatpush1.bf16.xpose.msra.mxu0 0
        %1914 = vmatprep.mubr.bf16.mxu0 0
        %1915 = vmatmul.mubr.bf16.gmra.mrb[0].mxu0 %v1877
        %v1916 = vpop.f32.mrb[0].mxu0
        %v1917 = vadd.f32 0.0, %v1916
        %v1918 = vpop.f32.mrb[0].mxu0
        %v1919 = vpop.f32.mrb[0].mxu0
        %v1920 = vpop.f32.mrb[0].mxu0
        %1921 = vdwg.mxu0
        %v1922 = vsel %vm855, %v1917, -inf
        %1923 = vmax.xlane.f32.xlu0 %v1922
        %v1924 = vpop.xlane.xlu0 %1923
        %v1925 = vsub.f32 %v1917, %v1924
        %v1926 = vmul.f32 %v1925, 1.442695
        %v1927 = vpow.pop %v1926
        %v1928 = vsel %vm855, %v1927, 0.0
        %1929 = vadd.xlane.f32.xlu0 %v1928
        %v1930 = vpop.xlane.xlu0 %1929
        %v1931 = vrcp.pop %v1930
        %v1932 = vmul.f32 %v1927, %v1931
        %v1933 = vpack.c.bf16 %v1932, %v1932
        %1934 = vrot.lane.b32.xlu0 %v1542, 72
        %v1935 = vpop.permute.xlu0 %1934
        %v1937 = vsel %vm855, %v1933, 0
        %v1940 = vsel %vm919, %v1935, 0
        %1942 = vmatprep.subr.bf16.mxu0 0
        %1943 = vmatpush1.bf16.msra.mxu0 %v1940
        %1944 = vmatprep.subr.bf16.mxu0 0
        %1945 = vmatpush1.bf16.msra.mxu0 0
        %1946 = vmatprep.subr.bf16.mxu0 0
        %1947 = vmatpush1.bf16.msra.mxu0 0
        %1948 = vmatprep.subr.bf16.mxu0 0
        %1949 = vmatpush1.bf16.msra.mxu0 0
        %1950 = vmatprep.subr.bf16.mxu0 0
        %1951 = vmatpush1.bf16.msra.mxu0 0
        %1952 = vmatprep.subr.bf16.mxu0 0
        %1953 = vmatpush1.bf16.msra.mxu0 0
        %1954 = vmatprep.subr.bf16.mxu0 0
        %1955 = vmatpush1.bf16.msra.mxu0 0
        %1956 = vmatprep.subr.bf16.mxu0 0
        %1957 = vmatpush1.bf16.msra.mxu0 0
        %1958 = vmatprep.subr.bf16.mxu0 0
        %1959 = vmatpush1.bf16.msra.mxu0 0
        %1960 = vmatprep.subr.bf16.mxu0 0
        %1961 = vmatpush1.bf16.msra.mxu0 0
        %1962 = vmatprep.subr.bf16.mxu0 0
        %1963 = vmatpush1.bf16.msra.mxu0 0
        %1964 = vmatprep.subr.bf16.mxu0 0
        %1965 = vmatpush1.bf16.msra.mxu0 0
        %1966 = vmatprep.subr.bf16.mxu0 0
        %1967 = vmatpush1.bf16.msra.mxu0 0
        %1968 = vmatprep.subr.bf16.mxu0 0
        %1969 = vmatpush1.bf16.msra.mxu0 0
        %1970 = vmatprep.subr.bf16.mxu0 0
        %1971 = vmatpush1.bf16.msra.mxu0 0
        %1972 = vmatprep.subr.bf16.mxu0 0
        %1973 = vmatpush1.bf16.msra.mxu0 0
        %1974 = vmatprep.mubr.bf16.mxu0 0
        %1975 = vmatmul.mubr.bf16.gmra.mrb[0].mxu0 %v1937
        %v1976 = vpop.f32.mrb[0].mxu0
        %v1977 = vadd.f32 0.0, %v1976
        %v1978 = vpop.f32.mrb[0].mxu0
        %v1979 = vpop.f32.mrb[0].mxu0
        %v1980 = vpop.f32.mrb[0].mxu0
        %1981 = vdwg.mxu0
        %1983 = vrot.lane.b32.xlu0 %v1757, 8
        %v1984 = vpop.permute.xlu0 %1983
        %1987 = vrot.lane.b32.xlu0 %v1867, 16
        %v1988 = vpop.permute.xlu0 %1987
        %1991 = vrot.lane.b32.xlu0 %v1977, 24
        %v1992 = vpop.permute.xlu0 %1991
        %v1994 = vsel %vm855, %v1646, %v1984
        %v1995 = vsel %vm1306, %v1994, %v1988
        %v1996 = vsel %vm1308, %v1995, %v1992
        %v1997 = vpack.c.bf16 %v1996, %v1996
        %v1998 = vld [vmem:[%s10] sm:$0xf]
        %v1999 = vld [vmem:[%s10 + $0x4] sm:$0xf]
        %v2000 = vld [vmem:[%s10 + $0x8] sm:$0xf]
        %v2001 = vld [vmem:[%s10 + $0xc] sm:$0xf]
        %v2002 = vld [vmem:[%s11] sm:$0x1]
        %v2004 = vlaneseq
        %v2005 = vshrl.u32 %v2004, 7
        %v2006 = vsub.s32 0, %v2005
        %v2007 = vrot.slane %v2002, %v2006
        %v2013 = vunpack.c.l.b16 %v1998
        %v2014 = vunpack.c.l.b16 %v1999
        %v2015 = vunpack.c.l.b16 %v2000
        %v2016 = vunpack.c.l.b16 %v2001
        %v2017 = vpack.c.b16 %v2014, %v2013
        %v2018 = vpack.c.b16 %v2016, %v2015
        %v2022 = vsel %vm807, %v1997, 0
        %2024 = vmatprep.subr.bf16.mxu0 0
        %2025 = vmatpush1.bf16.msra.mxu0 %v2017
        %2026 = vmatprep.subr.bf16.mxu0 0
        %2027 = vmatpush1.bf16.msra.mxu0 %v2018
        %2028 = vmatprep.subr.bf16.mxu0 0
        %2029 = vmatpush1.bf16.msra.mxu0 0
        %2030 = vmatprep.subr.bf16.mxu0 0
        %2031 = vmatpush1.bf16.msra.mxu0 0
        %2032 = vmatprep.subr.bf16.mxu0 0
        %2033 = vmatpush1.bf16.msra.mxu0 0
        %2034 = vmatprep.subr.bf16.mxu0 0
        %2035 = vmatpush1.bf16.msra.mxu0 0
        %2036 = vmatprep.subr.bf16.mxu0 0
        %2037 = vmatpush1.bf16.msra.mxu0 0
        %2038 = vmatprep.subr.bf16.mxu0 0
        %2039 = vmatpush1.bf16.msra.mxu0 0
        %2040 = vmatprep.subr.bf16.mxu0 0
        %2041 = vmatpush1.bf16.msra.mxu0 0
        %2042 = vmatprep.subr.bf16.mxu0 0
        %2043 = vmatpush1.bf16.msra.mxu0 0
        %2044 = vmatprep.subr.bf16.mxu0 0
        %2045 = vmatpush1.bf16.msra.mxu0 0
        %2046 = vmatprep.subr.bf16.mxu0 0
        %2047 = vmatpush1.bf16.msra.mxu0 0
        %2048 = vmatprep.subr.bf16.mxu0 0
        %2049 = vmatpush1.bf16.msra.mxu0 0
        %2050 = vmatprep.subr.bf16.mxu0 0
        %2051 = vmatpush1.bf16.msra.mxu0 0
        %2052 = vmatprep.subr.bf16.mxu0 0
        %2053 = vmatpush1.bf16.msra.mxu0 0
        %2054 = vmatprep.subr.bf16.mxu0 0
        %2055 = vmatpush1.bf16.msra.mxu0 0
        %2056 = vmatprep.mubr.bf16.mxu0 0
        %2057 = vmatmul.mubr.bf16.gmra.mrb[0].mxu0 %v2022
        %v2058 = vpop.f32.mrb[0].mxu0
        %v2059 = vadd.f32 %v2007, %v2058
        %v2060 = vpop.f32.mrb[0].mxu0
        %v2061 = vpop.f32.mrb[0].mxu0
        %v2062 = vpop.f32.mrb[0].mxu0
        %2063 = vdwg.mxu0
        %v2064 = vadd.f32 %v1407, %v2059
        %v2065 = vsel %vm807, %v2064, 0.0
        %2066 = vadd.xlane.f32.xlu0 %v2065
        %v2067 = vpop.xlane.xlu0 %2066
        %v2068 = vmul.f32 %v2067, %v1381
        %v2069 = vsub.f32 %v2064, %v2068
        %v2070 = vmul.f32 %v2069, %v2069
        %v2071 = vsel %vm807, %v2070, 0.0
        %2072 = vadd.xlane.f32.xlu0 %v2071
        %v2073 = vpop.xlane.xlu0 %2072
        %v2074 = vmul.f32 %v2073, %v1381
        %v2075 = vadd.f32 %v2074, 1e-05
        %v2076 = vrsqrt.pop %v2075
        %v2077 = vmul.f32 %v2069, %v2076
        %v2078 = vld [vmem:[%s18] sm:$0x1]
        %v2080 = vlaneseq
        %v2081 = vshrl.u32 %v2080, 7
        %v2082 = vsub.s32 0, %v2081
        %v2083 = vrot.slane %v2078, %v2082
        %v2085 = vmul.f32 %v2077, %v2083
        %v2086 = vld [vmem:[%s19] sm:$0x1]
        %v2088 = vlaneseq
        %v2089 = vshrl.u32 %v2088, 7
        %v2090 = vsub.s32 0, %v2089
        %v2091 = vrot.slane %v2086, %v2090
        %v2093 = vadd.f32 %v2085, %v2091
        %v2094 = vpack.c.bf16 %v2093, %v2093
        %v2095 = vld [vmem:[#allocation11] sm:$0xf]
        %v2096 = vld [vmem:[#allocation11 + $0x4] sm:$0xf]
        %v2097 = vld [vmem:[#allocation11 + $0x8] sm:$0xf]
        %v2098 = vld [vmem:[#allocation11 + $0xc] sm:$0xf]
        %v2099 = vld [vmem:[%s13] sm:$0x1]
        %v2101 = vlaneseq
        %v2102 = vshrl.u32 %v2101, 7
        %v2103 = vsub.s32 0, %v2102
        %v2104 = vrot.slane %v2099, %v2103
        %v2110 = vunpack.c.l.b16 %v2095
        %v2111 = vunpack.c.l.b16 %v2096
        %v2112 = vunpack.c.l.b16 %v2097
        %v2113 = vunpack.c.l.b16 %v2098
        %v2114 = vpack.c.b16 %v2111, %v2110
        %v2115 = vpack.c.b16 %v2113, %v2112
        %v2119 = vsel %vm807, %v2094, 0
        %2121 = vmatprep.subr.bf16.mxu0 0
        %2122 = vmatpush1.bf16.msra.mxu0 %v2114
        %2123 = vmatprep.subr.bf16.mxu0 0
        %2124 = vmatpush1.bf16.msra.mxu0 %v2115
        %2125 = vmatprep.subr.bf16.mxu0 0
        %2126 = vmatpush1.bf16.msra.mxu0 0
        %2127 = vmatprep.subr.bf16.mxu0 0
        %2128 = vmatpush1.bf16.msra.mxu0 0
        %2129 = vmatprep.subr.bf16.mxu0 0
        %2130 = vmatpush1.bf16.msra.mxu0 0
        %2131 = vmatprep.subr.bf16.mxu0 0
        %2132 = vmatpush1.bf16.msra.mxu0 0
        %2133 = vmatprep.subr.bf16.mxu0 0
        %2134 = vmatpush1.bf16.msra.mxu0 0
        %2135 = vmatprep.subr.bf16.mxu0 0
        %2136 = vmatpush1.bf16.msra.mxu0 0
        %2137 = vmatprep.subr.bf16.mxu0 0
        %2138 = vmatpush1.bf16.msra.mxu0 0
        %2139 = vmatprep.subr.bf16.mxu0 0
        %2140 = vmatpush1.bf16.msra.mxu0 0
        %2141 = vmatprep.subr.bf16.mxu0 0
        %2142 = vmatpush1.bf16.msra.mxu0 0
        %2143 = vmatprep.subr.bf16.mxu0 0
        %2144 = vmatpush1.bf16.msra.mxu0 0
        %2145 = vmatprep.subr.bf16.mxu0 0
        %2146 = vmatpush1.bf16.msra.mxu0 0
        %2147 = vmatprep.subr.bf16.mxu0 0
        %2148 = vmatpush1.bf16.msra.mxu0 0
        %2149 = vmatprep.subr.bf16.mxu0 0
        %2150 = vmatpush1.bf16.msra.mxu0 0
        %2151 = vmatprep.subr.bf16.mxu0 0
        %2152 = vmatpush1.bf16.msra.mxu0 0
        %2153 = vmatprep.mubr.bf16.mxu0 0
        %2154 = vmatmul.mubr.bf16.gmra.mrb[0].mxu0 %v2119
        %v2155 = vpop.f32.mrb[0].mxu0
        %v2156 = vadd.f32 %v2104, %v2155
        %v2157 = vpop.f32.mrb[0].mxu0
        %v2158 = vpop.f32.mrb[0].mxu0
        %v2159 = vpop.f32.mrb[0].mxu0
        %2160 = vdwg.mxu0
        %v2161 = vmax.f32 %v2156, 0.0
        %v2162 = vpack.c.bf16 %v2161, %v2161
        %v2163 = vld [vmem:[%s14] sm:$0xf]
        %v2164 = vld [vmem:[%s14 + $0x4] sm:$0xf]
        %v2165 = vld [vmem:[%s14 + $0x8] sm:$0xf]
        %v2166 = vld [vmem:[%s14 + $0xc] sm:$0xf]
        %v2167 = vld [vmem:[%s14 + $0x10] sm:$0xf]
        %v2168 = vld [vmem:[%s14 + $0x14] sm:$0xf]
        %v2169 = vld [vmem:[%s14 + $0x18] sm:$0xf]
        %v2170 = vld [vmem:[%s14 + $0x1c] sm:$0xf]
        %v2171 = vld [vmem:[%s15] sm:$0x1]
        %v2173 = vlaneseq
        %v2174 = vshrl.u32 %v2173, 7
        %v2175 = vsub.s32 0, %v2174
        %v2176 = vrot.slane %v2171, %v2175
        %v2186 = vunpack.c.l.b16 %v2163
        %v2187 = vunpack.c.l.b16 %v2164
        %v2188 = vunpack.c.l.b16 %v2165
        %v2189 = vunpack.c.l.b16 %v2166
        %v2190 = vunpack.c.l.b16 %v2167
        %v2191 = vunpack.c.l.b16 %v2168
        %v2192 = vunpack.c.l.b16 %v2169
        %v2193 = vunpack.c.l.b16 %v2170
        %v2194 = vpack.c.b16 %v2187, %v2186
        %v2195 = vpack.c.b16 %v2189, %v2188
        %v2196 = vpack.c.b16 %v2191, %v2190
        %v2197 = vpack.c.b16 %v2193, %v2192
        %vm2202 = vcmask 523264
        %v2204 = vsel %vm2202, %v2162, 0
        %2206 = vmatprep.subr.bf16.mxu0 0
        %2207 = vmatpush1.bf16.msra.mxu0 %v2194
        %2208 = vmatprep.subr.bf16.mxu0 0
        %2209 = vmatpush1.bf16.msra.mxu0 %v2195
        %2210 = vmatprep.subr.bf16.mxu0 0
        %2211 = vmatpush1.bf16.msra.mxu0 %v2196
        %2212 = vmatprep.subr.bf16.mxu0 0
        %2213 = vmatpush1.bf16.msra.mxu0 %v2197
        %2214 = vmatprep.subr.bf16.mxu0 0
        %2215 = vmatpush1.bf16.msra.mxu0 0
        %2216 = vmatprep.subr.bf16.mxu0 0
        %2217 = vmatpush1.bf16.msra.mxu0 0
        %2218 = vmatprep.subr.bf16.mxu0 0
        %2219 = vmatpush1.bf16.msra.mxu0 0
        %2220 = vmatprep.subr.bf16.mxu0 0
        %2221 = vmatpush1.bf16.msra.mxu0 0
        %2222 = vmatprep.subr.bf16.mxu0 0
        %2223 = vmatpush1.bf16.msra.mxu0 0
        %2224 = vmatprep.subr.bf16.mxu0 0
        %2225 = vmatpush1.bf16.msra.mxu0 0
        %2226 = vmatprep.subr.bf16.mxu0 0
        %2227 = vmatpush1.bf16.msra.mxu0 0
        %2228 = vmatprep.subr.bf16.mxu0 0
        %2229 = vmatpush1.bf16.msra.mxu0 0
        %2230 = vmatprep.subr.bf16.mxu0 0
        %2231 = vmatpush1.bf16.msra.mxu0 0
        %2232 = vmatprep.subr.bf16.mxu0 0
        %2233 = vmatpush1.bf16.msra.mxu0 0
        %2234 = vmatprep.subr.bf16.mxu0 0
        %2235 = vmatpush1.bf16.msra.mxu0 0
        %2236 = vmatprep.subr.bf16.mxu0 0
        %2237 = vmatpush1.bf16.msra.mxu0 0
        %2238 = vmatprep.mubr.bf16.mxu0 0
        %2239 = vmatmul.mubr.bf16.gmra.mrb[0].mxu0 %v2204
        %v2240 = vpop.f32.mrb[0].mxu0
        %v2241 = vadd.f32 %v2176, %v2240
        %v2242 = vpop.f32.mrb[0].mxu0
        %v2243 = vpop.f32.mrb[0].mxu0
        %v2244 = vpop.f32.mrb[0].mxu0
        %2245 = vdwg.mxu0
        %v2246 = vadd.f32 %v2093, %v2241
        %v2247 = vsel %vm807, %v2246, 0.0
        %2248 = vadd.xlane.f32.xlu0 %v2247
        %v2249 = vpop.xlane.xlu0 %2248
        %v2250 = vmul.f32 %v2249, %v1381
        %v2251 = vsub.f32 %v2246, %v2250
        %v2252 = vmul.f32 %v2251, %v2251
        %v2253 = vsel %vm807, %v2252, 0.0
        %2254 = vadd.xlane.f32.xlu0 %v2253
        %v2255 = vpop.xlane.xlu0 %2254
        %v2256 = vmul.f32 %v2255, %v1381
        %v2257 = vadd.f32 %v2256, 1e-05
        %v2258 = vrsqrt.pop %v2257
        %v2259 = vmul.f32 %v2251, %v2258
        %v2260 = vld [vmem:[%s20] sm:$0x1]
        %v2262 = vlaneseq
        %v2263 = vshrl.u32 %v2262, 7
        %v2264 = vsub.s32 0, %v2263
        %v2265 = vrot.slane %v2260, %v2264
        %v2267 = vmul.f32 %v2259, %v2265
        %v2268 = vld [vmem:[%s21] sm:$0x1]
        %v2270 = vlaneseq
        %v2271 = vshrl.u32 %v2270, 7
        %v2272 = vsub.s32 0, %v2271
        %v2273 = vrot.slane %v2268, %v2272
        %v2275 = vadd.f32 %v2267, %v2273
        %2276 = vst.msk [vmem:[%s771] sm:$0xff] %vm807, %v2275
        %s2277 = sand.u32 %s520, 1
        %s2278 = scalar_lea.sflag [#allocation4], %s2277
        %s2279 = sand.u32 %s520, 1
        %s2280 = smul.addr %s2279, 8
        %s2281 = scalar_lea.vmem [#allocation13], %s2280
        // Predicated region
        $region133: #{tpu_custom_call.1} parent=107 // pred_check
          %p2282 = pneg %p530
        $region134: #{tpu_custom_call.1} parent=107 // pred_check_branch
          %2284 = sbr.rel (%p2282) target = $region136
        $region135: #{tpu_custom_call.1} parent=107 // pred_region
          %s2286 = ssub.s32 128, 128
          %2287 = vsyncadd %s2278, %s2286
          %s2288 = smul.addr %s40, 128
          %s2289 = scalar_lea.hbm %s22, %s2288
          %s2291 = sshll.u32 %s2281, 4
          %s2292 = int_to_ptr.vmem [resolvable:$true] %s2291
          %2294 = dma.vmem_to_hbm [thread:$0]  %s2292, 128, %s2289, %s2278
        $region136: #{tpu_custom_call.1} parent=107 // pred_fallthru
          _
      $region108: #{tpu_custom_call.1} parent=5 // pred_fallthru
        _
      %p2295 = scmp.le.s32.totalorder 2, %s35
      // Predicated region
      $region137: #{tpu_custom_call.1} parent=5 // pred_check
        %p2296 = pneg %p2295
      $region138: #{tpu_custom_call.1} parent=5 // pred_check_branch
        %2298 = sbr.rel (%p2296) target = $region140
      $region139: #{tpu_custom_call.1} parent=5 // pred_region
        %s2299 = ssub.s32 %s35, 2
        // Predicated region
        $region141: #{tpu_custom_call.1} parent=139 // pred_check
          %p2300 = pneg %p536
        $region142: #{tpu_custom_call.1} parent=139 // pred_check_branch
          %2302 = sbr.rel (%p2300) target = $region144
        $region143: #{tpu_custom_call.1} parent=139 // pred_region
          %s2303 = sand.u32 %s521, 1
          %s2304 = scalar_lea.sflag [#allocation4], %s2303
          %s2305 = sand.u32 %s521, 1
          %s2306 = smul.addr %s2305, 8
          %s2307 = scalar_lea.vmem [#allocation13], %s2306
          %2308 = dma.done %s2304, 128
        $region144: #{tpu_custom_call.1} parent=139 // pred_fallthru
          _
      $region140: #{tpu_custom_call.1} parent=5 // pred_fallthru
        _
    $region6: #{tpu_custom_call.1} parent=1 // loop_footer
      %s39 = sadd.s32 1, %s35
    $region7: #{tpu_custom_call.1} parent=1 // loop_footer_branch
      %34 = sbr.rel target = $region3
    $region8: #{tpu_custom_call.1} parent=1 // loop_exit
      _
    %2309 = vsyncpa [#allocation3], 1
    %s2310 = scalar_lea.sflag [#allocation3], 1
    %2311 = vsyncpa %s2310, 1
    %2312 = vsyncpa [#allocation6], 1
    %2313 = vsyncpa [#allocation9], 1
    %2314 = vsyncpa [#allocation12], 1
    %2315 = vsyncpa [#allocation4], 1
    %s2316 = scalar_lea.sflag [#allocation4], 1
    %2317 = vsyncpa %s2316, 1

</llo_original>
